<compile_context>
chip_gen: v7x
topology: tpu7x:2x2x1
jax: 0.10.0
libtpu: 0.0.40
codegen_flags: <defaults>
</compile_context>

<pallas_src>
import functools
import math

import jax
import jax.numpy as jnp
from jax.experimental import pallas as pl
from jax.experimental.pallas import tpu as pltpu

_TB = 8       # envs per grid step (multiple of 8 -> sublane aligned)
_LANE = 128   # channel padding target (lane width)


def _pad_axis(a, axis, size):
    pad = [(0, 0)] * a.ndim
    pad[axis] = (0, size - a.shape[axis])
    return jnp.pad(a, pad)


# ---------------------------------------------------------------------------
# Fused kernel: conv1(8x8,s4) -> conv2(4x4,s2) -> conv3(2x2,s1) -> Linear+Tanh
# Processes a tile of `tb` environments per grid step.
# ---------------------------------------------------------------------------
def _nature_cnn_kernel(p1_ref, w1_ref, b1_ref, w2_ref, b2_ref, w3_ref, b3_ref,
                       wf_ref, bf_ref, o_ref, h1_ref, *, tb):
    f32 = jnp.float32

    # ---- conv1: single matmul over all 49 output positions of the tile -----
    # p1_ref: (49*tb, frames*64), rows ordered (spatial, env); w1: (K1, 128)
    h1 = jnp.dot(p1_ref[...], w1_ref[...], preferred_element_type=f32)
    h1_ref[...] = jnp.maximum(h1 + b1_ref[...], 0.0)          # (49*tb, 128)

    # ---- conv2: 4x4 kernel, stride 2, 7x7 -> 2x2; per-offset matmuls --------
    # For kernel offset (ki,kj), gather the 4 output positions' input rows
    # (aligned (tb,128) slabs of the VMEM-resident conv1 activation) and
    # accumulate (4*tb,128) @ (128,128).  Rows of acc2: (oy, ox, env).
    acc2 = jnp.zeros((4 * tb, _LANE), f32) + b2_ref[...]
    for ki in range(4):
        for kj in range(4):
            rows = jnp.concatenate(
                [h1_ref[pl.ds(((2 * oy + ki) * 7 + (2 * ox + kj)) * tb, tb), :]
                 for oy in range(2) for ox in range(2)],
                axis=0)                                        # (4*tb, 128)
            acc2 = acc2 + jnp.dot(rows, w2_ref[4 * ki + kj],
                                  preferred_element_type=f32)
    h2 = jnp.maximum(acc2, 0.0)                                # (4*tb, 128)

    # ---- conv3: 2x2 kernel, stride 1, 2x2 -> 1x1 ----------------------------
    acc3 = jnp.zeros((tb, _LANE), f32) + b3_ref[...]
    for ki in range(2):
        for kj in range(2):
            pos = 2 * ki + kj
            acc3 = acc3 + jnp.dot(h2[pos * tb:(pos + 1) * tb, :],
                                  w3_ref[pos], preferred_element_type=f32)
    feat = jnp.maximum(acc3, 0.0)                              # (tb, 128)

    # ---- final Linear + Tanh (fused epilogue, no extra pallas_call) ---------
    out = jnp.tanh(jnp.dot(feat, wf_ref[...], preferred_element_type=f32)
                   + bf_ref[...])
    o_ref[...] = out.astype(o_ref.dtype)


# ---------------------------------------------------------------------------
# Forward wrapper
# ---------------------------------------------------------------------------
def nature_cnn_forward(params, x, *, tb=_TB):
    """params: PyTorch-layout dict (see make_params); x: (num_envs, frames, 32, 32)."""
    n, frames = x.shape[0], x.shape[1]
    x = x.reshape(n, frames, 32, 32).astype(jnp.float32)
    k1 = frames * 8 * 8                                   # conv1 im2col depth
    f = params["bf"].shape[0]
    fp = _LANE * pl.cdiv(f, _LANE)                        # padded feature width

    # -- pack weights into matmul layout, zero-pad channels to 128 lanes -----
    w1 = _pad_axis(params["w1"].reshape(32, k1).T.astype(jnp.float32), 1, _LANE)
    b1 = _pad_axis(params["b1"], 0, _LANE).reshape(1, _LANE)
    w2 = params["w2"].transpose(2, 3, 1, 0).reshape(16, 32, 64)   # (off, in, out)
    w2 = _pad_axis(_pad_axis(w2.astype(jnp.float32), 1, _LANE), 2, _LANE)
    b2 = _pad_axis(params["b2"], 0, _LANE).reshape(1, _LANE)
    w3 = params["w3"].transpose(2, 3, 1, 0).reshape(4, 64, 32)
    w3 = _pad_axis(_pad_axis(w3.astype(jnp.float32), 1, _LANE), 2, _LANE)
    b3 = _pad_axis(params["b3"], 0, _LANE).reshape(1, _LANE)
    wf = _pad_axis(_pad_axis(params["wf"].astype(jnp.float32), 0, _LANE), 1, fp)
    bf = _pad_axis(params["bf"], 0, fp).reshape(1, fp)

    # -- conv1 patches (single XLA op), feature order (C, kh, kw) ------------
    p = jax.lax.conv_general_dilated_patches(
        x, filter_shape=(8, 8), window_strides=(4, 4), padding="VALID",
        precision=jax.lax.Precision.HIGHEST)               # (n, k1, 7, 7)
    p = p.transpose(2, 3, 0, 1).reshape(49, n, k1)         # (spatial, env, k1)
    npad = tb * pl.cdiv(n, tb)
    p = _pad_axis(p, 1, npad)                              # pad batch to tile
    tiles = npad // tb
    # rows ordered (tile, spatial, env_in_tile) -> each block is (49*tb, k1)
    p = p.reshape(49, tiles, tb, k1).transpose(1, 0, 2, 3).reshape(tiles * 49 * tb, k1)

    out = pl.pallas_call(
        functools.partial(_nature_cnn_kernel, tb=tb),
        out_shape=jax.ShapeDtypeStruct((npad, fp), jnp.float32),
        grid=(tiles,),
        in_specs=[
            pl.BlockSpec((49 * tb, k1), lambda i: (i, 0)),          # patches
            pl.BlockSpec((k1, _LANE), lambda i: (0, 0)),            # w1 (resident)
            pl.BlockSpec((1, _LANE), lambda i: (0, 0)),             # b1
            pl.BlockSpec((16, _LANE, _LANE), lambda i: (0, 0, 0)),  # w2
            pl.BlockSpec((1, _LANE), lambda i: (0, 0)),             # b2
            pl.BlockSpec((4, _LANE, _LANE), lambda i: (0, 0, 0)),   # w3
            pl.BlockSpec((1, _LANE), lambda i: (0, 0)),             # b3
            pl.BlockSpec((_LANE, fp), lambda i: (0, 0)),            # wf
            pl.BlockSpec((1, fp), lambda i: (0, 0)),                # bf
        ],
        out_specs=pl.BlockSpec((tb, fp), lambda i: (i, 0)),
        scratch_shapes=[pltpu.VMEM((49 * tb, _LANE), jnp.float32)],  # conv1 act
        compiler_params=pltpu.CompilerParams(
            dimension_semantics=("parallel",)),
    )(p, w1, b1, w2, b2, w3, b3, wf, bf)

    return out[:n, :f]


# ---------------------------------------------------------------------------
# Deterministic parameter init (orthogonal, like InitConv2d/InitLinear)
# ---------------------------------------------------------------------------
def _orthogonal_init(key, shape, gain):
    out = shape[0]
    fan_in = int(math.prod(shape[1:]))
    w2d = jax.nn.initializers.orthogonal(scale=gain)(key, (out, fan_in), jnp.float32)
    return w2d.reshape(shape)


def make_params(frames, features_size, key):
    k1, k2, k3, k4 = jax.random.split(key, 4)
    relu_gain = math.sqrt(2.0)
    tanh_gain = 5.0 / 3.0
    return {
        "w1": _orthogonal_init(k1, (32, frames, 8, 8), relu_gain),
        "b1": jnp.zeros((32,), jnp.float32),
        "w2": _orthogonal_init(k2, (64, 32, 4, 4), relu_gain),
        "b2": jnp.zeros((64,), jnp.float32),
        "w3": _orthogonal_init(k3, (32, 64, 2, 2), relu_gain),
        "b3": jnp.zeros((32,), jnp.float32),
        # Linear(32 -> features_size); stored transposed as (32, F) for matmul.
        "wf": _orthogonal_init(k4, (features_size, 32), tanh_gain).T,
        "bf": jnp.zeros((features_size,), jnp.float32),
    }


# ---------------------------------------------------------------------------
# Pure-JAX reference (lax.conv) for a correctness check
# ---------------------------------------------------------------------------
def nature_cnn_reference(params, x):
    n, frames = x.shape[0], x.shape[1]
    h = x.reshape(n, frames, 32, 32).astype(jnp.float32)
    for w, b, s in ((params["w1"], params["b1"], 4),
                    (params["w2"], params["b2"], 2),
                    (params["w3"], params["b3"], 1)):
        h = jax.lax.conv_general_dilated(
            h, w, window_strides=(s, s), padding="VALID",
            dimension_numbers=("NCHW", "OIHW", "NCHW"),
            precision=jax.lax.Precision.HIGHEST)
        h = jax.nn.relu(h + b.reshape(1, -1, 1, 1))
    feats = h.reshape(n, 32)
    return jnp.tanh(jnp.dot(feats, params["wf"],
                            precision=jax.lax.Precision.HIGHEST) + params["bf"])


if __name__ == "__main__":
    num_envs, frames, features_size = 2, 4, 16
    key = jax.random.PRNGKey(0)
    params = make_params(frames, features_size, key)
    x = jax.random.normal(key, (num_envs, frames, 32, 32), jnp.float32)

    fwd = jax.jit(nature_cnn_forward)
    out = jax.block_until_ready(fwd(params, x))
    assert out.shape == (num_envs, features_size), out.shape

    ref = jax.block_until_ready(nature_cnn_reference(params, x))
    assert jnp.allclose(out, ref, atol=2e-3, rtol=2e-3), \
        float(jnp.max(jnp.abs(out - ref)))

    print("KERNEL_OK")
</pallas_src>

<mosaic_0001>
module attributes {stable_mosaic.version = 11 : i64} {
  func.func @_nature_cnn_kernel(%arg0: i32, %arg1: memref<392x256xf32, #tpu.memory_space<vmem>>, %arg2: memref<256x128xf32, #tpu.memory_space<vmem>>, %arg3: memref<1x128xf32, #tpu.memory_space<vmem>>, %arg4: memref<16x128x128xf32, #tpu.memory_space<vmem>>, %arg5: memref<1x128xf32, #tpu.memory_space<vmem>>, %arg6: memref<4x128x128xf32, #tpu.memory_space<vmem>>, %arg7: memref<1x128xf32, #tpu.memory_space<vmem>>, %arg8: memref<128x128xf32, #tpu.memory_space<vmem>>, %arg9: memref<1x128xf32, #tpu.memory_space<vmem>>, %arg10: memref<8x128xf32, #tpu.memory_space<vmem>>, %arg11: memref<392x128xf32, #tpu.memory_space<vmem>>) attributes {dimension_semantics = [#tpu.dimension_semantics<parallel>], iteration_bounds = array<i64: 1>, scalar_prefetch = 0 : i64, scratch_operands = 1 : i64, tpu.core_type = #tpu.core_type<tc>, window_params = [{transform_indices = @transform_0, window_bounds = array<i64: 392, 256>}, {pipeline_mode = #tpu.pipeline_mode<synchronous>, transform_indices = @transform_1, window_bounds = array<i64: 256, 128>}, {pipeline_mode = #tpu.pipeline_mode<synchronous>, transform_indices = @transform_2, window_bounds = array<i64: 1, 128>}, {pipeline_mode = #tpu.pipeline_mode<synchronous>, transform_indices = @transform_3, window_bounds = array<i64: 16, 128, 128>}, {pipeline_mode = #tpu.pipeline_mode<synchronous>, transform_indices = @transform_4, window_bounds = array<i64: 1, 128>}, {pipeline_mode = #tpu.pipeline_mode<synchronous>, transform_indices = @transform_5, window_bounds = array<i64: 4, 128, 128>}, {pipeline_mode = #tpu.pipeline_mode<synchronous>, transform_indices = @transform_6, window_bounds = array<i64: 1, 128>}, {pipeline_mode = #tpu.pipeline_mode<synchronous>, transform_indices = @transform_7, window_bounds = array<i64: 128, 128>}, {pipeline_mode = #tpu.pipeline_mode<synchronous>, transform_indices = @transform_8, window_bounds = array<i64: 1, 128>}, {transform_indices = @transform_9, window_bounds = array<i64: 8, 128>}]} {
    %c0 = arith.constant 0 : index
    %c0_0 = arith.constant 0 : index
    %0 = vector.load %arg1[%c0, %c0_0] : memref<392x256xf32, #tpu.memory_space<vmem>>, vector<392x256xf32>
    %c0_1 = arith.constant 0 : index
    %c0_2 = arith.constant 0 : index
    %1 = vector.load %arg2[%c0_1, %c0_2] : memref<256x128xf32, #tpu.memory_space<vmem>>, vector<256x128xf32>
    %cst = arith.constant dense<0.000000e+00> : vector<392x128xf32>
    %2 = tpu.matmul %0, %1, %cst {dimension_numbers = #tpu.dot_dimension_numbers<[1], [0], [0], [1], [0, 0, 1, 1], [], []>} : vector<392x256xf32>, vector<256x128xf32>, vector<392x128xf32> -> vector<392x128xf32>
    %c0_3 = arith.constant 0 : index
    %c0_4 = arith.constant 0 : index
    %3 = vector.load %arg3[%c0_3, %c0_4] : memref<1x128xf32, #tpu.memory_space<vmem>>, vector<1x128xf32>
    %4 = vector.broadcast %3 : vector<1x128xf32> to vector<392x128xf32>
    %5 = arith.addf %2, %4 : vector<392x128xf32>
    %cst_5 = arith.constant 0.000000e+00 : f32
    %6 = vector.broadcast %cst_5 : f32 to vector<392x128xf32>
    %7 = arith.maximumf %5, %6 : vector<392x128xf32>
    %c0_6 = arith.constant 0 : index
    %c0_7 = arith.constant 0 : index
    %8 = vector.load %arg11[%c0_6, %c0_7] : memref<392x128xf32, #tpu.memory_space<vmem>>, vector<392x128xf32>
    tpu.vector_store %arg11[%c0_6, %c0_7], %7 {strides = array<i32>} : memref<392x128xf32, #tpu.memory_space<vmem>>, vector<392x128xf32>,
    %cst_8 = arith.constant 0.000000e+00 : f32
    %9 = vector.broadcast %cst_8 : f32 to vector<32x128xf32>
    %c0_9 = arith.constant 0 : index
    %c0_10 = arith.constant 0 : index
    %10 = vector.load %arg5[%c0_9, %c0_10] : memref<1x128xf32, #tpu.memory_space<vmem>>, vector<1x128xf32>
    %11 = vector.broadcast %10 : vector<1x128xf32> to vector<32x128xf32>
    %12 = arith.addf %9, %11 : vector<32x128xf32>
    %c0_11 = arith.constant 0 : index
    %c0_12 = arith.constant 0 : index
    %13 = vector.load %arg11[%c0_11, %c0_12] : memref<392x128xf32, #tpu.memory_space<vmem>>, vector<8x128xf32>
    %c16 = arith.constant 16 : index
    %c0_13 = arith.constant 0 : index
    %14 = vector.load %arg11[%c16, %c0_13] : memref<392x128xf32, #tpu.memory_space<vmem>>, vector<8x128xf32>
    %c112 = arith.constant 112 : index
    %c0_14 = arith.constant 0 : index
    %15 = vector.load %arg11[%c112, %c0_14] : memref<392x128xf32, #tpu.memory_space<vmem>>, vector<8x128xf32>
    %c128 = arith.constant 128 : index
    %c0_15 = arith.constant 0 : index
    %16 = vector.load %arg11[%c128, %c0_15] : memref<392x128xf32, #tpu.memory_space<vmem>>, vector<8x128xf32>
    %17 = tpu.concatenate %13, %14, %15, %16 in 0 : vector<8x128xf32>, vector<8x128xf32>, vector<8x128xf32>, vector<8x128xf32> -> vector<32x128xf32>
    %c0_16 = arith.constant 0 : index
    %c0_17 = arith.constant 0 : index
    %c0_18 = arith.constant 0 : index
    %18 = vector.load %arg4[%c0_16, %c0_17, %c0_18] : memref<16x128x128xf32, #tpu.memory_space<vmem>>, vector<1x128x128xf32>
    %19 = vector.shape_cast %18 : vector<1x128x128xf32> to vector<128x128xf32>
    %cst_19 = arith.constant dense<0.000000e+00> : vector<32x128xf32>
    %20 = tpu.matmul %17, %19, %cst_19 {dimension_numbers = #tpu.dot_dimension_numbers<[1], [0], [0], [1], [0, 0, 1, 1], [], []>} : vector<32x128xf32>, vector<128x128xf32>, vector<32x128xf32> -> vector<32x128xf32>
    %21 = arith.addf %12, %20 : vector<32x128xf32>
    %c8 = arith.constant 8 : index
    %c0_20 = arith.constant 0 : index
    %22 = vector.load %arg11[%c8, %c0_20] : memref<392x128xf32, #tpu.memory_space<vmem>>, vector<8x128xf32>
    %c24 = arith.constant 24 : index
    %c0_21 = arith.constant 0 : index
    %23 = vector.load %arg11[%c24, %c0_21] : memref<392x128xf32, #tpu.memory_space<vmem>>, vector<8x128xf32>
    %c120 = arith.constant 120 : index
    %c0_22 = arith.constant 0 : index
    %24 = vector.load %arg11[%c120, %c0_22] : memref<392x128xf32, #tpu.memory_space<vmem>>, vector<8x128xf32>
    %c136 = arith.constant 136 : index
    %c0_23 = arith.constant 0 : index
    %25 = vector.load %arg11[%c136, %c0_23] : memref<392x128xf32, #tpu.memory_space<vmem>>, vector<8x128xf32>
    %26 = tpu.concatenate %22, %23, %24, %25 in 0 : vector<8x128xf32>, vector<8x128xf32>, vector<8x128xf32>, vector<8x128xf32> -> vector<32x128xf32>
    %c1 = arith.constant 1 : index
    %c0_24 = arith.constant 0 : index
    %c0_25 = arith.constant 0 : index
    %27 = vector.load %arg4[%c1, %c0_24, %c0_25] : memref<16x128x128xf32, #tpu.memory_space<vmem>>, vector<1x128x128xf32>
    %28 = vector.shape_cast %27 : vector<1x128x128xf32> to vector<128x128xf32>
    %cst_26 = arith.constant dense<0.000000e+00> : vector<32x128xf32>
    %29 = tpu.matmul %26, %28, %cst_26 {dimension_numbers = #tpu.dot_dimension_numbers<[1], [0], [0], [1], [0, 0, 1, 1], [], []>} : vector<32x128xf32>, vector<128x128xf32>, vector<32x128xf32> -> vector<32x128xf32>
    %30 = arith.addf %21, %29 : vector<32x128xf32>
    %c16_27 = arith.constant 16 : index
    %c0_28 = arith.constant 0 : index
    %31 = vector.load %arg11[%c16_27, %c0_28] : memref<392x128xf32, #tpu.memory_space<vmem>>, vector<8x128xf32>
    %c32 = arith.constant 32 : index
    %c0_29 = arith.constant 0 : index
    %32 = vector.load %arg11[%c32, %c0_29] : memref<392x128xf32, #tpu.memory_space<vmem>>, vector<8x128xf32>
    %c128_30 = arith.constant 128 : index
    %c0_31 = arith.constant 0 : index
    %33 = vector.load %arg11[%c128_30, %c0_31] : memref<392x128xf32, #tpu.memory_space<vmem>>, vector<8x128xf32>
    %c144 = arith.constant 144 : index
    %c0_32 = arith.constant 0 : index
    %34 = vector.load %arg11[%c144, %c0_32] : memref<392x128xf32, #tpu.memory_space<vmem>>, vector<8x128xf32>
    %35 = tpu.concatenate %31, %32, %33, %34 in 0 : vector<8x128xf32>, vector<8x128xf32>, vector<8x128xf32>, vector<8x128xf32> -> vector<32x128xf32>
    %c2 = arith.constant 2 : index
    %c0_33 = arith.constant 0 : index
    %c0_34 = arith.constant 0 : index
    %36 = vector.load %arg4[%c2, %c0_33, %c0_34] : memref<16x128x128xf32, #tpu.memory_space<vmem>>, vector<1x128x128xf32>
    %37 = vector.shape_cast %36 : vector<1x128x128xf32> to vector<128x128xf32>
    %cst_35 = arith.constant dense<0.000000e+00> : vector<32x128xf32>
    %38 = tpu.matmul %35, %37, %cst_35 {dimension_numbers = #tpu.dot_dimension_numbers<[1], [0], [0], [1], [0, 0, 1, 1], [], []>} : vector<32x128xf32>, vector<128x128xf32>, vector<32x128xf32> -> vector<32x128xf32>
    %39 = arith.addf %30, %38 : vector<32x128xf32>
    %c24_36 = arith.constant 24 : index
    %c0_37 = arith.constant 0 : index
    %40 = vector.load %arg11[%c24_36, %c0_37] : memref<392x128xf32, #tpu.memory_space<vmem>>, vector<8x128xf32>
    %c40 = arith.constant 40 : index
    %c0_38 = arith.constant 0 : index
    %41 = vector.load %arg11[%c40, %c0_38] : memref<392x128xf32, #tpu.memory_space<vmem>>, vector<8x128xf32>
    %c136_39 = arith.constant 136 : index
    %c0_40 = arith.constant 0 : index
    %42 = vector.load %arg11[%c136_39, %c0_40] : memref<392x128xf32, #tpu.memory_space<vmem>>, vector<8x128xf32>
    %c152 = arith.constant 152 : index
    %c0_41 = arith.constant 0 : index
    %43 = vector.load %arg11[%c152, %c0_41] : memref<392x128xf32, #tpu.memory_space<vmem>>, vector<8x128xf32>
    %44 = tpu.concatenate %40, %41, %42, %43 in 0 : vector<8x128xf32>, vector<8x128xf32>, vector<8x128xf32>, vector<8x128xf32> -> vector<32x128xf32>
    %c3 = arith.constant 3 : index
    %c0_42 = arith.constant 0 : index
    %c0_43 = arith.constant 0 : index
    %45 = vector.load %arg4[%c3, %c0_42, %c0_43] : memref<16x128x128xf32, #tpu.memory_space<vmem>>, vector<1x128x128xf32>
    %46 = vector.shape_cast %45 : vector<1x128x128xf32> to vector<128x128xf32>
    %cst_44 = arith.constant dense<0.000000e+00> : vector<32x128xf32>
    %47 = tpu.matmul %44, %46, %cst_44 {dimension_numbers = #tpu.dot_dimension_numbers<[1], [0], [0], [1], [0, 0, 1, 1], [], []>} : vector<32x128xf32>, vector<128x128xf32>, vector<32x128xf32> -> vector<32x128xf32>
    %48 = arith.addf %39, %47 : vector<32x128xf32>
    %c56 = arith.constant 56 : index
    %c0_45 = arith.constant 0 : index
    %49 = vector.load %arg11[%c56, %c0_45] : memref<392x128xf32, #tpu.memory_space<vmem>>, vector<8x128xf32>
    %c72 = arith.constant 72 : index
    %c0_46 = arith.constant 0 : index
    %50 = vector.load %arg11[%c72, %c0_46] : memref<392x128xf32, #tpu.memory_space<vmem>>, vector<8x128xf32>
    %c168 = arith.constant 168 : index
    %c0_47 = arith.constant 0 : index
    %51 = vector.load %arg11[%c168, %c0_47] : memref<392x128xf32, #tpu.memory_space<vmem>>, vector<8x128xf32>
    %c184 = arith.constant 184 : index
    %c0_48 = arith.constant 0 : index
    %52 = vector.load %arg11[%c184, %c0_48] : memref<392x128xf32, #tpu.memory_space<vmem>>, vector<8x128xf32>
    %53 = tpu.concatenate %49, %50, %51, %52 in 0 : vector<8x128xf32>, vector<8x128xf32>, vector<8x128xf32>, vector<8x128xf32> -> vector<32x128xf32>
    %c4 = arith.constant 4 : index
    %c0_49 = arith.constant 0 : index
    %c0_50 = arith.constant 0 : index
    %54 = vector.load %arg4[%c4, %c0_49, %c0_50] : memref<16x128x128xf32, #tpu.memory_space<vmem>>, vector<1x128x128xf32>
    %55 = vector.shape_cast %54 : vector<1x128x128xf32> to vector<128x128xf32>
    %cst_51 = arith.constant dense<0.000000e+00> : vector<32x128xf32>
    %56 = tpu.matmul %53, %55, %cst_51 {dimension_numbers = #tpu.dot_dimension_numbers<[1], [0], [0], [1], [0, 0, 1, 1], [], []>} : vector<32x128xf32>, vector<128x128xf32>, vector<32x128xf32> -> vector<32x128xf32>
    %57 = arith.addf %48, %56 : vector<32x128xf32>
    %c64 = arith.constant 64 : index
    %c0_52 = arith.constant 0 : index
    %58 = vector.load %arg11[%c64, %c0_52] : memref<392x128xf32, #tpu.memory_space<vmem>>, vector<8x128xf32>
    %c80 = arith.constant 80 : index
    %c0_53 = arith.constant 0 : index
    %59 = vector.load %arg11[%c80, %c0_53] : memref<392x128xf32, #tpu.memory_space<vmem>>, vector<8x128xf32>
    %c176 = arith.constant 176 : index
    %c0_54 = arith.constant 0 : index
    %60 = vector.load %arg11[%c176, %c0_54] : memref<392x128xf32, #tpu.memory_space<vmem>>, vector<8x128xf32>
    %c192 = arith.constant 192 : index
    %c0_55 = arith.constant 0 : index
    %61 = vector.load %arg11[%c192, %c0_55] : memref<392x128xf32, #tpu.memory_space<vmem>>, vector<8x128xf32>
    %62 = tpu.concatenate %58, %59, %60, %61 in 0 : vector<8x128xf32>, vector<8x128xf32>, vector<8x128xf32>, vector<8x128xf32> -> vector<32x128xf32>
    %c5 = arith.constant 5 : index
    %c0_56 = arith.constant 0 : index
    %c0_57 = arith.constant 0 : index
    %63 = vector.load %arg4[%c5, %c0_56, %c0_57] : memref<16x128x128xf32, #tpu.memory_space<vmem>>, vector<1x128x128xf32>
    %64 = vector.shape_cast %63 : vector<1x128x128xf32> to vector<128x128xf32>
    %cst_58 = arith.constant dense<0.000000e+00> : vector<32x128xf32>
    %65 = tpu.matmul %62, %64, %cst_58 {dimension_numbers = #tpu.dot_dimension_numbers<[1], [0], [0], [1], [0, 0, 1, 1], [], []>} : vector<32x128xf32>, vector<128x128xf32>, vector<32x128xf32> -> vector<32x128xf32>
    %66 = arith.addf %57, %65 : vector<32x128xf32>
    %c72_59 = arith.constant 72 : index
    %c0_60 = arith.constant 0 : index
    %67 = vector.load %arg11[%c72_59, %c0_60] : memref<392x128xf32, #tpu.memory_space<vmem>>, vector<8x128xf32>
    %c88 = arith.constant 88 : index
    %c0_61 = arith.constant 0 : index
    %68 = vector.load %arg11[%c88, %c0_61] : memref<392x128xf32, #tpu.memory_space<vmem>>, vector<8x128xf32>
    %c184_62 = arith.constant 184 : index
    %c0_63 = arith.constant 0 : index
    %69 = vector.load %arg11[%c184_62, %c0_63] : memref<392x128xf32, #tpu.memory_space<vmem>>, vector<8x128xf32>
    %c200 = arith.constant 200 : index
    %c0_64 = arith.constant 0 : index
    %70 = vector.load %arg11[%c200, %c0_64] : memref<392x128xf32, #tpu.memory_space<vmem>>, vector<8x128xf32>
    %71 = tpu.concatenate %67, %68, %69, %70 in 0 : vector<8x128xf32>, vector<8x128xf32>, vector<8x128xf32>, vector<8x128xf32> -> vector<32x128xf32>
    %c6 = arith.constant 6 : index
    %c0_65 = arith.constant 0 : index
    %c0_66 = arith.constant 0 : index
    %72 = vector.load %arg4[%c6, %c0_65, %c0_66] : memref<16x128x128xf32, #tpu.memory_space<vmem>>, vector<1x128x128xf32>
    %73 = vector.shape_cast %72 : vector<1x128x128xf32> to vector<128x128xf32>
    %cst_67 = arith.constant dense<0.000000e+00> : vector<32x128xf32>
    %74 = tpu.matmul %71, %73, %cst_67 {dimension_numbers = #tpu.dot_dimension_numbers<[1], [0], [0], [1], [0, 0, 1, 1], [], []>} : vector<32x128xf32>, vector<128x128xf32>, vector<32x128xf32> -> vector<32x128xf32>
    %75 = arith.addf %66, %74 : vector<32x128xf32>
    %c80_68 = arith.constant 80 : index
    %c0_69 = arith.constant 0 : index
    %76 = vector.load %arg11[%c80_68, %c0_69] : memref<392x128xf32, #tpu.memory_space<vmem>>, vector<8x128xf32>
    %c96 = arith.constant 96 : index
    %c0_70 = arith.constant 0 : index
    %77 = vector.load %arg11[%c96, %c0_70] : memref<392x128xf32, #tpu.memory_space<vmem>>, vector<8x128xf32>
    %c192_71 = arith.constant 192 : index
    %c0_72 = arith.constant 0 : index
    %78 = vector.load %arg11[%c192_71, %c0_72] : memref<392x128xf32, #tpu.memory_space<vmem>>, vector<8x128xf32>
    %c208 = arith.constant 208 : index
    %c0_73 = arith.constant 0 : index
    %79 = vector.load %arg11[%c208, %c0_73] : memref<392x128xf32, #tpu.memory_space<vmem>>, vector<8x128xf32>
    %80 = tpu.concatenate %76, %77, %78, %79 in 0 : vector<8x128xf32>, vector<8x128xf32>, vector<8x128xf32>, vector<8x128xf32> -> vector<32x128xf32>
    %c7 = arith.constant 7 : index
    %c0_74 = arith.constant 0 : index
    %c0_75 = arith.constant 0 : index
    %81 = vector.load %arg4[%c7, %c0_74, %c0_75] : memref<16x128x128xf32, #tpu.memory_space<vmem>>, vector<1x128x128xf32>
    %82 = vector.shape_cast %81 : vector<1x128x128xf32> to vector<128x128xf32>
    %cst_76 = arith.constant dense<0.000000e+00> : vector<32x128xf32>
    %83 = tpu.matmul %80, %82, %cst_76 {dimension_numbers = #tpu.dot_dimension_numbers<[1], [0], [0], [1], [0, 0, 1, 1], [], []>} : vector<32x128xf32>, vector<128x128xf32>, vector<32x128xf32> -> vector<32x128xf32>
    %84 = arith.addf %75, %83 : vector<32x128xf32>
    %c112_77 = arith.constant 112 : index
    %c0_78 = arith.constant 0 : index
    %85 = vector.load %arg11[%c112_77, %c0_78] : memref<392x128xf32, #tpu.memory_space<vmem>>, vector<8x128xf32>
    %c128_79 = arith.constant 128 : index
    %c0_80 = arith.constant 0 : index
    %86 = vector.load %arg11[%c128_79, %c0_80] : memref<392x128xf32, #tpu.memory_space<vmem>>, vector<8x128xf32>
    %c224 = arith.constant 224 : index
    %c0_81 = arith.constant 0 : index
    %87 = vector.load %arg11[%c224, %c0_81] : memref<392x128xf32, #tpu.memory_space<vmem>>, vector<8x128xf32>
    %c240 = arith.constant 240 : index
    %c0_82 = arith.constant 0 : index
    %88 = vector.load %arg11[%c240, %c0_82] : memref<392x128xf32, #tpu.memory_space<vmem>>, vector<8x128xf32>
    %89 = tpu.concatenate %85, %86, %87, %88 in 0 : vector<8x128xf32>, vector<8x128xf32>, vector<8x128xf32>, vector<8x128xf32> -> vector<32x128xf32>
    %c8_83 = arith.constant 8 : index
    %c0_84 = arith.constant 0 : index
    %c0_85 = arith.constant 0 : index
    %90 = vector.load %arg4[%c8_83, %c0_84, %c0_85] : memref<16x128x128xf32, #tpu.memory_space<vmem>>, vector<1x128x128xf32>
    %91 = vector.shape_cast %90 : vector<1x128x128xf32> to vector<128x128xf32>
    %cst_86 = arith.constant dense<0.000000e+00> : vector<32x128xf32>
    %92 = tpu.matmul %89, %91, %cst_86 {dimension_numbers = #tpu.dot_dimension_numbers<[1], [0], [0], [1], [0, 0, 1, 1], [], []>} : vector<32x128xf32>, vector<128x128xf32>, vector<32x128xf32> -> vector<32x128xf32>
    %93 = arith.addf %84, %92 : vector<32x128xf32>
    %c120_87 = arith.constant 120 : index
    %c0_88 = arith.constant 0 : index
    %94 = vector.load %arg11[%c120_87, %c0_88] : memref<392x128xf32, #tpu.memory_space<vmem>>, vector<8x128xf32>
    %c136_89 = arith.constant 136 : index
    %c0_90 = arith.constant 0 : index
    %95 = vector.load %arg11[%c136_89, %c0_90] : memref<392x128xf32, #tpu.memory_space<vmem>>, vector<8x128xf32>
    %c232 = arith.constant 232 : index
    %c0_91 = arith.constant 0 : index
    %96 = vector.load %arg11[%c232, %c0_91] : memref<392x128xf32, #tpu.memory_space<vmem>>, vector<8x128xf32>
    %c248 = arith.constant 248 : index
    %c0_92 = arith.constant 0 : index
    %97 = vector.load %arg11[%c248, %c0_92] : memref<392x128xf32, #tpu.memory_space<vmem>>, vector<8x128xf32>
    %98 = tpu.concatenate %94, %95, %96, %97 in 0 : vector<8x128xf32>, vector<8x128xf32>, vector<8x128xf32>, vector<8x128xf32> -> vector<32x128xf32>
    %c9 = arith.constant 9 : index
    %c0_93 = arith.constant 0 : index
    %c0_94 = arith.constant 0 : index
    %99 = vector.load %arg4[%c9, %c0_93, %c0_94] : memref<16x128x128xf32, #tpu.memory_space<vmem>>, vector<1x128x128xf32>
    %100 = vector.shape_cast %99 : vector<1x128x128xf32> to vector<128x128xf32>
    %cst_95 = arith.constant dense<0.000000e+00> : vector<32x128xf32>
    %101 = tpu.matmul %98, %100, %cst_95 {dimension_numbers = #tpu.dot_dimension_numbers<[1], [0], [0], [1], [0, 0, 1, 1], [], []>} : vector<32x128xf32>, vector<128x128xf32>, vector<32x128xf32> -> vector<32x128xf32>
    %102 = arith.addf %93, %101 : vector<32x128xf32>
    %c128_96 = arith.constant 128 : index
    %c0_97 = arith.constant 0 : index
    %103 = vector.load %arg11[%c128_96, %c0_97] : memref<392x128xf32, #tpu.memory_space<vmem>>, vector<8x128xf32>
    %c144_98 = arith.constant 144 : index
    %c0_99 = arith.constant 0 : index
    %104 = vector.load %arg11[%c144_98, %c0_99] : memref<392x128xf32, #tpu.memory_space<vmem>>, vector<8x128xf32>
    %c240_100 = arith.constant 240 : index
    %c0_101 = arith.constant 0 : index
    %105 = vector.load %arg11[%c240_100, %c0_101] : memref<392x128xf32, #tpu.memory_space<vmem>>, vector<8x128xf32>
    %c256 = arith.constant 256 : index
    %c0_102 = arith.constant 0 : index
    %106 = vector.load %arg11[%c256, %c0_102] : memref<392x128xf32, #tpu.memory_space<vmem>>, vector<8x128xf32>
    %107 = tpu.concatenate %103, %104, %105, %106 in 0 : vector<8x128xf32>, vector<8x128xf32>, vector<8x128xf32>, vector<8x128xf32> -> vector<32x128xf32>
    %c10 = arith.constant 10 : index
    %c0_103 = arith.constant 0 : index
    %c0_104 = arith.constant 0 : index
    %108 = vector.load %arg4[%c10, %c0_103, %c0_104] : memref<16x128x128xf32, #tpu.memory_space<vmem>>, vector<1x128x128xf32>
    %109 = vector.shape_cast %108 : vector<1x128x128xf32> to vector<128x128xf32>
    %cst_105 = arith.constant dense<0.000000e+00> : vector<32x128xf32>
    %110 = tpu.matmul %107, %109, %cst_105 {dimension_numbers = #tpu.dot_dimension_numbers<[1], [0], [0], [1], [0, 0, 1, 1], [], []>} : vector<32x128xf32>, vector<128x128xf32>, vector<32x128xf32> -> vector<32x128xf32>
    %111 = arith.addf %102, %110 : vector<32x128xf32>
    %c136_106 = arith.constant 136 : index
    %c0_107 = arith.constant 0 : index
    %112 = vector.load %arg11[%c136_106, %c0_107] : memref<392x128xf32, #tpu.memory_space<vmem>>, vector<8x128xf32>
    %c152_108 = arith.constant 152 : index
    %c0_109 = arith.constant 0 : index
    %113 = vector.load %arg11[%c152_108, %c0_109] : memref<392x128xf32, #tpu.memory_space<vmem>>, vector<8x128xf32>
    %c248_110 = arith.constant 248 : index
    %c0_111 = arith.constant 0 : index
    %114 = vector.load %arg11[%c248_110, %c0_111] : memref<392x128xf32, #tpu.memory_space<vmem>>, vector<8x128xf32>
    %c264 = arith.constant 264 : index
    %c0_112 = arith.constant 0 : index
    %115 = vector.load %arg11[%c264, %c0_112] : memref<392x128xf32, #tpu.memory_space<vmem>>, vector<8x128xf32>
    %116 = tpu.concatenate %112, %113, %114, %115 in 0 : vector<8x128xf32>, vector<8x128xf32>, vector<8x128xf32>, vector<8x128xf32> -> vector<32x128xf32>
    %c11 = arith.constant 11 : index
    %c0_113 = arith.constant 0 : index
    %c0_114 = arith.constant 0 : index
    %117 = vector.load %arg4[%c11, %c0_113, %c0_114] : memref<16x128x128xf32, #tpu.memory_space<vmem>>, vector<1x128x128xf32>
    %118 = vector.shape_cast %117 : vector<1x128x128xf32> to vector<128x128xf32>
    %cst_115 = arith.constant dense<0.000000e+00> : vector<32x128xf32>
    %119 = tpu.matmul %116, %118, %cst_115 {dimension_numbers = #tpu.dot_dimension_numbers<[1], [0], [0], [1], [0, 0, 1, 1], [], []>} : vector<32x128xf32>, vector<128x128xf32>, vector<32x128xf32> -> vector<32x128xf32>
    %120 = arith.addf %111, %119 : vector<32x128xf32>
    %c168_116 = arith.constant 168 : index
    %c0_117 = arith.constant 0 : index
    %121 = vector.load %arg11[%c168_116, %c0_117] : memref<392x128xf32, #tpu.memory_space<vmem>>, vector<8x128xf32>
    %c184_118 = arith.constant 184 : index
    %c0_119 = arith.constant 0 : index
    %122 = vector.load %arg11[%c184_118, %c0_119] : memref<392x128xf32, #tpu.memory_space<vmem>>, vector<8x128xf32>
    %c280 = arith.constant 280 : index
    %c0_120 = arith.constant 0 : index
    %123 = vector.load %arg11[%c280, %c0_120] : memref<392x128xf32, #tpu.memory_space<vmem>>, vector<8x128xf32>
    %c296 = arith.constant 296 : index
    %c0_121 = arith.constant 0 : index
    %124 = vector.load %arg11[%c296, %c0_121] : memref<392x128xf32, #tpu.memory_space<vmem>>, vector<8x128xf32>
    %125 = tpu.concatenate %121, %122, %123, %124 in 0 : vector<8x128xf32>, vector<8x128xf32>, vector<8x128xf32>, vector<8x128xf32> -> vector<32x128xf32>
    %c12 = arith.constant 12 : index
    %c0_122 = arith.constant 0 : index
    %c0_123 = arith.constant 0 : index
    %126 = vector.load %arg4[%c12, %c0_122, %c0_123] : memref<16x128x128xf32, #tpu.memory_space<vmem>>, vector<1x128x128xf32>
    %127 = vector.shape_cast %126 : vector<1x128x128xf32> to vector<128x128xf32>
    %cst_124 = arith.constant dense<0.000000e+00> : vector<32x128xf32>
    %128 = tpu.matmul %125, %127, %cst_124 {dimension_numbers = #tpu.dot_dimension_numbers<[1], [0], [0], [1], [0, 0, 1, 1], [], []>} : vector<32x128xf32>, vector<128x128xf32>, vector<32x128xf32> -> vector<32x128xf32>
    %129 = arith.addf %120, %128 : vector<32x128xf32>
    %c176_125 = arith.constant 176 : index
    %c0_126 = arith.constant 0 : index
    %130 = vector.load %arg11[%c176_125, %c0_126] : memref<392x128xf32, #tpu.memory_space<vmem>>, vector<8x128xf32>
    %c192_127 = arith.constant 192 : index
    %c0_128 = arith.constant 0 : index
    %131 = vector.load %arg11[%c192_127, %c0_128] : memref<392x128xf32, #tpu.memory_space<vmem>>, vector<8x128xf32>
    %c288 = arith.constant 288 : index
    %c0_129 = arith.constant 0 : index
    %132 = vector.load %arg11[%c288, %c0_129] : memref<392x128xf32, #tpu.memory_space<vmem>>, vector<8x128xf32>
    %c304 = arith.constant 304 : index
    %c0_130 = arith.constant 0 : index
    %133 = vector.load %arg11[%c304, %c0_130] : memref<392x128xf32, #tpu.memory_space<vmem>>, vector<8x128xf32>
    %134 = tpu.concatenate %130, %131, %132, %133 in 0 : vector<8x128xf32>, vector<8x128xf32>, vector<8x128xf32>, vector<8x128xf32> -> vector<32x128xf32>
    %c13 = arith.constant 13 : index
    %c0_131 = arith.constant 0 : index
    %c0_132 = arith.constant 0 : index
    %135 = vector.load %arg4[%c13, %c0_131, %c0_132] : memref<16x128x128xf32, #tpu.memory_space<vmem>>, vector<1x128x128xf32>
    %136 = vector.shape_cast %135 : vector<1x128x128xf32> to vector<128x128xf32>
    %cst_133 = arith.constant dense<0.000000e+00> : vector<32x128xf32>
    %137 = tpu.matmul %134, %136, %cst_133 {dimension_numbers = #tpu.dot_dimension_numbers<[1], [0], [0], [1], [0, 0, 1, 1], [], []>} : vector<32x128xf32>, vector<128x128xf32>, vector<32x128xf32> -> vector<32x128xf32>
    %138 = arith.addf %129, %137 : vector<32x128xf32>
    %c184_134 = arith.constant 184 : index
    %c0_135 = arith.constant 0 : index
    %139 = vector.load %arg11[%c184_134, %c0_135] : memref<392x128xf32, #tpu.memory_space<vmem>>, vector<8x128xf32>
    %c200_136 = arith.constant 200 : index
    %c0_137 = arith.constant 0 : index
    %140 = vector.load %arg11[%c200_136, %c0_137] : memref<392x128xf32, #tpu.memory_space<vmem>>, vector<8x128xf32>
    %c296_138 = arith.constant 296 : index
    %c0_139 = arith.constant 0 : index
    %141 = vector.load %arg11[%c296_138, %c0_139] : memref<392x128xf32, #tpu.memory_space<vmem>>, vector<8x128xf32>
    %c312 = arith.constant 312 : index
    %c0_140 = arith.constant 0 : index
    %142 = vector.load %arg11[%c312, %c0_140] : memref<392x128xf32, #tpu.memory_space<vmem>>, vector<8x128xf32>
    %143 = tpu.concatenate %139, %140, %141, %142 in 0 : vector<8x128xf32>, vector<8x128xf32>, vector<8x128xf32>, vector<8x128xf32> -> vector<32x128xf32>
    %c14 = arith.constant 14 : index
    %c0_141 = arith.constant 0 : index
    %c0_142 = arith.constant 0 : index
    %144 = vector.load %arg4[%c14, %c0_141, %c0_142] : memref<16x128x128xf32, #tpu.memory_space<vmem>>, vector<1x128x128xf32>
    %145 = vector.shape_cast %144 : vector<1x128x128xf32> to vector<128x128xf32>
    %cst_143 = arith.constant dense<0.000000e+00> : vector<32x128xf32>
    %146 = tpu.matmul %143, %145, %cst_143 {dimension_numbers = #tpu.dot_dimension_numbers<[1], [0], [0], [1], [0, 0, 1, 1], [], []>} : vector<32x128xf32>, vector<128x128xf32>, vector<32x128xf32> -> vector<32x128xf32>
    %147 = arith.addf %138, %146 : vector<32x128xf32>
    %c192_144 = arith.constant 192 : index
    %c0_145 = arith.constant 0 : index
    %148 = vector.load %arg11[%c192_144, %c0_145] : memref<392x128xf32, #tpu.memory_space<vmem>>, vector<8x128xf32>
    %c208_146 = arith.constant 208 : index
    %c0_147 = arith.constant 0 : index
    %149 = vector.load %arg11[%c208_146, %c0_147] : memref<392x128xf32, #tpu.memory_space<vmem>>, vector<8x128xf32>
    %c304_148 = arith.constant 304 : index
    %c0_149 = arith.constant 0 : index
    %150 = vector.load %arg11[%c304_148, %c0_149] : memref<392x128xf32, #tpu.memory_space<vmem>>, vector<8x128xf32>
    %c320 = arith.constant 320 : index
    %c0_150 = arith.constant 0 : index
    %151 = vector.load %arg11[%c320, %c0_150] : memref<392x128xf32, #tpu.memory_space<vmem>>, vector<8x128xf32>
    %152 = tpu.concatenate %148, %149, %150, %151 in 0 : vector<8x128xf32>, vector<8x128xf32>, vector<8x128xf32>, vector<8x128xf32> -> vector<32x128xf32>
    %c15 = arith.constant 15 : index
    %c0_151 = arith.constant 0 : index
    %c0_152 = arith.constant 0 : index
    %153 = vector.load %arg4[%c15, %c0_151, %c0_152] : memref<16x128x128xf32, #tpu.memory_space<vmem>>, vector<1x128x128xf32>
    %154 = vector.shape_cast %153 : vector<1x128x128xf32> to vector<128x128xf32>
    %cst_153 = arith.constant dense<0.000000e+00> : vector<32x128xf32>
    %155 = tpu.matmul %152, %154, %cst_153 {dimension_numbers = #tpu.dot_dimension_numbers<[1], [0], [0], [1], [0, 0, 1, 1], [], []>} : vector<32x128xf32>, vector<128x128xf32>, vector<32x128xf32> -> vector<32x128xf32>
    %156 = arith.addf %147, %155 : vector<32x128xf32>
    %cst_154 = arith.constant 0.000000e+00 : f32
    %157 = vector.broadcast %cst_154 : f32 to vector<32x128xf32>
    %158 = arith.maximumf %156, %157 : vector<32x128xf32>
    %cst_155 = arith.constant 0.000000e+00 : f32
    %159 = vector.broadcast %cst_155 : f32 to vector<8x128xf32>
    %c0_156 = arith.constant 0 : index
    %c0_157 = arith.constant 0 : index
    %160 = vector.load %arg7[%c0_156, %c0_157] : memref<1x128xf32, #tpu.memory_space<vmem>>, vector<1x128xf32>
    %161 = vector.broadcast %160 : vector<1x128xf32> to vector<8x128xf32>
    %162 = arith.addf %159, %161 : vector<8x128xf32>
    %163 = vector.extract_strided_slice %158 {offsets = [0, 0], sizes = [8, 128], strides = [1, 1]} : vector<32x128xf32> to vector<8x128xf32>
    %c0_158 = arith.constant 0 : index
    %c0_159 = arith.constant 0 : index
    %c0_160 = arith.constant 0 : index
    %164 = vector.load %arg6[%c0_158, %c0_159, %c0_160] : memref<4x128x128xf32, #tpu.memory_space<vmem>>, vector<1x128x128xf32>
    %165 = vector.shape_cast %164 : vector<1x128x128xf32> to vector<128x128xf32>
    %cst_161 = arith.constant dense<0.000000e+00> : vector<8x128xf32>
    %166 = tpu.matmul %163, %165, %cst_161 {dimension_numbers = #tpu.dot_dimension_numbers<[1], [0], [0], [1], [0, 0, 1, 1], [], []>} : vector<8x128xf32>, vector<128x128xf32>, vector<8x128xf32> -> vector<8x128xf32>
    %167 = arith.addf %162, %166 : vector<8x128xf32>
    %168 = vector.extract_strided_slice %158 {offsets = [8, 0], sizes = [8, 128], strides = [1, 1]} : vector<32x128xf32> to vector<8x128xf32>
    %c1_162 = arith.constant 1 : index
    %c0_163 = arith.constant 0 : index
    %c0_164 = arith.constant 0 : index
    %169 = vector.load %arg6[%c1_162, %c0_163, %c0_164] : memref<4x128x128xf32, #tpu.memory_space<vmem>>, vector<1x128x128xf32>
    %170 = vector.shape_cast %169 : vector<1x128x128xf32> to vector<128x128xf32>
    %cst_165 = arith.constant dense<0.000000e+00> : vector<8x128xf32>
    %171 = tpu.matmul %168, %170, %cst_165 {dimension_numbers = #tpu.dot_dimension_numbers<[1], [0], [0], [1], [0, 0, 1, 1], [], []>} : vector<8x128xf32>, vector<128x128xf32>, vector<8x128xf32> -> vector<8x128xf32>
    %172 = arith.addf %167, %171 : vector<8x128xf32>
    %173 = vector.extract_strided_slice %158 {offsets = [16, 0], sizes = [8, 128], strides = [1, 1]} : vector<32x128xf32> to vector<8x128xf32>
    %c2_166 = arith.constant 2 : index
    %c0_167 = arith.constant 0 : index
    %c0_168 = arith.constant 0 : index
    %174 = vector.load %arg6[%c2_166, %c0_167, %c0_168] : memref<4x128x128xf32, #tpu.memory_space<vmem>>, vector<1x128x128xf32>
    %175 = vector.shape_cast %174 : vector<1x128x128xf32> to vector<128x128xf32>
    %cst_169 = arith.constant dense<0.000000e+00> : vector<8x128xf32>
    %176 = tpu.matmul %173, %175, %cst_169 {dimension_numbers = #tpu.dot_dimension_numbers<[1], [0], [0], [1], [0, 0, 1, 1], [], []>} : vector<8x128xf32>, vector<128x128xf32>, vector<8x128xf32> -> vector<8x128xf32>
    %177 = arith.addf %172, %176 : vector<8x128xf32>
    %178 = vector.extract_strided_slice %158 {offsets = [24, 0], sizes = [8, 128], strides = [1, 1]} : vector<32x128xf32> to vector<8x128xf32>
    %c3_170 = arith.constant 3 : index
    %c0_171 = arith.constant 0 : index
    %c0_172 = arith.constant 0 : index
    %179 = vector.load %arg6[%c3_170, %c0_171, %c0_172] : memref<4x128x128xf32, #tpu.memory_space<vmem>>, vector<1x128x128xf32>
    %180 = vector.shape_cast %179 : vector<1x128x128xf32> to vector<128x128xf32>
    %cst_173 = arith.constant dense<0.000000e+00> : vector<8x128xf32>
    %181 = tpu.matmul %178, %180, %cst_173 {dimension_numbers = #tpu.dot_dimension_numbers<[1], [0], [0], [1], [0, 0, 1, 1], [], []>} : vector<8x128xf32>, vector<128x128xf32>, vector<8x128xf32> -> vector<8x128xf32>
    %182 = arith.addf %177, %181 : vector<8x128xf32>
    %cst_174 = arith.constant 0.000000e+00 : f32
    %183 = vector.broadcast %cst_174 : f32 to vector<8x128xf32>
    %184 = arith.maximumf %182, %183 : vector<8x128xf32>
    %c0_175 = arith.constant 0 : index
    %c0_176 = arith.constant 0 : index
    %185 = vector.load %arg8[%c0_175, %c0_176] : memref<128x128xf32, #tpu.memory_space<vmem>>, vector<128x128xf32>
    %cst_177 = arith.constant dense<0.000000e+00> : vector<8x128xf32>
    %186 = tpu.matmul %184, %185, %cst_177 {dimension_numbers = #tpu.dot_dimension_numbers<[1], [0], [0], [1], [0, 0, 1, 1], [], []>} : vector<8x128xf32>, vector<128x128xf32>, vector<8x128xf32> -> vector<8x128xf32>
    %c0_178 = arith.constant 0 : index
    %c0_179 = arith.constant 0 : index
    %187 = vector.load %arg9[%c0_178, %c0_179] : memref<1x128xf32, #tpu.memory_space<vmem>>, vector<1x128xf32>
    %188 = vector.broadcast %187 : vector<1x128xf32> to vector<8x128xf32>
    %189 = arith.addf %186, %188 : vector<8x128xf32>
    %190 = math.tanh %189 : vector<8x128xf32>
    %c0_180 = arith.constant 0 : index
    %c0_181 = arith.constant 0 : index
    %191 = vector.load %arg10[%c0_180, %c0_181] : memref<8x128xf32, #tpu.memory_space<vmem>>, vector<8x128xf32>
    tpu.vector_store %arg10[%c0_180, %c0_181], %190 {strides = array<i32>} : memref<8x128xf32, #tpu.memory_space<vmem>>, vector<8x128xf32>,
    return
  }
  func.func @transform_0(%arg0: i32) -> (i32, i32) {
    %c0_i32 = arith.constant 0 : i32
    %c0_i32_0 = arith.constant 0 : i32
    return %arg0, %c0_i32 : i32, i32
  }
  func.func @transform_1(%arg0: i32) -> (i32, i32) {
    %c0_i32 = arith.constant 0 : i32
    %c0_i32_0 = arith.constant 0 : i32
    %c0_i32_1 = arith.constant 0 : i32
    return %c0_i32, %c0_i32_0 : i32, i32
  }
  func.func @transform_2(%arg0: i32) -> (i32, i32) {
    %c0_i32 = arith.constant 0 : i32
    %c0_i32_0 = arith.constant 0 : i32
    %c0_i32_1 = arith.constant 0 : i32
    return %c0_i32, %c0_i32_0 : i32, i32
  }
  func.func @transform_3(%arg0: i32) -> (i32, i32, i32) {
    %c0_i32 = arith.constant 0 : i32
    %c0_i32_0 = arith.constant 0 : i32
    %c0_i32_1 = arith.constant 0 : i32
    %c0_i32_2 = arith.constant 0 : i32
    return %c0_i32, %c0_i32_0, %c0_i32_1 : i32, i32, i32
  }
  func.func @transform_4(%arg0: i32) -> (i32, i32) {
    %c0_i32 = arith.constant 0 : i32
    %c0_i32_0 = arith.constant 0 : i32
    %c0_i32_1 = arith.constant 0 : i32
    return %c0_i32, %c0_i32_0 : i32, i32
  }
  func.func @transform_5(%arg0: i32) -> (i32, i32, i32) {
    %c0_i32 = arith.constant 0 : i32
    %c0_i32_0 = arith.constant 0 : i32
    %c0_i32_1 = arith.constant 0 : i32
    %c0_i32_2 = arith.constant 0 : i32
    return %c0_i32, %c0_i32_0, %c0_i32_1 : i32, i32, i32
  }
  func.func @transform_6(%arg0: i32) -> (i32, i32) {
    %c0_i32 = arith.constant 0 : i32
    %c0_i32_0 = arith.constant 0 : i32
    %c0_i32_1 = arith.constant 0 : i32
    return %c0_i32, %c0_i32_0 : i32, i32
  }
  func.func @transform_7(%arg0: i32) -> (i32, i32) {
    %c0_i32 = arith.constant 0 : i32
    %c0_i32_0 = arith.constant 0 : i32
    %c0_i32_1 = arith.constant 0 : i32
    return %c0_i32, %c0_i32_0 : i32, i32
  }
  func.func @transform_8(%arg0: i32) -> (i32, i32) {
    %c0_i32 = arith.constant 0 : i32
    %c0_i32_0 = arith.constant 0 : i32
    %c0_i32_1 = arith.constant 0 : i32
    return %c0_i32, %c0_i32_0 : i32, i32
  }
  func.func @transform_9(%arg0: i32) -> (i32, i32) {
    %c0_i32 = arith.constant 0 : i32
    %c0_i32_0 = arith.constant 0 : i32
    return %arg0, %c0_i32 : i32, i32
  }
}

</mosaic_0001>

<llo_original>
// kernel: nature_cnn_forward.1
$region0: #{nature_cnn_forward.1}
  #allocation0 [shape = 'u32[]', space=smem, size = 0x4, offset = 0x4, fixed_abs, tag = 'smem constant byte address 0x4 - core index']
  #allocation1 [shape = 'u32[144,128]{1,0:T(1,128)}', space=vmem, size = 0x12000, scoped, tag = 'internal scratch']
  #allocation2 [shape = 'f32[392,128]{1,0:T(8,128)}', space=vmem, size = 0x31000, scoped, tag = 'scratch operand']
  %s0 = inlined_call_operand.vmem [shape: f32[392,256], index: 0, kind: input, shape index: {}]
  %s1 = inlined_call_operand.vmem [shape: f32[256,128], index: 1, kind: input, shape index: {}]
  %s2 = inlined_call_operand.vmem [shape: f32[1,128], index: 2, kind: input, shape index: {}]
  %s3 = inlined_call_operand.vmem [shape: f32[16,128,128], index: 3, kind: input, shape index: {}]
  %s4 = inlined_call_operand.vmem [shape: f32[1,128], index: 4, kind: input, shape index: {}]
  %s5 = inlined_call_operand.vmem [shape: f32[4,128,128], index: 5, kind: input, shape index: {}]
  %s6 = inlined_call_operand.vmem [shape: f32[1,128], index: 6, kind: input, shape index: {}]
  %s7 = inlined_call_operand.vmem [shape: f32[128,128], index: 7, kind: input, shape index: {}]
  %s8 = inlined_call_operand.vmem [shape: f32[1,128], index: 8, kind: input, shape index: {}]
  %s9 = inlined_call_operand.vmem [shape: f32[8,128], index: 9, kind: output, shape index: {}]
  %s10 = sld [smem:[#allocation0]]
  $region46: #{nature_cnn_forward.1} parent=0
    _
  %s12 = ssub.s32 1, %s10
  %s13 = scalar_select 0, %s12, %s10
  // Predicated region
  $region2: #{nature_cnn_forward.1} parent=0 // pred_check
    _
  $region3: #{nature_cnn_forward.1} parent=0 // pred_check_branch
    %15 = sbr.rel (0) target = $region5
  $region4: #{nature_cnn_forward.1} parent=0 // pred_region
    _
  $region5: #{nature_cnn_forward.1} parent=0 // pred_fallthru
    _
  // Predicated region
  $region6: #{nature_cnn_forward.1} parent=0 // pred_check
    _
  $region7: #{nature_cnn_forward.1} parent=0 // pred_check_branch
    %17 = sbr.rel (0) target = $region9
  $region8: #{nature_cnn_forward.1} parent=0 // pred_region
    _
  $region9: #{nature_cnn_forward.1} parent=0 // pred_fallthru
    _
  // Predicated region
  $region10: #{nature_cnn_forward.1} parent=0 // pred_check
    _
  $region11: #{nature_cnn_forward.1} parent=0 // pred_check_branch
    %19 = sbr.rel (0) target = $region13
  $region12: #{nature_cnn_forward.1} parent=0 // pred_region
    _
  $region13: #{nature_cnn_forward.1} parent=0 // pred_fallthru
    _
  // Predicated region
  $region14: #{nature_cnn_forward.1} parent=0 // pred_check
    _
  $region15: #{nature_cnn_forward.1} parent=0 // pred_check_branch
    %21 = sbr.rel (0) target = $region17
  $region16: #{nature_cnn_forward.1} parent=0 // pred_region
    _
  $region17: #{nature_cnn_forward.1} parent=0 // pred_fallthru
    _
  // Predicated region
  $region18: #{nature_cnn_forward.1} parent=0 // pred_check
    _
  $region19: #{nature_cnn_forward.1} parent=0 // pred_check_branch
    %23 = sbr.rel (0) target = $region21
  $region20: #{nature_cnn_forward.1} parent=0 // pred_region
    _
  $region21: #{nature_cnn_forward.1} parent=0 // pred_fallthru
    _
  // Predicated region
  $region22: #{nature_cnn_forward.1} parent=0 // pred_check
    _
  $region23: #{nature_cnn_forward.1} parent=0 // pred_check_branch
    %25 = sbr.rel (0) target = $region25
  $region24: #{nature_cnn_forward.1} parent=0 // pred_region
    _
  $region25: #{nature_cnn_forward.1} parent=0 // pred_fallthru
    _
  // Predicated region
  $region26: #{nature_cnn_forward.1} parent=0 // pred_check
    _
  $region27: #{nature_cnn_forward.1} parent=0 // pred_check_branch
    %27 = sbr.rel (0) target = $region29
  $region28: #{nature_cnn_forward.1} parent=0 // pred_region
    _
  $region29: #{nature_cnn_forward.1} parent=0 // pred_fallthru
    _
  // Predicated region
  $region30: #{nature_cnn_forward.1} parent=0 // pred_check
    _
  $region31: #{nature_cnn_forward.1} parent=0 // pred_check_branch
    %29 = sbr.rel (0) target = $region33
  $region32: #{nature_cnn_forward.1} parent=0 // pred_region
    _
  $region33: #{nature_cnn_forward.1} parent=0 // pred_fallthru
    _
  // Predicated region
  $region34: #{nature_cnn_forward.1} parent=0 // pred_check
    _
  $region35: #{nature_cnn_forward.1} parent=0 // pred_check_branch
    %31 = sbr.rel (0) target = $region37
  $region36: #{nature_cnn_forward.1} parent=0 // pred_region
    _
  $region37: #{nature_cnn_forward.1} parent=0 // pred_fallthru
    _
  %v32 = vld [vmem:[%s0] sm:$0xff]
  %v33 = vld [vmem:[%s0 + $0x8] sm:$0xff]
  %v34 = vld [vmem:[%s0 + $0x10] sm:$0xff]
  %v35 = vld [vmem:[%s0 + $0x18] sm:$0xff]
  %v36 = vld [vmem:[%s0 + $0x20] sm:$0xff]
  %v37 = vld [vmem:[%s0 + $0x28] sm:$0xff]
  %v38 = vld [vmem:[%s0 + $0x30] sm:$0xff]
  %v39 = vld [vmem:[%s0 + $0x38] sm:$0xff]
  %v40 = vld [vmem:[%s0 + $0x40] sm:$0xff]
  %v41 = vld [vmem:[%s0 + $0x48] sm:$0xff]
  %v42 = vld [vmem:[%s0 + $0x50] sm:$0xff]
  %v43 = vld [vmem:[%s0 + $0x58] sm:$0xff]
  %v44 = vld [vmem:[%s0 + $0x60] sm:$0xff]
  %v45 = vld [vmem:[%s0 + $0x68] sm:$0xff]
  %v46 = vld [vmem:[%s0 + $0x70] sm:$0xff]
  %v47 = vld [vmem:[%s0 + $0x78] sm:$0xff]
  %v48 = vld [vmem:[%s0 + $0x80] sm:$0xff]
  %v49 = vld [vmem:[%s0 + $0x88] sm:$0xff]
  %v50 = vld [vmem:[%s0 + $0x90] sm:$0xff]
  %v51 = vld [vmem:[%s0 + $0x98] sm:$0xff]
  %v52 = vld [vmem:[%s0 + $0xa0] sm:$0xff]
  %v53 = vld [vmem:[%s0 + $0xa8] sm:$0xff]
  %v54 = vld [vmem:[%s0 + $0xb0] sm:$0xff]
  %v55 = vld [vmem:[%s0 + $0xb8] sm:$0xff]
  %v56 = vld [vmem:[%s0 + $0xc0] sm:$0xff]
  %v57 = vld [vmem:[%s0 + $0xc8] sm:$0xff]
  %v58 = vld [vmem:[%s0 + $0xd0] sm:$0xff]
  %v59 = vld [vmem:[%s0 + $0xd8] sm:$0xff]
  %v60 = vld [vmem:[%s0 + $0xe0] sm:$0xff]
  %v61 = vld [vmem:[%s0 + $0xe8] sm:$0xff]
  %v62 = vld [vmem:[%s0 + $0xf0] sm:$0xff]
  %v63 = vld [vmem:[%s0 + $0xf8] sm:$0xff]
  %v64 = vld [vmem:[%s0 + $0x100] sm:$0xff]
  %v65 = vld [vmem:[%s0 + $0x108] sm:$0xff]
  %v66 = vld [vmem:[%s0 + $0x110] sm:$0xff]
  %v67 = vld [vmem:[%s0 + $0x118] sm:$0xff]
  %v68 = vld [vmem:[%s0 + $0x120] sm:$0xff]
  %v69 = vld [vmem:[%s0 + $0x128] sm:$0xff]
  %v70 = vld [vmem:[%s0 + $0x130] sm:$0xff]
  %v71 = vld [vmem:[%s0 + $0x138] sm:$0xff]
  %v72 = vld [vmem:[%s0 + $0x140] sm:$0xff]
  %v73 = vld [vmem:[%s0 + $0x148] sm:$0xff]
  %v74 = vld [vmem:[%s0 + $0x150] sm:$0xff]
  %v75 = vld [vmem:[%s0 + $0x158] sm:$0xff]
  %v76 = vld [vmem:[%s0 + $0x160] sm:$0xff]
  %v77 = vld [vmem:[%s0 + $0x168] sm:$0xff]
  %v78 = vld [vmem:[%s0 + $0x170] sm:$0xff]
  %v79 = vld [vmem:[%s0 + $0x178] sm:$0xff]
  %v80 = vld [vmem:[%s0 + $0x180] sm:$0xff]
  %v81 = vld [vmem:[%s0 + $0x188] sm:$0xff]
  %v82 = vld [vmem:[%s0 + $0x190] sm:$0xff]
  %v83 = vld [vmem:[%s0 + $0x198] sm:$0xff]
  %v84 = vld [vmem:[%s0 + $0x1a0] sm:$0xff]
  %v85 = vld [vmem:[%s0 + $0x1a8] sm:$0xff]
  %v86 = vld [vmem:[%s0 + $0x1b0] sm:$0xff]
  %v87 = vld [vmem:[%s0 + $0x1b8] sm:$0xff]
  %v88 = vld [vmem:[%s0 + $0x1c0] sm:$0xff]
  %v89 = vld [vmem:[%s0 + $0x1c8] sm:$0xff]
  %v90 = vld [vmem:[%s0 + $0x1d0] sm:$0xff]
  %v91 = vld [vmem:[%s0 + $0x1d8] sm:$0xff]
  %v92 = vld [vmem:[%s0 + $0x1e0] sm:$0xff]
  %v93 = vld [vmem:[%s0 + $0x1e8] sm:$0xff]
  %v94 = vld [vmem:[%s0 + $0x1f0] sm:$0xff]
  %v95 = vld [vmem:[%s0 + $0x1f8] sm:$0xff]
  %v96 = vld [vmem:[%s0 + $0x200] sm:$0xff]
  %v97 = vld [vmem:[%s0 + $0x208] sm:$0xff]
  %v98 = vld [vmem:[%s0 + $0x210] sm:$0xff]
  %v99 = vld [vmem:[%s0 + $0x218] sm:$0xff]
  %v100 = vld [vmem:[%s0 + $0x220] sm:$0xff]
  %v101 = vld [vmem:[%s0 + $0x228] sm:$0xff]
  %v102 = vld [vmem:[%s0 + $0x230] sm:$0xff]
  %v103 = vld [vmem:[%s0 + $0x238] sm:$0xff]
  %v104 = vld [vmem:[%s0 + $0x240] sm:$0xff]
  %v105 = vld [vmem:[%s0 + $0x248] sm:$0xff]
  %v106 = vld [vmem:[%s0 + $0x250] sm:$0xff]
  %v107 = vld [vmem:[%s0 + $0x258] sm:$0xff]
  %v108 = vld [vmem:[%s0 + $0x260] sm:$0xff]
  %v109 = vld [vmem:[%s0 + $0x268] sm:$0xff]
  %v110 = vld [vmem:[%s0 + $0x270] sm:$0xff]
  %v111 = vld [vmem:[%s0 + $0x278] sm:$0xff]
  %v112 = vld [vmem:[%s0 + $0x280] sm:$0xff]
  %v113 = vld [vmem:[%s0 + $0x288] sm:$0xff]
  %v114 = vld [vmem:[%s0 + $0x290] sm:$0xff]
  %v115 = vld [vmem:[%s0 + $0x298] sm:$0xff]
  %v116 = vld [vmem:[%s0 + $0x2a0] sm:$0xff]
  %v117 = vld [vmem:[%s0 + $0x2a8] sm:$0xff]
  %v118 = vld [vmem:[%s0 + $0x2b0] sm:$0xff]
  %v119 = vld [vmem:[%s0 + $0x2b8] sm:$0xff]
  %v120 = vld [vmem:[%s0 + $0x2c0] sm:$0xff]
  %v121 = vld [vmem:[%s0 + $0x2c8] sm:$0xff]
  %v122 = vld [vmem:[%s0 + $0x2d0] sm:$0xff]
  %v123 = vld [vmem:[%s0 + $0x2d8] sm:$0xff]
  %v124 = vld [vmem:[%s0 + $0x2e0] sm:$0xff]
  %v125 = vld [vmem:[%s0 + $0x2e8] sm:$0xff]
  %v126 = vld [vmem:[%s0 + $0x2f0] sm:$0xff]
  %v127 = vld [vmem:[%s0 + $0x2f8] sm:$0xff]
  %v128 = vld [vmem:[%s0 + $0x300] sm:$0xff]
  %v129 = vld [vmem:[%s0 + $0x308] sm:$0xff]
  %v130 = vld [vmem:[%s1] sm:$0xff]
  %v131 = vld [vmem:[%s1 + $0x8] sm:$0xff]
  %v132 = vld [vmem:[%s1 + $0x10] sm:$0xff]
  %v133 = vld [vmem:[%s1 + $0x18] sm:$0xff]
  %v134 = vld [vmem:[%s1 + $0x20] sm:$0xff]
  %v135 = vld [vmem:[%s1 + $0x28] sm:$0xff]
  %v136 = vld [vmem:[%s1 + $0x30] sm:$0xff]
  %v137 = vld [vmem:[%s1 + $0x38] sm:$0xff]
  %v138 = vld [vmem:[%s1 + $0x40] sm:$0xff]
  %v139 = vld [vmem:[%s1 + $0x48] sm:$0xff]
  %v140 = vld [vmem:[%s1 + $0x50] sm:$0xff]
  %v141 = vld [vmem:[%s1 + $0x58] sm:$0xff]
  %v142 = vld [vmem:[%s1 + $0x60] sm:$0xff]
  %v143 = vld [vmem:[%s1 + $0x68] sm:$0xff]
  %v144 = vld [vmem:[%s1 + $0x70] sm:$0xff]
  %v145 = vld [vmem:[%s1 + $0x78] sm:$0xff]
  %v146 = vld [vmem:[%s1 + $0x80] sm:$0xff]
  %v147 = vld [vmem:[%s1 + $0x88] sm:$0xff]
  %v148 = vld [vmem:[%s1 + $0x90] sm:$0xff]
  %v149 = vld [vmem:[%s1 + $0x98] sm:$0xff]
  %v150 = vld [vmem:[%s1 + $0xa0] sm:$0xff]
  %v151 = vld [vmem:[%s1 + $0xa8] sm:$0xff]
  %v152 = vld [vmem:[%s1 + $0xb0] sm:$0xff]
  %v153 = vld [vmem:[%s1 + $0xb8] sm:$0xff]
  %v154 = vld [vmem:[%s1 + $0xc0] sm:$0xff]
  %v155 = vld [vmem:[%s1 + $0xc8] sm:$0xff]
  %v156 = vld [vmem:[%s1 + $0xd0] sm:$0xff]
  %v157 = vld [vmem:[%s1 + $0xd8] sm:$0xff]
  %v158 = vld [vmem:[%s1 + $0xe0] sm:$0xff]
  %v159 = vld [vmem:[%s1 + $0xe8] sm:$0xff]
  %v160 = vld [vmem:[%s1 + $0xf0] sm:$0xff]
  %v161 = vld [vmem:[%s1 + $0xf8] sm:$0xff]
  %v162 = vld [vmem:[%s2] sm:$0x1]
  %v164 = vlaneseq
  %v165 = vshrl.u32 %v164, 7
  %v166 = vsub.s32 0, %v165
  %v167 = vrot.slane %v162, %v166
  %169 = vmatprep.subr.mxu0 0.0
  %170 = vmatpush1.msra.mxu0 %v130
  %171 = vmatprep.subr.mxu0 0.0
  %172 = vmatpush1.msra.mxu0 %v131
  %173 = vmatprep.subr.mxu0 0.0
  %174 = vmatpush1.msra.mxu0 %v132
  %175 = vmatprep.subr.mxu0 0.0
  %176 = vmatpush1.msra.mxu0 %v133
  %177 = vmatprep.subr.mxu0 0.0
  %178 = vmatpush1.msra.mxu0 %v134
  %179 = vmatprep.subr.mxu0 0.0
  %180 = vmatpush1.msra.mxu0 %v135
  %181 = vmatprep.subr.mxu0 0.0
  %182 = vmatpush1.msra.mxu0 %v136
  %183 = vmatprep.subr.mxu0 0.0
  %184 = vmatpush1.msra.mxu0 %v137
  %185 = vmatprep.subr.mxu0 0.0
  %186 = vmatpush1.msra.mxu0 %v138
  %187 = vmatprep.subr.mxu0 0.0
  %188 = vmatpush1.msra.mxu0 %v139
  %189 = vmatprep.subr.mxu0 0.0
  %190 = vmatpush1.msra.mxu0 %v140
  %191 = vmatprep.subr.mxu0 0.0
  %192 = vmatpush1.msra.mxu0 %v141
  %193 = vmatprep.subr.mxu0 0.0
  %194 = vmatpush1.msra.mxu0 %v142
  %195 = vmatprep.subr.mxu0 0.0
  %196 = vmatpush1.msra.mxu0 %v143
  %197 = vmatprep.subr.mxu0 0.0
  %198 = vmatpush1.msra.mxu0 %v144
  %199 = vmatprep.subr.mxu0 0.0
  %200 = vmatpush1.msra.mxu0 %v145
  %201 = vmatprep.subr.mxu0 0.0
  %202 = vmatpush1.msra.mxu0 %v146
  %203 = vmatprep.subr.mxu0 0.0
  %204 = vmatpush1.msra.mxu0 %v147
  %205 = vmatprep.subr.mxu0 0.0
  %206 = vmatpush1.msra.mxu0 %v148
  %207 = vmatprep.subr.mxu0 0.0
  %208 = vmatpush1.msra.mxu0 %v149
  %209 = vmatprep.subr.mxu0 0.0
  %210 = vmatpush1.msra.mxu0 %v150
  %211 = vmatprep.subr.mxu0 0.0
  %212 = vmatpush1.msra.mxu0 %v151
  %213 = vmatprep.subr.mxu0 0.0
  %214 = vmatpush1.msra.mxu0 %v152
  %215 = vmatprep.subr.mxu0 0.0
  %216 = vmatpush1.msra.mxu0 %v153
  %217 = vmatprep.subr.mxu0 0.0
  %218 = vmatpush1.msra.mxu0 %v154
  %219 = vmatprep.subr.mxu0 0.0
  %220 = vmatpush1.msra.mxu0 %v155
  %221 = vmatprep.subr.mxu0 0.0
  %222 = vmatpush1.msra.mxu0 %v156
  %223 = vmatprep.subr.mxu0 0.0
  %224 = vmatpush1.msra.mxu0 %v157
  %225 = vmatprep.subr.mxu0 0.0
  %226 = vmatpush1.msra.mxu0 %v158
  %227 = vmatprep.subr.mxu0 0.0
  %228 = vmatpush1.msra.mxu0 %v159
  %229 = vmatprep.subr.mxu0 0.0
  %230 = vmatpush1.msra.mxu0 %v160
  %231 = vmatprep.subr.mxu0 0.0
  %232 = vmatpush1.msra.mxu0 %v161
  %233 = vmatprep.mubr.f32.mxu0 %v33
  %234 = vmatmul.mubr.f32.gmra.mrb[0].mxu0 %v32
  %v235 = vpop.f32.mrb[0].mxu0
  %v236 = vadd.f32 %v167, %v235
  %v237 = vpop.f32.mrb[0].mxu0
  %238 = vmatprep.mubr.f32.mxu0 %v35
  %239 = vmatmul.mubr.f32.gmra.mrb[0].mxu0 %v34
  %v240 = vpop.f32.mrb[0].mxu0
  %v241 = vadd.f32 %v167, %v240
  %v242 = vpop.f32.mrb[0].mxu0
  %243 = vmatprep.mubr.f32.mxu0 %v37
  %244 = vmatmul.mubr.f32.gmra.mrb[0].mxu0 %v36
  %v245 = vpop.f32.mrb[0].mxu0
  %v246 = vadd.f32 %v167, %v245
  %v247 = vpop.f32.mrb[0].mxu0
  %248 = vmatprep.mubr.f32.mxu0 %v39
  %249 = vmatmul.mubr.f32.gmra.mrb[0].mxu0 %v38
  %v250 = vpop.f32.mrb[0].mxu0
  %v251 = vadd.f32 %v167, %v250
  %v252 = vpop.f32.mrb[0].mxu0
  %253 = vmatprep.mubr.f32.mxu0 %v41
  %254 = vmatmul.mubr.f32.gmra.mrb[0].mxu0 %v40
  %v255 = vpop.f32.mrb[0].mxu0
  %v256 = vadd.f32 %v167, %v255
  %v257 = vpop.f32.mrb[0].mxu0
  %258 = vmatprep.mubr.f32.mxu0 %v43
  %259 = vmatmul.mubr.f32.gmra.mrb[0].mxu0 %v42
  %v260 = vpop.f32.mrb[0].mxu0
  %v261 = vadd.f32 %v167, %v260
  %v262 = vpop.f32.mrb[0].mxu0
  %263 = vmatprep.mubr.f32.mxu0 %v45
  %264 = vmatmul.mubr.f32.gmra.mrb[0].mxu0 %v44
  %v265 = vpop.f32.mrb[0].mxu0
  %v266 = vadd.f32 %v167, %v265
  %v267 = vpop.f32.mrb[0].mxu0
  %268 = vmatprep.mubr.f32.mxu0 %v47
  %269 = vmatmul.mubr.f32.gmra.mrb[0].mxu0 %v46
  %v270 = vpop.f32.mrb[0].mxu0
  %v271 = vadd.f32 %v167, %v270
  %v272 = vpop.f32.mrb[0].mxu0
  %273 = vmatprep.mubr.f32.mxu0 %v49
  %274 = vmatmul.mubr.f32.gmra.mrb[0].mxu0 %v48
  %v275 = vpop.f32.mrb[0].mxu0
  %v276 = vadd.f32 %v167, %v275
  %v277 = vpop.f32.mrb[0].mxu0
  %278 = vmatprep.mubr.f32.mxu0 %v51
  %279 = vmatmul.mubr.f32.gmra.mrb[0].mxu0 %v50
  %v280 = vpop.f32.mrb[0].mxu0
  %v281 = vadd.f32 %v167, %v280
  %v282 = vpop.f32.mrb[0].mxu0
  %283 = vmatprep.mubr.f32.mxu0 %v53
  %284 = vmatmul.mubr.f32.gmra.mrb[0].mxu0 %v52
  %v285 = vpop.f32.mrb[0].mxu0
  %v286 = vadd.f32 %v167, %v285
  %v287 = vpop.f32.mrb[0].mxu0
  %288 = vmatprep.mubr.f32.mxu0 %v55
  %289 = vmatmul.mubr.f32.gmra.mrb[0].mxu0 %v54
  %v290 = vpop.f32.mrb[0].mxu0
  %v291 = vadd.f32 %v167, %v290
  %v292 = vpop.f32.mrb[0].mxu0
  %293 = vmatprep.mubr.f32.mxu0 %v57
  %294 = vmatmul.mubr.f32.gmra.mrb[0].mxu0 %v56
  %v295 = vpop.f32.mrb[0].mxu0
  %v296 = vadd.f32 %v167, %v295
  %v297 = vpop.f32.mrb[0].mxu0
  %298 = vmatprep.mubr.f32.mxu0 %v59
  %299 = vmatmul.mubr.f32.gmra.mrb[0].mxu0 %v58
  %v300 = vpop.f32.mrb[0].mxu0
  %v301 = vadd.f32 %v167, %v300
  %v302 = vpop.f32.mrb[0].mxu0
  %303 = vmatprep.mubr.f32.mxu0 %v61
  %304 = vmatmul.mubr.f32.gmra.mrb[0].mxu0 %v60
  %v305 = vpop.f32.mrb[0].mxu0
  %v306 = vadd.f32 %v167, %v305
  %v307 = vpop.f32.mrb[0].mxu0
  %308 = vmatprep.mubr.f32.mxu0 %v63
  %309 = vmatmul.mubr.f32.gmra.mrb[0].mxu0 %v62
  %v310 = vpop.f32.mrb[0].mxu0
  %v311 = vadd.f32 %v167, %v310
  %v312 = vpop.f32.mrb[0].mxu0
  %313 = vmatprep.mubr.f32.mxu0 %v65
  %314 = vmatmul.mubr.f32.gmra.mrb[0].mxu0 %v64
  %v315 = vpop.f32.mrb[0].mxu0
  %v316 = vadd.f32 %v167, %v315
  %v317 = vpop.f32.mrb[0].mxu0
  %318 = vmatprep.mubr.f32.mxu0 %v67
  %319 = vmatmul.mubr.f32.gmra.mrb[0].mxu0 %v66
  %v320 = vpop.f32.mrb[0].mxu0
  %v321 = vadd.f32 %v167, %v320
  %v322 = vpop.f32.mrb[0].mxu0
  %323 = vmatprep.mubr.f32.mxu0 %v69
  %324 = vmatmul.mubr.f32.gmra.mrb[0].mxu0 %v68
  %v325 = vpop.f32.mrb[0].mxu0
  %v326 = vadd.f32 %v167, %v325
  %v327 = vpop.f32.mrb[0].mxu0
  %328 = vmatprep.mubr.f32.mxu0 %v71
  %329 = vmatmul.mubr.f32.gmra.mrb[0].mxu0 %v70
  %v330 = vpop.f32.mrb[0].mxu0
  %v331 = vadd.f32 %v167, %v330
  %v332 = vpop.f32.mrb[0].mxu0
  %333 = vmatprep.mubr.f32.mxu0 %v73
  %334 = vmatmul.mubr.f32.gmra.mrb[0].mxu0 %v72
  %v335 = vpop.f32.mrb[0].mxu0
  %v336 = vadd.f32 %v167, %v335
  %v337 = vpop.f32.mrb[0].mxu0
  %338 = vmatprep.mubr.f32.mxu0 %v75
  %339 = vmatmul.mubr.f32.gmra.mrb[0].mxu0 %v74
  %v340 = vpop.f32.mrb[0].mxu0
  %v341 = vadd.f32 %v167, %v340
  %v342 = vpop.f32.mrb[0].mxu0
  %343 = vmatprep.mubr.f32.mxu0 %v77
  %344 = vmatmul.mubr.f32.gmra.mrb[0].mxu0 %v76
  %v345 = vpop.f32.mrb[0].mxu0
  %v346 = vadd.f32 %v167, %v345
  %v347 = vpop.f32.mrb[0].mxu0
  %348 = vmatprep.mubr.f32.mxu0 %v79
  %349 = vmatmul.mubr.f32.gmra.mrb[0].mxu0 %v78
  %v350 = vpop.f32.mrb[0].mxu0
  %v351 = vadd.f32 %v167, %v350
  %v352 = vpop.f32.mrb[0].mxu0
  %353 = vmatprep.mubr.f32.mxu0 %v81
  %354 = vmatmul.mubr.f32.gmra.mrb[0].mxu0 %v80
  %v355 = vpop.f32.mrb[0].mxu0
  %v356 = vadd.f32 %v167, %v355
  %v357 = vpop.f32.mrb[0].mxu0
  %358 = vmatprep.mubr.f32.mxu0 %v83
  %359 = vmatmul.mubr.f32.gmra.mrb[0].mxu0 %v82
  %v360 = vpop.f32.mrb[0].mxu0
  %v361 = vadd.f32 %v167, %v360
  %v362 = vpop.f32.mrb[0].mxu0
  %363 = vmatprep.mubr.f32.mxu0 %v85
  %364 = vmatmul.mubr.f32.gmra.mrb[0].mxu0 %v84
  %v365 = vpop.f32.mrb[0].mxu0
  %v366 = vadd.f32 %v167, %v365
  %v367 = vpop.f32.mrb[0].mxu0
  %368 = vmatprep.mubr.f32.mxu0 %v87
  %369 = vmatmul.mubr.f32.gmra.mrb[0].mxu0 %v86
  %v370 = vpop.f32.mrb[0].mxu0
  %v371 = vadd.f32 %v167, %v370
  %v372 = vpop.f32.mrb[0].mxu0
  %373 = vmatprep.mubr.f32.mxu0 %v89
  %374 = vmatmul.mubr.f32.gmra.mrb[0].mxu0 %v88
  %v375 = vpop.f32.mrb[0].mxu0
  %v376 = vadd.f32 %v167, %v375
  %v377 = vpop.f32.mrb[0].mxu0
  %378 = vmatprep.mubr.f32.mxu0 %v91
  %379 = vmatmul.mubr.f32.gmra.mrb[0].mxu0 %v90
  %v380 = vpop.f32.mrb[0].mxu0
  %v381 = vadd.f32 %v167, %v380
  %v382 = vpop.f32.mrb[0].mxu0
  %383 = vmatprep.mubr.f32.mxu0 %v93
  %384 = vmatmul.mubr.f32.gmra.mrb[0].mxu0 %v92
  %v385 = vpop.f32.mrb[0].mxu0
  %v386 = vadd.f32 %v167, %v385
  %v387 = vpop.f32.mrb[0].mxu0
  %388 = vmatprep.mubr.f32.mxu0 %v95
  %389 = vmatmul.mubr.f32.gmra.mrb[0].mxu0 %v94
  %v390 = vpop.f32.mrb[0].mxu0
  %v391 = vadd.f32 %v167, %v390
  %v392 = vpop.f32.mrb[0].mxu0
  %393 = vmatprep.mubr.f32.mxu0 %v97
  %394 = vmatmul.mubr.f32.gmra.mrb[0].mxu0 %v96
  %v395 = vpop.f32.mrb[0].mxu0
  %v396 = vadd.f32 %v167, %v395
  %v397 = vpop.f32.mrb[0].mxu0
  %398 = vmatprep.mubr.f32.mxu0 %v99
  %399 = vmatmul.mubr.f32.gmra.mrb[0].mxu0 %v98
  %v400 = vpop.f32.mrb[0].mxu0
  %v401 = vadd.f32 %v167, %v400
  %v402 = vpop.f32.mrb[0].mxu0
  %403 = vmatprep.mubr.f32.mxu0 %v101
  %404 = vmatmul.mubr.f32.gmra.mrb[0].mxu0 %v100
  %v405 = vpop.f32.mrb[0].mxu0
  %v406 = vadd.f32 %v167, %v405
  %v407 = vpop.f32.mrb[0].mxu0
  %408 = vmatprep.mubr.f32.mxu0 %v103
  %409 = vmatmul.mubr.f32.gmra.mrb[0].mxu0 %v102
  %v410 = vpop.f32.mrb[0].mxu0
  %v411 = vadd.f32 %v167, %v410
  %v412 = vpop.f32.mrb[0].mxu0
  %413 = vmatprep.mubr.f32.mxu0 %v105
  %414 = vmatmul.mubr.f32.gmra.mrb[0].mxu0 %v104
  %v415 = vpop.f32.mrb[0].mxu0
  %v416 = vadd.f32 %v167, %v415
  %v417 = vpop.f32.mrb[0].mxu0
  %418 = vmatprep.mubr.f32.mxu0 %v107
  %419 = vmatmul.mubr.f32.gmra.mrb[0].mxu0 %v106
  %v420 = vpop.f32.mrb[0].mxu0
  %v421 = vadd.f32 %v167, %v420
  %v422 = vpop.f32.mrb[0].mxu0
  %423 = vmatprep.mubr.f32.mxu0 %v109
  %424 = vmatmul.mubr.f32.gmra.mrb[0].mxu0 %v108
  %v425 = vpop.f32.mrb[0].mxu0
  %v426 = vadd.f32 %v167, %v425
  %v427 = vpop.f32.mrb[0].mxu0
  %428 = vmatprep.mubr.f32.mxu0 %v111
  %429 = vmatmul.mubr.f32.gmra.mrb[0].mxu0 %v110
  %v430 = vpop.f32.mrb[0].mxu0
  %v431 = vadd.f32 %v167, %v430
  %v432 = vpop.f32.mrb[0].mxu0
  %433 = vmatprep.mubr.f32.mxu0 %v113
  %434 = vmatmul.mubr.f32.gmra.mrb[0].mxu0 %v112
  %v435 = vpop.f32.mrb[0].mxu0
  %v436 = vadd.f32 %v167, %v435
  %v437 = vpop.f32.mrb[0].mxu0
  %438 = vmatprep.mubr.f32.mxu0 %v115
  %439 = vmatmul.mubr.f32.gmra.mrb[0].mxu0 %v114
  %v440 = vpop.f32.mrb[0].mxu0
  %v441 = vadd.f32 %v167, %v440
  %v442 = vpop.f32.mrb[0].mxu0
  %443 = vmatprep.mubr.f32.mxu0 %v117
  %444 = vmatmul.mubr.f32.gmra.mrb[0].mxu0 %v116
  %v445 = vpop.f32.mrb[0].mxu0
  %v446 = vadd.f32 %v167, %v445
  %v447 = vpop.f32.mrb[0].mxu0
  %448 = vmatprep.mubr.f32.mxu0 %v119
  %449 = vmatmul.mubr.f32.gmra.mrb[0].mxu0 %v118
  %v450 = vpop.f32.mrb[0].mxu0
  %v451 = vadd.f32 %v167, %v450
  %v452 = vpop.f32.mrb[0].mxu0
  %453 = vmatprep.mubr.f32.mxu0 %v121
  %454 = vmatmul.mubr.f32.gmra.mrb[0].mxu0 %v120
  %v455 = vpop.f32.mrb[0].mxu0
  %v456 = vadd.f32 %v167, %v455
  %v457 = vpop.f32.mrb[0].mxu0
  %458 = vmatprep.mubr.f32.mxu0 %v123
  %459 = vmatmul.mubr.f32.gmra.mrb[0].mxu0 %v122
  %v460 = vpop.f32.mrb[0].mxu0
  %v461 = vadd.f32 %v167, %v460
  %v462 = vpop.f32.mrb[0].mxu0
  %463 = vmatprep.mubr.f32.mxu0 %v125
  %464 = vmatmul.mubr.f32.gmra.mrb[0].mxu0 %v124
  %v465 = vpop.f32.mrb[0].mxu0
  %v466 = vadd.f32 %v167, %v465
  %v467 = vpop.f32.mrb[0].mxu0
  %468 = vmatprep.mubr.f32.mxu0 %v127
  %469 = vmatmul.mubr.f32.gmra.mrb[0].mxu0 %v126
  %v470 = vpop.f32.mrb[0].mxu0
  %v471 = vadd.f32 %v167, %v470
  %v472 = vpop.f32.mrb[0].mxu0
  %473 = vmatprep.mubr.f32.mxu0 %v129
  %474 = vmatmul.mubr.f32.gmra.mrb[0].mxu0 %v128
  %v475 = vpop.f32.mrb[0].mxu0
  %v476 = vadd.f32 %v167, %v475
  %v477 = vpop.f32.mrb[0].mxu0
  %478 = vdwg.mxu0
  %v479 = vmax.f32 %v236, 0.0
  %v480 = vmax.f32 %v241, 0.0
  %v481 = vmax.f32 %v246, 0.0
  %v482 = vmax.f32 %v251, 0.0
  %v483 = vmax.f32 %v256, 0.0
  %v484 = vmax.f32 %v261, 0.0
  %v485 = vmax.f32 %v266, 0.0
  %v486 = vmax.f32 %v271, 0.0
  %v487 = vmax.f32 %v276, 0.0
  %v488 = vmax.f32 %v281, 0.0
  %v489 = vmax.f32 %v286, 0.0
  %v490 = vmax.f32 %v291, 0.0
  %v491 = vmax.f32 %v296, 0.0
  %v492 = vmax.f32 %v301, 0.0
  %v493 = vmax.f32 %v306, 0.0
  %v494 = vmax.f32 %v311, 0.0
  %v495 = vmax.f32 %v316, 0.0
  %v496 = vmax.f32 %v321, 0.0
  %v497 = vmax.f32 %v326, 0.0
  %v498 = vmax.f32 %v331, 0.0
  %v499 = vmax.f32 %v336, 0.0
  %v500 = vmax.f32 %v341, 0.0
  %v501 = vmax.f32 %v346, 0.0
  %v502 = vmax.f32 %v351, 0.0
  %v503 = vmax.f32 %v356, 0.0
  %v504 = vmax.f32 %v361, 0.0
  %v505 = vmax.f32 %v366, 0.0
  %v506 = vmax.f32 %v371, 0.0
  %v507 = vmax.f32 %v376, 0.0
  %v508 = vmax.f32 %v381, 0.0
  %v509 = vmax.f32 %v386, 0.0
  %v510 = vmax.f32 %v391, 0.0
  %v511 = vmax.f32 %v396, 0.0
  %v512 = vmax.f32 %v401, 0.0
  %v513 = vmax.f32 %v406, 0.0
  %v514 = vmax.f32 %v411, 0.0
  %v515 = vmax.f32 %v416, 0.0
  %v516 = vmax.f32 %v421, 0.0
  %v517 = vmax.f32 %v426, 0.0
  %v518 = vmax.f32 %v431, 0.0
  %v519 = vmax.f32 %v436, 0.0
  %v520 = vmax.f32 %v441, 0.0
  %v521 = vmax.f32 %v446, 0.0
  %v522 = vmax.f32 %v451, 0.0
  %v523 = vmax.f32 %v456, 0.0
  %v524 = vmax.f32 %v461, 0.0
  %v525 = vmax.f32 %v466, 0.0
  %v526 = vmax.f32 %v471, 0.0
  %v527 = vmax.f32 %v476, 0.0
  %528 = vst [vmem:[#allocation2] sm:$0xff] %v479
  %529 = vst [vmem:[#allocation2 + $0x8] sm:$0xff] %v480
  %530 = vst [vmem:[#allocation2 + $0x10] sm:$0xff] %v481
  %531 = vst [vmem:[#allocation2 + $0x18] sm:$0xff] %v482
  %532 = vst [vmem:[#allocation2 + $0x20] sm:$0xff] %v483
  %533 = vst [vmem:[#allocation2 + $0x28] sm:$0xff] %v484
  %534 = vst [vmem:[#allocation2 + $0x30] sm:$0xff] %v485
  %535 = vst [vmem:[#allocation2 + $0x38] sm:$0xff] %v486
  %536 = vst [vmem:[#allocation2 + $0x40] sm:$0xff] %v487
  %537 = vst [vmem:[#allocation2 + $0x48] sm:$0xff] %v488
  %538 = vst [vmem:[#allocation2 + $0x50] sm:$0xff] %v489
  %539 = vst [vmem:[#allocation2 + $0x58] sm:$0xff] %v490
  %540 = vst [vmem:[#allocation2 + $0x60] sm:$0xff] %v491
  %541 = vst [vmem:[#allocation2 + $0x68] sm:$0xff] %v492
  %542 = vst [vmem:[#allocation2 + $0x70] sm:$0xff] %v493
  %543 = vst [vmem:[#allocation2 + $0x78] sm:$0xff] %v494
  %544 = vst [vmem:[#allocation2 + $0x80] sm:$0xff] %v495
  %545 = vst [vmem:[#allocation2 + $0x88] sm:$0xff] %v496
  %546 = vst [vmem:[#allocation2 + $0x90] sm:$0xff] %v497
  %547 = vst [vmem:[#allocation2 + $0x98] sm:$0xff] %v498
  %548 = vst [vmem:[#allocation2 + $0xa0] sm:$0xff] %v499
  %549 = vst [vmem:[#allocation2 + $0xa8] sm:$0xff] %v500
  %550 = vst [vmem:[#allocation2 + $0xb0] sm:$0xff] %v501
  %551 = vst [vmem:[#allocation2 + $0xb8] sm:$0xff] %v502
  %552 = vst [vmem:[#allocation2 + $0xc0] sm:$0xff] %v503
  %553 = vst [vmem:[#allocation2 + $0xc8] sm:$0xff] %v504
  %554 = vst [vmem:[#allocation2 + $0xd0] sm:$0xff] %v505
  %555 = vst [vmem:[#allocation2 + $0xd8] sm:$0xff] %v506
  %556 = vst [vmem:[#allocation2 + $0xe0] sm:$0xff] %v507
  %557 = vst [vmem:[#allocation2 + $0xe8] sm:$0xff] %v508
  %558 = vst [vmem:[#allocation2 + $0xf0] sm:$0xff] %v509
  %559 = vst [vmem:[#allocation2 + $0xf8] sm:$0xff] %v510
  %560 = vst [vmem:[#allocation2 + $0x100] sm:$0xff] %v511
  %561 = vst [vmem:[#allocation2 + $0x108] sm:$0xff] %v512
  %562 = vst [vmem:[#allocation2 + $0x110] sm:$0xff] %v513
  %563 = vst [vmem:[#allocation2 + $0x118] sm:$0xff] %v514
  %564 = vst [vmem:[#allocation2 + $0x120] sm:$0xff] %v515
  %565 = vst [vmem:[#allocation2 + $0x128] sm:$0xff] %v516
  %566 = vst [vmem:[#allocation2 + $0x130] sm:$0xff] %v517
  %567 = vst [vmem:[#allocation2 + $0x138] sm:$0xff] %v518
  %568 = vst [vmem:[#allocation2 + $0x140] sm:$0xff] %v519
  %569 = vst [vmem:[#allocation2 + $0x148] sm:$0xff] %v520
  %570 = vst [vmem:[#allocation2 + $0x150] sm:$0xff] %v521
  %571 = vst [vmem:[#allocation2 + $0x158] sm:$0xff] %v522
  %572 = vst [vmem:[#allocation2 + $0x160] sm:$0xff] %v523
  %573 = vst [vmem:[#allocation2 + $0x168] sm:$0xff] %v524
  %574 = vst [vmem:[#allocation2 + $0x170] sm:$0xff] %v525
  %575 = vst [vmem:[#allocation2 + $0x178] sm:$0xff] %v526
  %576 = vst [vmem:[#allocation2 + $0x180] sm:$0xff] %v527
  %v577 = vld [vmem:[%s4] sm:$0x1]
  %v579 = vlaneseq
  %v580 = vshrl.u32 %v579, 7
  %v581 = vsub.s32 0, %v580
  %v582 = vrot.slane %v577, %v581
  %v584 = vadd.f32 %v582, 0.0
  %v585 = vld [vmem:[#allocation2] sm:$0xff]
  %v586 = vld [vmem:[#allocation2 + $0x10] sm:$0xff]
  %v587 = vld [vmem:[#allocation2 + $0x70] sm:$0xff]
  %v588 = vld [vmem:[#allocation2 + $0x80] sm:$0xff]
  %v589 = vld [vmem:[%s3] sm:$0xff]
  %v590 = vld [vmem:[%s3 + $0x8] sm:$0xff]
  %v591 = vld [vmem:[%s3 + $0x10] sm:$0xff]
  %v592 = vld [vmem:[%s3 + $0x18] sm:$0xff]
  %v593 = vld [vmem:[%s3 + $0x20] sm:$0xff]
  %v594 = vld [vmem:[%s3 + $0x28] sm:$0xff]
  %v595 = vld [vmem:[%s3 + $0x30] sm:$0xff]
  %v596 = vld [vmem:[%s3 + $0x38] sm:$0xff]
  %v597 = vld [vmem:[%s3 + $0x40] sm:$0xff]
  %v598 = vld [vmem:[%s3 + $0x48] sm:$0xff]
  %v599 = vld [vmem:[%s3 + $0x50] sm:$0xff]
  %v600 = vld [vmem:[%s3 + $0x58] sm:$0xff]
  %v601 = vld [vmem:[%s3 + $0x60] sm:$0xff]
  %v602 = vld [vmem:[%s3 + $0x68] sm:$0xff]
  %v603 = vld [vmem:[%s3 + $0x70] sm:$0xff]
  %v604 = vld [vmem:[%s3 + $0x78] sm:$0xff]
  %605 = vmatprep.subr.mxu0 0.0
  %606 = vmatpush1.msra.mxu0 %v589
  %607 = vmatprep.subr.mxu0 0.0
  %608 = vmatpush1.msra.mxu0 %v590
  %609 = vmatprep.subr.mxu0 0.0
  %610 = vmatpush1.msra.mxu0 %v591
  %611 = vmatprep.subr.mxu0 0.0
  %612 = vmatpush1.msra.mxu0 %v592
  %613 = vmatprep.subr.mxu0 0.0
  %614 = vmatpush1.msra.mxu0 %v593
  %615 = vmatprep.subr.mxu0 0.0
  %616 = vmatpush1.msra.mxu0 %v594
  %617 = vmatprep.subr.mxu0 0.0
  %618 = vmatpush1.msra.mxu0 %v595
  %619 = vmatprep.subr.mxu0 0.0
  %620 = vmatpush1.msra.mxu0 %v596
  %621 = vmatprep.subr.mxu0 0.0
  %622 = vmatpush1.msra.mxu0 %v597
  %623 = vmatprep.subr.mxu0 0.0
  %624 = vmatpush1.msra.mxu0 %v598
  %625 = vmatprep.subr.mxu0 0.0
  %626 = vmatpush1.msra.mxu0 %v599
  %627 = vmatprep.subr.mxu0 0.0
  %628 = vmatpush1.msra.mxu0 %v600
  %629 = vmatprep.subr.mxu0 0.0
  %630 = vmatpush1.msra.mxu0 %v601
  %631 = vmatprep.subr.mxu0 0.0
  %632 = vmatpush1.msra.mxu0 %v602
  %633 = vmatprep.subr.mxu0 0.0
  %634 = vmatpush1.msra.mxu0 %v603
  %635 = vmatprep.subr.mxu0 0.0
  %636 = vmatpush1.msra.mxu0 %v604
  %637 = vmatprep.subr.mxu0 0.0
  %638 = vmatpush1.msra.mxu0 0.0
  %639 = vmatprep.subr.mxu0 0.0
  %640 = vmatpush1.msra.mxu0 0.0
  %641 = vmatprep.subr.mxu0 0.0
  %642 = vmatpush1.msra.mxu0 0.0
  %643 = vmatprep.subr.mxu0 0.0
  %644 = vmatpush1.msra.mxu0 0.0
  %645 = vmatprep.subr.mxu0 0.0
  %646 = vmatpush1.msra.mxu0 0.0
  %647 = vmatprep.subr.mxu0 0.0
  %648 = vmatpush1.msra.mxu0 0.0
  %649 = vmatprep.subr.mxu0 0.0
  %650 = vmatpush1.msra.mxu0 0.0
  %651 = vmatprep.subr.mxu0 0.0
  %652 = vmatpush1.msra.mxu0 0.0
  %653 = vmatprep.subr.mxu0 0.0
  %654 = vmatpush1.msra.mxu0 0.0
  %655 = vmatprep.subr.mxu0 0.0
  %656 = vmatpush1.msra.mxu0 0.0
  %657 = vmatprep.subr.mxu0 0.0
  %658 = vmatpush1.msra.mxu0 0.0
  %659 = vmatprep.subr.mxu0 0.0
  %660 = vmatpush1.msra.mxu0 0.0
  %661 = vmatprep.subr.mxu0 0.0
  %662 = vmatpush1.msra.mxu0 0.0
  %663 = vmatprep.subr.mxu0 0.0
  %664 = vmatpush1.msra.mxu0 0.0
  %665 = vmatprep.subr.mxu0 0.0
  %666 = vmatpush1.msra.mxu0 0.0
  %667 = vmatprep.subr.mxu0 0.0
  %668 = vmatpush1.msra.mxu0 0.0
  %669 = vmatprep.mubr.f32.mxu0 0.0
  %670 = vmatmul.mubr.f32.gmra.mrb[0].mxu0 %v585
  %v671 = vpop.f32.mrb[0].mxu0
  %v672 = vadd.f32 0.0, %v671
  %v673 = vpop.f32.mrb[0].mxu0
  %674 = vmatprep.mubr.f32.mxu0 0.0
  %675 = vmatmul.mubr.f32.gmra.mrb[0].mxu0 %v586
  %v676 = vpop.f32.mrb[0].mxu0
  %v677 = vadd.f32 0.0, %v676
  %v678 = vpop.f32.mrb[0].mxu0
  %679 = vmatprep.mubr.f32.mxu0 0.0
  %680 = vmatmul.mubr.f32.gmra.mrb[0].mxu0 %v587
  %v681 = vpop.f32.mrb[0].mxu0
  %v682 = vadd.f32 0.0, %v681
  %v683 = vpop.f32.mrb[0].mxu0
  %684 = vmatprep.mubr.f32.mxu0 0.0
  %685 = vmatmul.mubr.f32.gmra.mrb[0].mxu0 %v588
  %v686 = vpop.f32.mrb[0].mxu0
  %v687 = vadd.f32 0.0, %v686
  %v688 = vpop.f32.mrb[0].mxu0
  %689 = vdwg.mxu0
  %v690 = vadd.f32 %v584, %v672
  %v691 = vadd.f32 %v584, %v677
  %v692 = vadd.f32 %v584, %v682
  %v693 = vadd.f32 %v584, %v687
  %v694 = vld [vmem:[#allocation2 + $0x8] sm:$0xff]
  %v695 = vld [vmem:[#allocation2 + $0x18] sm:$0xff]
  %v696 = vld [vmem:[#allocation2 + $0x78] sm:$0xff]
  %v697 = vld [vmem:[#allocation2 + $0x88] sm:$0xff]
  %s698 = scalar_lea.vmem %s3, 128
  %v699 = vld [vmem:[%s698] sm:$0xff]
  %v700 = vld [vmem:[%s698 + $0x8] sm:$0xff]
  %v701 = vld [vmem:[%s698 + $0x10] sm:$0xff]
  %v702 = vld [vmem:[%s698 + $0x18] sm:$0xff]
  %v703 = vld [vmem:[%s698 + $0x20] sm:$0xff]
  %v704 = vld [vmem:[%s698 + $0x28] sm:$0xff]
  %v705 = vld [vmem:[%s698 + $0x30] sm:$0xff]
  %v706 = vld [vmem:[%s698 + $0x38] sm:$0xff]
  %v707 = vld [vmem:[%s698 + $0x40] sm:$0xff]
  %v708 = vld [vmem:[%s698 + $0x48] sm:$0xff]
  %v709 = vld [vmem:[%s698 + $0x50] sm:$0xff]
  %v710 = vld [vmem:[%s698 + $0x58] sm:$0xff]
  %v711 = vld [vmem:[%s698 + $0x60] sm:$0xff]
  %v712 = vld [vmem:[%s698 + $0x68] sm:$0xff]
  %v713 = vld [vmem:[%s698 + $0x70] sm:$0xff]
  %v714 = vld [vmem:[%s698 + $0x78] sm:$0xff]
  %715 = vmatprep.subr.mxu0 0.0
  %716 = vmatpush1.msra.mxu0 %v699
  %717 = vmatprep.subr.mxu0 0.0
  %718 = vmatpush1.msra.mxu0 %v700
  %719 = vmatprep.subr.mxu0 0.0
  %720 = vmatpush1.msra.mxu0 %v701
  %721 = vmatprep.subr.mxu0 0.0
  %722 = vmatpush1.msra.mxu0 %v702
  %723 = vmatprep.subr.mxu0 0.0
  %724 = vmatpush1.msra.mxu0 %v703
  %725 = vmatprep.subr.mxu0 0.0
  %726 = vmatpush1.msra.mxu0 %v704
  %727 = vmatprep.subr.mxu0 0.0
  %728 = vmatpush1.msra.mxu0 %v705
  %729 = vmatprep.subr.mxu0 0.0
  %730 = vmatpush1.msra.mxu0 %v706
  %731 = vmatprep.subr.mxu0 0.0
  %732 = vmatpush1.msra.mxu0 %v707
  %733 = vmatprep.subr.mxu0 0.0
  %734 = vmatpush1.msra.mxu0 %v708
  %735 = vmatprep.subr.mxu0 0.0
  %736 = vmatpush1.msra.mxu0 %v709
  %737 = vmatprep.subr.mxu0 0.0
  %738 = vmatpush1.msra.mxu0 %v710
  %739 = vmatprep.subr.mxu0 0.0
  %740 = vmatpush1.msra.mxu0 %v711
  %741 = vmatprep.subr.mxu0 0.0
  %742 = vmatpush1.msra.mxu0 %v712
  %743 = vmatprep.subr.mxu0 0.0
  %744 = vmatpush1.msra.mxu0 %v713
  %745 = vmatprep.subr.mxu0 0.0
  %746 = vmatpush1.msra.mxu0 %v714
  %747 = vmatprep.subr.mxu0 0.0
  %748 = vmatpush1.msra.mxu0 0.0
  %749 = vmatprep.subr.mxu0 0.0
  %750 = vmatpush1.msra.mxu0 0.0
  %751 = vmatprep.subr.mxu0 0.0
  %752 = vmatpush1.msra.mxu0 0.0
  %753 = vmatprep.subr.mxu0 0.0
  %754 = vmatpush1.msra.mxu0 0.0
  %755 = vmatprep.subr.mxu0 0.0
  %756 = vmatpush1.msra.mxu0 0.0
  %757 = vmatprep.subr.mxu0 0.0
  %758 = vmatpush1.msra.mxu0 0.0
  %759 = vmatprep.subr.mxu0 0.0
  %760 = vmatpush1.msra.mxu0 0.0
  %761 = vmatprep.subr.mxu0 0.0
  %762 = vmatpush1.msra.mxu0 0.0
  %763 = vmatprep.subr.mxu0 0.0
  %764 = vmatpush1.msra.mxu0 0.0
  %765 = vmatprep.subr.mxu0 0.0
  %766 = vmatpush1.msra.mxu0 0.0
  %767 = vmatprep.subr.mxu0 0.0
  %768 = vmatpush1.msra.mxu0 0.0
  %769 = vmatprep.subr.mxu0 0.0
  %770 = vmatpush1.msra.mxu0 0.0
  %771 = vmatprep.subr.mxu0 0.0
  %772 = vmatpush1.msra.mxu0 0.0
  %773 = vmatprep.subr.mxu0 0.0
  %774 = vmatpush1.msra.mxu0 0.0
  %775 = vmatprep.subr.mxu0 0.0
  %776 = vmatpush1.msra.mxu0 0.0
  %777 = vmatprep.subr.mxu0 0.0
  %778 = vmatpush1.msra.mxu0 0.0
  %779 = vmatprep.mubr.f32.mxu0 0.0
  %780 = vmatmul.mubr.f32.gmra.mrb[0].mxu0 %v694
  %v781 = vpop.f32.mrb[0].mxu0
  %v782 = vadd.f32 0.0, %v781
  %v783 = vpop.f32.mrb[0].mxu0
  %784 = vmatprep.mubr.f32.mxu0 0.0
  %785 = vmatmul.mubr.f32.gmra.mrb[0].mxu0 %v695
  %v786 = vpop.f32.mrb[0].mxu0
  %v787 = vadd.f32 0.0, %v786
  %v788 = vpop.f32.mrb[0].mxu0
  %789 = vmatprep.mubr.f32.mxu0 0.0
  %790 = vmatmul.mubr.f32.gmra.mrb[0].mxu0 %v696
  %v791 = vpop.f32.mrb[0].mxu0
  %v792 = vadd.f32 0.0, %v791
  %v793 = vpop.f32.mrb[0].mxu0
  %794 = vmatprep.mubr.f32.mxu0 0.0
  %795 = vmatmul.mubr.f32.gmra.mrb[0].mxu0 %v697
  %v796 = vpop.f32.mrb[0].mxu0
  %v797 = vadd.f32 0.0, %v796
  %v798 = vpop.f32.mrb[0].mxu0
  %799 = vdwg.mxu0
  %v800 = vadd.f32 %v690, %v782
  %v801 = vadd.f32 %v691, %v787
  %v802 = vadd.f32 %v692, %v792
  %v803 = vadd.f32 %v693, %v797
  %v804 = vld [vmem:[#allocation2 + $0x20] sm:$0xff]
  %v805 = vld [vmem:[#allocation2 + $0x90] sm:$0xff]
  %s806 = scalar_lea.vmem %s3, 256
  %v807 = vld [vmem:[%s806] sm:$0xff]
  %v808 = vld [vmem:[%s806 + $0x8] sm:$0xff]
  %v809 = vld [vmem:[%s806 + $0x10] sm:$0xff]
  %v810 = vld [vmem:[%s806 + $0x18] sm:$0xff]
  %v811 = vld [vmem:[%s806 + $0x20] sm:$0xff]
  %v812 = vld [vmem:[%s806 + $0x28] sm:$0xff]
  %v813 = vld [vmem:[%s806 + $0x30] sm:$0xff]
  %v814 = vld [vmem:[%s806 + $0x38] sm:$0xff]
  %v815 = vld [vmem:[%s806 + $0x40] sm:$0xff]
  %v816 = vld [vmem:[%s806 + $0x48] sm:$0xff]
  %v817 = vld [vmem:[%s806 + $0x50] sm:$0xff]
  %v818 = vld [vmem:[%s806 + $0x58] sm:$0xff]
  %v819 = vld [vmem:[%s806 + $0x60] sm:$0xff]
  %v820 = vld [vmem:[%s806 + $0x68] sm:$0xff]
  %v821 = vld [vmem:[%s806 + $0x70] sm:$0xff]
  %v822 = vld [vmem:[%s806 + $0x78] sm:$0xff]
  %823 = vmatprep.subr.mxu0 0.0
  %824 = vmatpush1.msra.mxu0 %v807
  %825 = vmatprep.subr.mxu0 0.0
  %826 = vmatpush1.msra.mxu0 %v808
  %827 = vmatprep.subr.mxu0 0.0
  %828 = vmatpush1.msra.mxu0 %v809
  %829 = vmatprep.subr.mxu0 0.0
  %830 = vmatpush1.msra.mxu0 %v810
  %831 = vmatprep.subr.mxu0 0.0
  %832 = vmatpush1.msra.mxu0 %v811
  %833 = vmatprep.subr.mxu0 0.0
  %834 = vmatpush1.msra.mxu0 %v812
  %835 = vmatprep.subr.mxu0 0.0
  %836 = vmatpush1.msra.mxu0 %v813
  %837 = vmatprep.subr.mxu0 0.0
  %838 = vmatpush1.msra.mxu0 %v814
  %839 = vmatprep.subr.mxu0 0.0
  %840 = vmatpush1.msra.mxu0 %v815
  %841 = vmatprep.subr.mxu0 0.0
  %842 = vmatpush1.msra.mxu0 %v816
  %843 = vmatprep.subr.mxu0 0.0
  %844 = vmatpush1.msra.mxu0 %v817
  %845 = vmatprep.subr.mxu0 0.0
  %846 = vmatpush1.msra.mxu0 %v818
  %847 = vmatprep.subr.mxu0 0.0
  %848 = vmatpush1.msra.mxu0 %v819
  %849 = vmatprep.subr.mxu0 0.0
  %850 = vmatpush1.msra.mxu0 %v820
  %851 = vmatprep.subr.mxu0 0.0
  %852 = vmatpush1.msra.mxu0 %v821
  %853 = vmatprep.subr.mxu0 0.0
  %854 = vmatpush1.msra.mxu0 %v822
  %855 = vmatprep.subr.mxu0 0.0
  %856 = vmatpush1.msra.mxu0 0.0
  %857 = vmatprep.subr.mxu0 0.0
  %858 = vmatpush1.msra.mxu0 0.0
  %859 = vmatprep.subr.mxu0 0.0
  %860 = vmatpush1.msra.mxu0 0.0
  %861 = vmatprep.subr.mxu0 0.0
  %862 = vmatpush1.msra.mxu0 0.0
  %863 = vmatprep.subr.mxu0 0.0
  %864 = vmatpush1.msra.mxu0 0.0
  %865 = vmatprep.subr.mxu0 0.0
  %866 = vmatpush1.msra.mxu0 0.0
  %867 = vmatprep.subr.mxu0 0.0
  %868 = vmatpush1.msra.mxu0 0.0
  %869 = vmatprep.subr.mxu0 0.0
  %870 = vmatpush1.msra.mxu0 0.0
  %871 = vmatprep.subr.mxu0 0.0
  %872 = vmatpush1.msra.mxu0 0.0
  %873 = vmatprep.subr.mxu0 0.0
  %874 = vmatpush1.msra.mxu0 0.0
  %875 = vmatprep.subr.mxu0 0.0
  %876 = vmatpush1.msra.mxu0 0.0
  %877 = vmatprep.subr.mxu0 0.0
  %878 = vmatpush1.msra.mxu0 0.0
  %879 = vmatprep.subr.mxu0 0.0
  %880 = vmatpush1.msra.mxu0 0.0
  %881 = vmatprep.subr.mxu0 0.0
  %882 = vmatpush1.msra.mxu0 0.0
  %883 = vmatprep.subr.mxu0 0.0
  %884 = vmatpush1.msra.mxu0 0.0
  %885 = vmatprep.subr.mxu0 0.0
  %886 = vmatpush1.msra.mxu0 0.0
  %887 = vmatprep.mubr.f32.mxu0 0.0
  %888 = vmatmul.mubr.f32.gmra.mrb[0].mxu0 %v586
  %v889 = vpop.f32.mrb[0].mxu0
  %v890 = vadd.f32 0.0, %v889
  %v891 = vpop.f32.mrb[0].mxu0
  %892 = vmatprep.mubr.f32.mxu0 0.0
  %893 = vmatmul.mubr.f32.gmra.mrb[0].mxu0 %v804
  %v894 = vpop.f32.mrb[0].mxu0
  %v895 = vadd.f32 0.0, %v894
  %v896 = vpop.f32.mrb[0].mxu0
  %897 = vmatprep.mubr.f32.mxu0 0.0
  %898 = vmatmul.mubr.f32.gmra.mrb[0].mxu0 %v588
  %v899 = vpop.f32.mrb[0].mxu0
  %v900 = vadd.f32 0.0, %v899
  %v901 = vpop.f32.mrb[0].mxu0
  %902 = vmatprep.mubr.f32.mxu0 0.0
  %903 = vmatmul.mubr.f32.gmra.mrb[0].mxu0 %v805
  %v904 = vpop.f32.mrb[0].mxu0
  %v905 = vadd.f32 0.0, %v904
  %v906 = vpop.f32.mrb[0].mxu0
  %907 = vdwg.mxu0
  %v908 = vadd.f32 %v800, %v890
  %v909 = vadd.f32 %v801, %v895
  %v910 = vadd.f32 %v802, %v900
  %v911 = vadd.f32 %v803, %v905
  %v912 = vld [vmem:[#allocation2 + $0x28] sm:$0xff]
  %v913 = vld [vmem:[#allocation2 + $0x98] sm:$0xff]
  %s914 = scalar_lea.vmem %s3, 384
  %v915 = vld [vmem:[%s914] sm:$0xff]
  %v916 = vld [vmem:[%s914 + $0x8] sm:$0xff]
  %v917 = vld [vmem:[%s914 + $0x10] sm:$0xff]
  %v918 = vld [vmem:[%s914 + $0x18] sm:$0xff]
  %v919 = vld [vmem:[%s914 + $0x20] sm:$0xff]
  %v920 = vld [vmem:[%s914 + $0x28] sm:$0xff]
  %v921 = vld [vmem:[%s914 + $0x30] sm:$0xff]
  %v922 = vld [vmem:[%s914 + $0x38] sm:$0xff]
  %v923 = vld [vmem:[%s914 + $0x40] sm:$0xff]
  %v924 = vld [vmem:[%s914 + $0x48] sm:$0xff]
  %v925 = vld [vmem:[%s914 + $0x50] sm:$0xff]
  %v926 = vld [vmem:[%s914 + $0x58] sm:$0xff]
  %v927 = vld [vmem:[%s914 + $0x60] sm:$0xff]
  %v928 = vld [vmem:[%s914 + $0x68] sm:$0xff]
  %v929 = vld [vmem:[%s914 + $0x70] sm:$0xff]
  %v930 = vld [vmem:[%s914 + $0x78] sm:$0xff]
  %931 = vmatprep.subr.mxu0 0.0
  %932 = vmatpush1.msra.mxu0 %v915
  %933 = vmatprep.subr.mxu0 0.0
  %934 = vmatpush1.msra.mxu0 %v916
  %935 = vmatprep.subr.mxu0 0.0
  %936 = vmatpush1.msra.mxu0 %v917
  %937 = vmatprep.subr.mxu0 0.0
  %938 = vmatpush1.msra.mxu0 %v918
  %939 = vmatprep.subr.mxu0 0.0
  %940 = vmatpush1.msra.mxu0 %v919
  %941 = vmatprep.subr.mxu0 0.0
  %942 = vmatpush1.msra.mxu0 %v920
  %943 = vmatprep.subr.mxu0 0.0
  %944 = vmatpush1.msra.mxu0 %v921
  %945 = vmatprep.subr.mxu0 0.0
  %946 = vmatpush1.msra.mxu0 %v922
  %947 = vmatprep.subr.mxu0 0.0
  %948 = vmatpush1.msra.mxu0 %v923
  %949 = vmatprep.subr.mxu0 0.0
  %950 = vmatpush1.msra.mxu0 %v924
  %951 = vmatprep.subr.mxu0 0.0
  %952 = vmatpush1.msra.mxu0 %v925
  %953 = vmatprep.subr.mxu0 0.0
  %954 = vmatpush1.msra.mxu0 %v926
  %955 = vmatprep.subr.mxu0 0.0
  %956 = vmatpush1.msra.mxu0 %v927
  %957 = vmatprep.subr.mxu0 0.0
  %958 = vmatpush1.msra.mxu0 %v928
  %959 = vmatprep.subr.mxu0 0.0
  %960 = vmatpush1.msra.mxu0 %v929
  %961 = vmatprep.subr.mxu0 0.0
  %962 = vmatpush1.msra.mxu0 %v930
  %963 = vmatprep.subr.mxu0 0.0
  %964 = vmatpush1.msra.mxu0 0.0
  %965 = vmatprep.subr.mxu0 0.0
  %966 = vmatpush1.msra.mxu0 0.0
  %967 = vmatprep.subr.mxu0 0.0
  %968 = vmatpush1.msra.mxu0 0.0
  %969 = vmatprep.subr.mxu0 0.0
  %970 = vmatpush1.msra.mxu0 0.0
  %971 = vmatprep.subr.mxu0 0.0
  %972 = vmatpush1.msra.mxu0 0.0
  %973 = vmatprep.subr.mxu0 0.0
  %974 = vmatpush1.msra.mxu0 0.0
  %975 = vmatprep.subr.mxu0 0.0
  %976 = vmatpush1.msra.mxu0 0.0
  %977 = vmatprep.subr.mxu0 0.0
  %978 = vmatpush1.msra.mxu0 0.0
  %979 = vmatprep.subr.mxu0 0.0
  %980 = vmatpush1.msra.mxu0 0.0
  %981 = vmatprep.subr.mxu0 0.0
  %982 = vmatpush1.msra.mxu0 0.0
  %983 = vmatprep.subr.mxu0 0.0
  %984 = vmatpush1.msra.mxu0 0.0
  %985 = vmatprep.subr.mxu0 0.0
  %986 = vmatpush1.msra.mxu0 0.0
  %987 = vmatprep.subr.mxu0 0.0
  %988 = vmatpush1.msra.mxu0 0.0
  %989 = vmatprep.subr.mxu0 0.0
  %990 = vmatpush1.msra.mxu0 0.0
  %991 = vmatprep.subr.mxu0 0.0
  %992 = vmatpush1.msra.mxu0 0.0
  %993 = vmatprep.subr.mxu0 0.0
  %994 = vmatpush1.msra.mxu0 0.0
  %995 = vmatprep.mubr.f32.mxu0 0.0
  %996 = vmatmul.mubr.f32.gmra.mrb[0].mxu0 %v695
  %v997 = vpop.f32.mrb[0].mxu0
  %v998 = vadd.f32 0.0, %v997
  %v999 = vpop.f32.mrb[0].mxu0
  %1000 = vmatprep.mubr.f32.mxu0 0.0
  %1001 = vmatmul.mubr.f32.gmra.mrb[0].mxu0 %v912
  %v1002 = vpop.f32.mrb[0].mxu0
  %v1003 = vadd.f32 0.0, %v1002
  %v1004 = vpop.f32.mrb[0].mxu0
  %1005 = vmatprep.mubr.f32.mxu0 0.0
  %1006 = vmatmul.mubr.f32.gmra.mrb[0].mxu0 %v697
  %v1007 = vpop.f32.mrb[0].mxu0
  %v1008 = vadd.f32 0.0, %v1007
  %v1009 = vpop.f32.mrb[0].mxu0
  %1010 = vmatprep.mubr.f32.mxu0 0.0
  %1011 = vmatmul.mubr.f32.gmra.mrb[0].mxu0 %v913
  %v1012 = vpop.f32.mrb[0].mxu0
  %v1013 = vadd.f32 0.0, %v1012
  %v1014 = vpop.f32.mrb[0].mxu0
  %1015 = vdwg.mxu0
  %v1016 = vadd.f32 %v908, %v998
  %v1017 = vadd.f32 %v909, %v1003
  %v1018 = vadd.f32 %v910, %v1008
  %v1019 = vadd.f32 %v911, %v1013
  %v1020 = vld [vmem:[#allocation2 + $0x38] sm:$0xff]
  %v1021 = vld [vmem:[#allocation2 + $0x48] sm:$0xff]
  %v1022 = vld [vmem:[#allocation2 + $0xa8] sm:$0xff]
  %v1023 = vld [vmem:[#allocation2 + $0xb8] sm:$0xff]
  %s1024 = scalar_lea.vmem %s3, 512
  %v1025 = vld [vmem:[%s1024] sm:$0xff]
  %v1026 = vld [vmem:[%s1024 + $0x8] sm:$0xff]
  %v1027 = vld [vmem:[%s1024 + $0x10] sm:$0xff]
  %v1028 = vld [vmem:[%s1024 + $0x18] sm:$0xff]
  %v1029 = vld [vmem:[%s1024 + $0x20] sm:$0xff]
  %v1030 = vld [vmem:[%s1024 + $0x28] sm:$0xff]
  %v1031 = vld [vmem:[%s1024 + $0x30] sm:$0xff]
  %v1032 = vld [vmem:[%s1024 + $0x38] sm:$0xff]
  %v1033 = vld [vmem:[%s1024 + $0x40] sm:$0xff]
  %v1034 = vld [vmem:[%s1024 + $0x48] sm:$0xff]
  %v1035 = vld [vmem:[%s1024 + $0x50] sm:$0xff]
  %v1036 = vld [vmem:[%s1024 + $0x58] sm:$0xff]
  %v1037 = vld [vmem:[%s1024 + $0x60] sm:$0xff]
  %v1038 = vld [vmem:[%s1024 + $0x68] sm:$0xff]
  %v1039 = vld [vmem:[%s1024 + $0x70] sm:$0xff]
  %v1040 = vld [vmem:[%s1024 + $0x78] sm:$0xff]
  %1041 = vmatprep.subr.mxu0 0.0
  %1042 = vmatpush1.msra.mxu0 %v1025
  %1043 = vmatprep.subr.mxu0 0.0
  %1044 = vmatpush1.msra.mxu0 %v1026
  %1045 = vmatprep.subr.mxu0 0.0
  %1046 = vmatpush1.msra.mxu0 %v1027
  %1047 = vmatprep.subr.mxu0 0.0
  %1048 = vmatpush1.msra.mxu0 %v1028
  %1049 = vmatprep.subr.mxu0 0.0
  %1050 = vmatpush1.msra.mxu0 %v1029
  %1051 = vmatprep.subr.mxu0 0.0
  %1052 = vmatpush1.msra.mxu0 %v1030
  %1053 = vmatprep.subr.mxu0 0.0
  %1054 = vmatpush1.msra.mxu0 %v1031
  %1055 = vmatprep.subr.mxu0 0.0
  %1056 = vmatpush1.msra.mxu0 %v1032
  %1057 = vmatprep.subr.mxu0 0.0
  %1058 = vmatpush1.msra.mxu0 %v1033
  %1059 = vmatprep.subr.mxu0 0.0
  %1060 = vmatpush1.msra.mxu0 %v1034
  %1061 = vmatprep.subr.mxu0 0.0
  %1062 = vmatpush1.msra.mxu0 %v1035
  %1063 = vmatprep.subr.mxu0 0.0
  %1064 = vmatpush1.msra.mxu0 %v1036
  %1065 = vmatprep.subr.mxu0 0.0
  %1066 = vmatpush1.msra.mxu0 %v1037
  %1067 = vmatprep.subr.mxu0 0.0
  %1068 = vmatpush1.msra.mxu0 %v1038
  %1069 = vmatprep.subr.mxu0 0.0
  %1070 = vmatpush1.msra.mxu0 %v1039
  %1071 = vmatprep.subr.mxu0 0.0
  %1072 = vmatpush1.msra.mxu0 %v1040
  %1073 = vmatprep.subr.mxu0 0.0
  %1074 = vmatpush1.msra.mxu0 0.0
  %1075 = vmatprep.subr.mxu0 0.0
  %1076 = vmatpush1.msra.mxu0 0.0
  %1077 = vmatprep.subr.mxu0 0.0
  %1078 = vmatpush1.msra.mxu0 0.0
  %1079 = vmatprep.subr.mxu0 0.0
  %1080 = vmatpush1.msra.mxu0 0.0
  %1081 = vmatprep.subr.mxu0 0.0
  %1082 = vmatpush1.msra.mxu0 0.0
  %1083 = vmatprep.subr.mxu0 0.0
  %1084 = vmatpush1.msra.mxu0 0.0
  %1085 = vmatprep.subr.mxu0 0.0
  %1086 = vmatpush1.msra.mxu0 0.0
  %1087 = vmatprep.subr.mxu0 0.0
  %1088 = vmatpush1.msra.mxu0 0.0
  %1089 = vmatprep.subr.mxu0 0.0
  %1090 = vmatpush1.msra.mxu0 0.0
  %1091 = vmatprep.subr.mxu0 0.0
  %1092 = vmatpush1.msra.mxu0 0.0
  %1093 = vmatprep.subr.mxu0 0.0
  %1094 = vmatpush1.msra.mxu0 0.0
  %1095 = vmatprep.subr.mxu0 0.0
  %1096 = vmatpush1.msra.mxu0 0.0
  %1097 = vmatprep.subr.mxu0 0.0
  %1098 = vmatpush1.msra.mxu0 0.0
  %1099 = vmatprep.subr.mxu0 0.0
  %1100 = vmatpush1.msra.mxu0 0.0
  %1101 = vmatprep.subr.mxu0 0.0
  %1102 = vmatpush1.msra.mxu0 0.0
  %1103 = vmatprep.subr.mxu0 0.0
  %1104 = vmatpush1.msra.mxu0 0.0
  %1105 = vmatprep.mubr.f32.mxu0 0.0
  %1106 = vmatmul.mubr.f32.gmra.mrb[0].mxu0 %v1020
  %v1107 = vpop.f32.mrb[0].mxu0
  %v1108 = vadd.f32 0.0, %v1107
  %v1109 = vpop.f32.mrb[0].mxu0
  %1110 = vmatprep.mubr.f32.mxu0 0.0
  %1111 = vmatmul.mubr.f32.gmra.mrb[0].mxu0 %v1021
  %v1112 = vpop.f32.mrb[0].mxu0
  %v1113 = vadd.f32 0.0, %v1112
  %v1114 = vpop.f32.mrb[0].mxu0
  %1115 = vmatprep.mubr.f32.mxu0 0.0
  %1116 = vmatmul.mubr.f32.gmra.mrb[0].mxu0 %v1022
  %v1117 = vpop.f32.mrb[0].mxu0
  %v1118 = vadd.f32 0.0, %v1117
  %v1119 = vpop.f32.mrb[0].mxu0
  %1120 = vmatprep.mubr.f32.mxu0 0.0
  %1121 = vmatmul.mubr.f32.gmra.mrb[0].mxu0 %v1023
  %v1122 = vpop.f32.mrb[0].mxu0
  %v1123 = vadd.f32 0.0, %v1122
  %v1124 = vpop.f32.mrb[0].mxu0
  %1125 = vdwg.mxu0
  %v1126 = vadd.f32 %v1016, %v1108
  %v1127 = vadd.f32 %v1017, %v1113
  %v1128 = vadd.f32 %v1018, %v1118
  %v1129 = vadd.f32 %v1019, %v1123
  %v1130 = vld [vmem:[#allocation2 + $0x40] sm:$0xff]
  %v1131 = vld [vmem:[#allocation2 + $0x50] sm:$0xff]
  %v1132 = vld [vmem:[#allocation2 + $0xb0] sm:$0xff]
  %v1133 = vld [vmem:[#allocation2 + $0xc0] sm:$0xff]
  %s1134 = scalar_lea.vmem %s3, 640
  %v1135 = vld [vmem:[%s1134] sm:$0xff]
  %v1136 = vld [vmem:[%s1134 + $0x8] sm:$0xff]
  %v1137 = vld [vmem:[%s1134 + $0x10] sm:$0xff]
  %v1138 = vld [vmem:[%s1134 + $0x18] sm:$0xff]
  %v1139 = vld [vmem:[%s1134 + $0x20] sm:$0xff]
  %v1140 = vld [vmem:[%s1134 + $0x28] sm:$0xff]
  %v1141 = vld [vmem:[%s1134 + $0x30] sm:$0xff]
  %v1142 = vld [vmem:[%s1134 + $0x38] sm:$0xff]
  %v1143 = vld [vmem:[%s1134 + $0x40] sm:$0xff]
  %v1144 = vld [vmem:[%s1134 + $0x48] sm:$0xff]
  %v1145 = vld [vmem:[%s1134 + $0x50] sm:$0xff]
  %v1146 = vld [vmem:[%s1134 + $0x58] sm:$0xff]
  %v1147 = vld [vmem:[%s1134 + $0x60] sm:$0xff]
  %v1148 = vld [vmem:[%s1134 + $0x68] sm:$0xff]
  %v1149 = vld [vmem:[%s1134 + $0x70] sm:$0xff]
  %v1150 = vld [vmem:[%s1134 + $0x78] sm:$0xff]
  %1151 = vmatprep.subr.mxu0 0.0
  %1152 = vmatpush1.msra.mxu0 %v1135
  %1153 = vmatprep.subr.mxu0 0.0
  %1154 = vmatpush1.msra.mxu0 %v1136
  %1155 = vmatprep.subr.mxu0 0.0
  %1156 = vmatpush1.msra.mxu0 %v1137
  %1157 = vmatprep.subr.mxu0 0.0
  %1158 = vmatpush1.msra.mxu0 %v1138
  %1159 = vmatprep.subr.mxu0 0.0
  %1160 = vmatpush1.msra.mxu0 %v1139
  %1161 = vmatprep.subr.mxu0 0.0
  %1162 = vmatpush1.msra.mxu0 %v1140
  %1163 = vmatprep.subr.mxu0 0.0
  %1164 = vmatpush1.msra.mxu0 %v1141
  %1165 = vmatprep.subr.mxu0 0.0
  %1166 = vmatpush1.msra.mxu0 %v1142
  %1167 = vmatprep.subr.mxu0 0.0
  %1168 = vmatpush1.msra.mxu0 %v1143
  %1169 = vmatprep.subr.mxu0 0.0
  %1170 = vmatpush1.msra.mxu0 %v1144
  %1171 = vmatprep.subr.mxu0 0.0
  %1172 = vmatpush1.msra.mxu0 %v1145
  %1173 = vmatprep.subr.mxu0 0.0
  %1174 = vmatpush1.msra.mxu0 %v1146
  %1175 = vmatprep.subr.mxu0 0.0
  %1176 = vmatpush1.msra.mxu0 %v1147
  %1177 = vmatprep.subr.mxu0 0.0
  %1178 = vmatpush1.msra.mxu0 %v1148
  %1179 = vmatprep.subr.mxu0 0.0
  %1180 = vmatpush1.msra.mxu0 %v1149
  %1181 = vmatprep.subr.mxu0 0.0
  %1182 = vmatpush1.msra.mxu0 %v1150
  %1183 = vmatprep.subr.mxu0 0.0
  %1184 = vmatpush1.msra.mxu0 0.0
  %1185 = vmatprep.subr.mxu0 0.0
  %1186 = vmatpush1.msra.mxu0 0.0
  %1187 = vmatprep.subr.mxu0 0.0
  %1188 = vmatpush1.msra.mxu0 0.0
  %1189 = vmatprep.subr.mxu0 0.0
  %1190 = vmatpush1.msra.mxu0 0.0
  %1191 = vmatprep.subr.mxu0 0.0
  %1192 = vmatpush1.msra.mxu0 0.0
  %1193 = vmatprep.subr.mxu0 0.0
  %1194 = vmatpush1.msra.mxu0 0.0
  %1195 = vmatprep.subr.mxu0 0.0
  %1196 = vmatpush1.msra.mxu0 0.0
  %1197 = vmatprep.subr.mxu0 0.0
  %1198 = vmatpush1.msra.mxu0 0.0
  %1199 = vmatprep.subr.mxu0 0.0
  %1200 = vmatpush1.msra.mxu0 0.0
  %1201 = vmatprep.subr.mxu0 0.0
  %1202 = vmatpush1.msra.mxu0 0.0
  %1203 = vmatprep.subr.mxu0 0.0
  %1204 = vmatpush1.msra.mxu0 0.0
  %1205 = vmatprep.subr.mxu0 0.0
  %1206 = vmatpush1.msra.mxu0 0.0
  %1207 = vmatprep.subr.mxu0 0.0
  %1208 = vmatpush1.msra.mxu0 0.0
  %1209 = vmatprep.subr.mxu0 0.0
  %1210 = vmatpush1.msra.mxu0 0.0
  %1211 = vmatprep.subr.mxu0 0.0
  %1212 = vmatpush1.msra.mxu0 0.0
  %1213 = vmatprep.subr.mxu0 0.0
  %1214 = vmatpush1.msra.mxu0 0.0
  %1215 = vmatprep.mubr.f32.mxu0 0.0
  %1216 = vmatmul.mubr.f32.gmra.mrb[0].mxu0 %v1130
  %v1217 = vpop.f32.mrb[0].mxu0
  %v1218 = vadd.f32 0.0, %v1217
  %v1219 = vpop.f32.mrb[0].mxu0
  %1220 = vmatprep.mubr.f32.mxu0 0.0
  %1221 = vmatmul.mubr.f32.gmra.mrb[0].mxu0 %v1131
  %v1222 = vpop.f32.mrb[0].mxu0
  %v1223 = vadd.f32 0.0, %v1222
  %v1224 = vpop.f32.mrb[0].mxu0
  %1225 = vmatprep.mubr.f32.mxu0 0.0
  %1226 = vmatmul.mubr.f32.gmra.mrb[0].mxu0 %v1132
  %v1227 = vpop.f32.mrb[0].mxu0
  %v1228 = vadd.f32 0.0, %v1227
  %v1229 = vpop.f32.mrb[0].mxu0
  %1230 = vmatprep.mubr.f32.mxu0 0.0
  %1231 = vmatmul.mubr.f32.gmra.mrb[0].mxu0 %v1133
  %v1232 = vpop.f32.mrb[0].mxu0
  %v1233 = vadd.f32 0.0, %v1232
  %v1234 = vpop.f32.mrb[0].mxu0
  %1235 = vdwg.mxu0
  %v1236 = vadd.f32 %v1126, %v1218
  %v1237 = vadd.f32 %v1127, %v1223
  %v1238 = vadd.f32 %v1128, %v1228
  %v1239 = vadd.f32 %v1129, %v1233
  %v1240 = vld [vmem:[#allocation2 + $0x58] sm:$0xff]
  %v1241 = vld [vmem:[#allocation2 + $0xc8] sm:$0xff]
  %s1242 = scalar_lea.vmem %s3, 768
  %v1243 = vld [vmem:[%s1242] sm:$0xff]
  %v1244 = vld [vmem:[%s1242 + $0x8] sm:$0xff]
  %v1245 = vld [vmem:[%s1242 + $0x10] sm:$0xff]
  %v1246 = vld [vmem:[%s1242 + $0x18] sm:$0xff]
  %v1247 = vld [vmem:[%s1242 + $0x20] sm:$0xff]
  %v1248 = vld [vmem:[%s1242 + $0x28] sm:$0xff]
  %v1249 = vld [vmem:[%s1242 + $0x30] sm:$0xff]
  %v1250 = vld [vmem:[%s1242 + $0x38] sm:$0xff]
  %v1251 = vld [vmem:[%s1242 + $0x40] sm:$0xff]
  %v1252 = vld [vmem:[%s1242 + $0x48] sm:$0xff]
  %v1253 = vld [vmem:[%s1242 + $0x50] sm:$0xff]
  %v1254 = vld [vmem:[%s1242 + $0x58] sm:$0xff]
  %v1255 = vld [vmem:[%s1242 + $0x60] sm:$0xff]
  %v1256 = vld [vmem:[%s1242 + $0x68] sm:$0xff]
  %v1257 = vld [vmem:[%s1242 + $0x70] sm:$0xff]
  %v1258 = vld [vmem:[%s1242 + $0x78] sm:$0xff]
  %1259 = vmatprep.subr.mxu0 0.0
  %1260 = vmatpush1.msra.mxu0 %v1243
  %1261 = vmatprep.subr.mxu0 0.0
  %1262 = vmatpush1.msra.mxu0 %v1244
  %1263 = vmatprep.subr.mxu0 0.0
  %1264 = vmatpush1.msra.mxu0 %v1245
  %1265 = vmatprep.subr.mxu0 0.0
  %1266 = vmatpush1.msra.mxu0 %v1246
  %1267 = vmatprep.subr.mxu0 0.0
  %1268 = vmatpush1.msra.mxu0 %v1247
  %1269 = vmatprep.subr.mxu0 0.0
  %1270 = vmatpush1.msra.mxu0 %v1248
  %1271 = vmatprep.subr.mxu0 0.0
  %1272 = vmatpush1.msra.mxu0 %v1249
  %1273 = vmatprep.subr.mxu0 0.0
  %1274 = vmatpush1.msra.mxu0 %v1250
  %1275 = vmatprep.subr.mxu0 0.0
  %1276 = vmatpush1.msra.mxu0 %v1251
  %1277 = vmatprep.subr.mxu0 0.0
  %1278 = vmatpush1.msra.mxu0 %v1252
  %1279 = vmatprep.subr.mxu0 0.0
  %1280 = vmatpush1.msra.mxu0 %v1253
  %1281 = vmatprep.subr.mxu0 0.0
  %1282 = vmatpush1.msra.mxu0 %v1254
  %1283 = vmatprep.subr.mxu0 0.0
  %1284 = vmatpush1.msra.mxu0 %v1255
  %1285 = vmatprep.subr.mxu0 0.0
  %1286 = vmatpush1.msra.mxu0 %v1256
  %1287 = vmatprep.subr.mxu0 0.0
  %1288 = vmatpush1.msra.mxu0 %v1257
  %1289 = vmatprep.subr.mxu0 0.0
  %1290 = vmatpush1.msra.mxu0 %v1258
  %1291 = vmatprep.subr.mxu0 0.0
  %1292 = vmatpush1.msra.mxu0 0.0
  %1293 = vmatprep.subr.mxu0 0.0
  %1294 = vmatpush1.msra.mxu0 0.0
  %1295 = vmatprep.subr.mxu0 0.0
  %1296 = vmatpush1.msra.mxu0 0.0
  %1297 = vmatprep.subr.mxu0 0.0
  %1298 = vmatpush1.msra.mxu0 0.0
  %1299 = vmatprep.subr.mxu0 0.0
  %1300 = vmatpush1.msra.mxu0 0.0
  %1301 = vmatprep.subr.mxu0 0.0
  %1302 = vmatpush1.msra.mxu0 0.0
  %1303 = vmatprep.subr.mxu0 0.0
  %1304 = vmatpush1.msra.mxu0 0.0
  %1305 = vmatprep.subr.mxu0 0.0
  %1306 = vmatpush1.msra.mxu0 0.0
  %1307 = vmatprep.subr.mxu0 0.0
  %1308 = vmatpush1.msra.mxu0 0.0
  %1309 = vmatprep.subr.mxu0 0.0
  %1310 = vmatpush1.msra.mxu0 0.0
  %1311 = vmatprep.subr.mxu0 0.0
  %1312 = vmatpush1.msra.mxu0 0.0
  %1313 = vmatprep.subr.mxu0 0.0
  %1314 = vmatpush1.msra.mxu0 0.0
  %1315 = vmatprep.subr.mxu0 0.0
  %1316 = vmatpush1.msra.mxu0 0.0
  %1317 = vmatprep.subr.mxu0 0.0
  %1318 = vmatpush1.msra.mxu0 0.0
  %1319 = vmatprep.subr.mxu0 0.0
  %1320 = vmatpush1.msra.mxu0 0.0
  %1321 = vmatprep.subr.mxu0 0.0
  %1322 = vmatpush1.msra.mxu0 0.0
  %1323 = vmatprep.mubr.f32.mxu0 0.0
  %1324 = vmatmul.mubr.f32.gmra.mrb[0].mxu0 %v1021
  %v1325 = vpop.f32.mrb[0].mxu0
  %v1326 = vadd.f32 0.0, %v1325
  %v1327 = vpop.f32.mrb[0].mxu0
  %1328 = vmatprep.mubr.f32.mxu0 0.0
  %1329 = vmatmul.mubr.f32.gmra.mrb[0].mxu0 %v1240
  %v1330 = vpop.f32.mrb[0].mxu0
  %v1331 = vadd.f32 0.0, %v1330
  %v1332 = vpop.f32.mrb[0].mxu0
  %1333 = vmatprep.mubr.f32.mxu0 0.0
  %1334 = vmatmul.mubr.f32.gmra.mrb[0].mxu0 %v1023
  %v1335 = vpop.f32.mrb[0].mxu0
  %v1336 = vadd.f32 0.0, %v1335
  %v1337 = vpop.f32.mrb[0].mxu0
  %1338 = vmatprep.mubr.f32.mxu0 0.0
  %1339 = vmatmul.mubr.f32.gmra.mrb[0].mxu0 %v1241
  %v1340 = vpop.f32.mrb[0].mxu0
  %v1341 = vadd.f32 0.0, %v1340
  %v1342 = vpop.f32.mrb[0].mxu0
  %1343 = vdwg.mxu0
  %v1344 = vadd.f32 %v1236, %v1326
  %v1345 = vadd.f32 %v1237, %v1331
  %v1346 = vadd.f32 %v1238, %v1336
  %v1347 = vadd.f32 %v1239, %v1341
  %v1348 = vld [vmem:[#allocation2 + $0x60] sm:$0xff]
  %v1349 = vld [vmem:[#allocation2 + $0xd0] sm:$0xff]
  %s1350 = scalar_lea.vmem %s3, 896
  %v1351 = vld [vmem:[%s1350] sm:$0xff]
  %v1352 = vld [vmem:[%s1350 + $0x8] sm:$0xff]
  %v1353 = vld [vmem:[%s1350 + $0x10] sm:$0xff]
  %v1354 = vld [vmem:[%s1350 + $0x18] sm:$0xff]
  %v1355 = vld [vmem:[%s1350 + $0x20] sm:$0xff]
  %v1356 = vld [vmem:[%s1350 + $0x28] sm:$0xff]
  %v1357 = vld [vmem:[%s1350 + $0x30] sm:$0xff]
  %v1358 = vld [vmem:[%s1350 + $0x38] sm:$0xff]
  %v1359 = vld [vmem:[%s1350 + $0x40] sm:$0xff]
  %v1360 = vld [vmem:[%s1350 + $0x48] sm:$0xff]
  %v1361 = vld [vmem:[%s1350 + $0x50] sm:$0xff]
  %v1362 = vld [vmem:[%s1350 + $0x58] sm:$0xff]
  %v1363 = vld [vmem:[%s1350 + $0x60] sm:$0xff]
  %v1364 = vld [vmem:[%s1350 + $0x68] sm:$0xff]
  %v1365 = vld [vmem:[%s1350 + $0x70] sm:$0xff]
  %v1366 = vld [vmem:[%s1350 + $0x78] sm:$0xff]
  %1367 = vmatprep.subr.mxu0 0.0
  %1368 = vmatpush1.msra.mxu0 %v1351
  %1369 = vmatprep.subr.mxu0 0.0
  %1370 = vmatpush1.msra.mxu0 %v1352
  %1371 = vmatprep.subr.mxu0 0.0
  %1372 = vmatpush1.msra.mxu0 %v1353
  %1373 = vmatprep.subr.mxu0 0.0
  %1374 = vmatpush1.msra.mxu0 %v1354
  %1375 = vmatprep.subr.mxu0 0.0
  %1376 = vmatpush1.msra.mxu0 %v1355
  %1377 = vmatprep.subr.mxu0 0.0
  %1378 = vmatpush1.msra.mxu0 %v1356
  %1379 = vmatprep.subr.mxu0 0.0
  %1380 = vmatpush1.msra.mxu0 %v1357
  %1381 = vmatprep.subr.mxu0 0.0
  %1382 = vmatpush1.msra.mxu0 %v1358
  %1383 = vmatprep.subr.mxu0 0.0
  %1384 = vmatpush1.msra.mxu0 %v1359
  %1385 = vmatprep.subr.mxu0 0.0
  %1386 = vmatpush1.msra.mxu0 %v1360
  %1387 = vmatprep.subr.mxu0 0.0
  %1388 = vmatpush1.msra.mxu0 %v1361
  %1389 = vmatprep.subr.mxu0 0.0
  %1390 = vmatpush1.msra.mxu0 %v1362
  %1391 = vmatprep.subr.mxu0 0.0
  %1392 = vmatpush1.msra.mxu0 %v1363
  %1393 = vmatprep.subr.mxu0 0.0
  %1394 = vmatpush1.msra.mxu0 %v1364
  %1395 = vmatprep.subr.mxu0 0.0
  %1396 = vmatpush1.msra.mxu0 %v1365
  %1397 = vmatprep.subr.mxu0 0.0
  %1398 = vmatpush1.msra.mxu0 %v1366
  %1399 = vmatprep.subr.mxu0 0.0
  %1400 = vmatpush1.msra.mxu0 0.0
  %1401 = vmatprep.subr.mxu0 0.0
  %1402 = vmatpush1.msra.mxu0 0.0
  %1403 = vmatprep.subr.mxu0 0.0
  %1404 = vmatpush1.msra.mxu0 0.0
  %1405 = vmatprep.subr.mxu0 0.0
  %1406 = vmatpush1.msra.mxu0 0.0
  %1407 = vmatprep.subr.mxu0 0.0
  %1408 = vmatpush1.msra.mxu0 0.0
  %1409 = vmatprep.subr.mxu0 0.0
  %1410 = vmatpush1.msra.mxu0 0.0
  %1411 = vmatprep.subr.mxu0 0.0
  %1412 = vmatpush1.msra.mxu0 0.0
  %1413 = vmatprep.subr.mxu0 0.0
  %1414 = vmatpush1.msra.mxu0 0.0
  %1415 = vmatprep.subr.mxu0 0.0
  %1416 = vmatpush1.msra.mxu0 0.0
  %1417 = vmatprep.subr.mxu0 0.0
  %1418 = vmatpush1.msra.mxu0 0.0
  %1419 = vmatprep.subr.mxu0 0.0
  %1420 = vmatpush1.msra.mxu0 0.0
  %1421 = vmatprep.subr.mxu0 0.0
  %1422 = vmatpush1.msra.mxu0 0.0
  %1423 = vmatprep.subr.mxu0 0.0
  %1424 = vmatpush1.msra.mxu0 0.0
  %1425 = vmatprep.subr.mxu0 0.0
  %1426 = vmatpush1.msra.mxu0 0.0
  %1427 = vmatprep.subr.mxu0 0.0
  %1428 = vmatpush1.msra.mxu0 0.0
  %1429 = vmatprep.subr.mxu0 0.0
  %1430 = vmatpush1.msra.mxu0 0.0
  %1431 = vmatprep.mubr.f32.mxu0 0.0
  %1432 = vmatmul.mubr.f32.gmra.mrb[0].mxu0 %v1131
  %v1433 = vpop.f32.mrb[0].mxu0
  %v1434 = vadd.f32 0.0, %v1433
  %v1435 = vpop.f32.mrb[0].mxu0
  %1436 = vmatprep.mubr.f32.mxu0 0.0
  %1437 = vmatmul.mubr.f32.gmra.mrb[0].mxu0 %v1348
  %v1438 = vpop.f32.mrb[0].mxu0
  %v1439 = vadd.f32 0.0, %v1438
  %v1440 = vpop.f32.mrb[0].mxu0
  %1441 = vmatprep.mubr.f32.mxu0 0.0
  %1442 = vmatmul.mubr.f32.gmra.mrb[0].mxu0 %v1133
  %v1443 = vpop.f32.mrb[0].mxu0
  %v1444 = vadd.f32 0.0, %v1443
  %v1445 = vpop.f32.mrb[0].mxu0
  %1446 = vmatprep.mubr.f32.mxu0 0.0
  %1447 = vmatmul.mubr.f32.gmra.mrb[0].mxu0 %v1349
  %v1448 = vpop.f32.mrb[0].mxu0
  %v1449 = vadd.f32 0.0, %v1448
  %v1450 = vpop.f32.mrb[0].mxu0
  %1451 = vdwg.mxu0
  %v1452 = vadd.f32 %v1344, %v1434
  %v1453 = vadd.f32 %v1345, %v1439
  %v1454 = vadd.f32 %v1346, %v1444
  %v1455 = vadd.f32 %v1347, %v1449
  %v1456 = vld [vmem:[#allocation2 + $0xe0] sm:$0xff]
  %v1457 = vld [vmem:[#allocation2 + $0xf0] sm:$0xff]
  %s1458 = scalar_lea.vmem %s3, 1024
  %v1459 = vld [vmem:[%s1458] sm:$0xff]
  %v1460 = vld [vmem:[%s1458 + $0x8] sm:$0xff]
  %v1461 = vld [vmem:[%s1458 + $0x10] sm:$0xff]
  %v1462 = vld [vmem:[%s1458 + $0x18] sm:$0xff]
  %v1463 = vld [vmem:[%s1458 + $0x20] sm:$0xff]
  %v1464 = vld [vmem:[%s1458 + $0x28] sm:$0xff]
  %v1465 = vld [vmem:[%s1458 + $0x30] sm:$0xff]
  %v1466 = vld [vmem:[%s1458 + $0x38] sm:$0xff]
  %v1467 = vld [vmem:[%s1458 + $0x40] sm:$0xff]
  %v1468 = vld [vmem:[%s1458 + $0x48] sm:$0xff]
  %v1469 = vld [vmem:[%s1458 + $0x50] sm:$0xff]
  %v1470 = vld [vmem:[%s1458 + $0x58] sm:$0xff]
  %v1471 = vld [vmem:[%s1458 + $0x60] sm:$0xff]
  %v1472 = vld [vmem:[%s1458 + $0x68] sm:$0xff]
  %v1473 = vld [vmem:[%s1458 + $0x70] sm:$0xff]
  %v1474 = vld [vmem:[%s1458 + $0x78] sm:$0xff]
  %1475 = vmatprep.subr.mxu0 0.0
  %1476 = vmatpush1.msra.mxu0 %v1459
  %1477 = vmatprep.subr.mxu0 0.0
  %1478 = vmatpush1.msra.mxu0 %v1460
  %1479 = vmatprep.subr.mxu0 0.0
  %1480 = vmatpush1.msra.mxu0 %v1461
  %1481 = vmatprep.subr.mxu0 0.0
  %1482 = vmatpush1.msra.mxu0 %v1462
  %1483 = vmatprep.subr.mxu0 0.0
  %1484 = vmatpush1.msra.mxu0 %v1463
  %1485 = vmatprep.subr.mxu0 0.0
  %1486 = vmatpush1.msra.mxu0 %v1464
  %1487 = vmatprep.subr.mxu0 0.0
  %1488 = vmatpush1.msra.mxu0 %v1465
  %1489 = vmatprep.subr.mxu0 0.0
  %1490 = vmatpush1.msra.mxu0 %v1466
  %1491 = vmatprep.subr.mxu0 0.0
  %1492 = vmatpush1.msra.mxu0 %v1467
  %1493 = vmatprep.subr.mxu0 0.0
  %1494 = vmatpush1.msra.mxu0 %v1468
  %1495 = vmatprep.subr.mxu0 0.0
  %1496 = vmatpush1.msra.mxu0 %v1469
  %1497 = vmatprep.subr.mxu0 0.0
  %1498 = vmatpush1.msra.mxu0 %v1470
  %1499 = vmatprep.subr.mxu0 0.0
  %1500 = vmatpush1.msra.mxu0 %v1471
  %1501 = vmatprep.subr.mxu0 0.0
  %1502 = vmatpush1.msra.mxu0 %v1472
  %1503 = vmatprep.subr.mxu0 0.0
  %1504 = vmatpush1.msra.mxu0 %v1473
  %1505 = vmatprep.subr.mxu0 0.0
  %1506 = vmatpush1.msra.mxu0 %v1474
  %1507 = vmatprep.subr.mxu0 0.0
  %1508 = vmatpush1.msra.mxu0 0.0
  %1509 = vmatprep.subr.mxu0 0.0
  %1510 = vmatpush1.msra.mxu0 0.0
  %1511 = vmatprep.subr.mxu0 0.0
  %1512 = vmatpush1.msra.mxu0 0.0
  %1513 = vmatprep.subr.mxu0 0.0
  %1514 = vmatpush1.msra.mxu0 0.0
  %1515 = vmatprep.subr.mxu0 0.0
  %1516 = vmatpush1.msra.mxu0 0.0
  %1517 = vmatprep.subr.mxu0 0.0
  %1518 = vmatpush1.msra.mxu0 0.0
  %1519 = vmatprep.subr.mxu0 0.0
  %1520 = vmatpush1.msra.mxu0 0.0
  %1521 = vmatprep.subr.mxu0 0.0
  %1522 = vmatpush1.msra.mxu0 0.0
  %1523 = vmatprep.subr.mxu0 0.0
  %1524 = vmatpush1.msra.mxu0 0.0
  %1525 = vmatprep.subr.mxu0 0.0
  %1526 = vmatpush1.msra.mxu0 0.0
  %1527 = vmatprep.subr.mxu0 0.0
  %1528 = vmatpush1.msra.mxu0 0.0
  %1529 = vmatprep.subr.mxu0 0.0
  %1530 = vmatpush1.msra.mxu0 0.0
  %1531 = vmatprep.subr.mxu0 0.0
  %1532 = vmatpush1.msra.mxu0 0.0
  %1533 = vmatprep.subr.mxu0 0.0
  %1534 = vmatpush1.msra.mxu0 0.0
  %1535 = vmatprep.subr.mxu0 0.0
  %1536 = vmatpush1.msra.mxu0 0.0
  %1537 = vmatprep.subr.mxu0 0.0
  %1538 = vmatpush1.msra.mxu0 0.0
  %1539 = vmatprep.mubr.f32.mxu0 0.0
  %1540 = vmatmul.mubr.f32.gmra.mrb[0].mxu0 %v587
  %v1541 = vpop.f32.mrb[0].mxu0
  %v1542 = vadd.f32 0.0, %v1541
  %v1543 = vpop.f32.mrb[0].mxu0
  %1544 = vmatprep.mubr.f32.mxu0 0.0
  %1545 = vmatmul.mubr.f32.gmra.mrb[0].mxu0 %v588
  %v1546 = vpop.f32.mrb[0].mxu0
  %v1547 = vadd.f32 0.0, %v1546
  %v1548 = vpop.f32.mrb[0].mxu0
  %1549 = vmatprep.mubr.f32.mxu0 0.0
  %1550 = vmatmul.mubr.f32.gmra.mrb[0].mxu0 %v1456
  %v1551 = vpop.f32.mrb[0].mxu0
  %v1552 = vadd.f32 0.0, %v1551
  %v1553 = vpop.f32.mrb[0].mxu0
  %1554 = vmatprep.mubr.f32.mxu0 0.0
  %1555 = vmatmul.mubr.f32.gmra.mrb[0].mxu0 %v1457
  %v1556 = vpop.f32.mrb[0].mxu0
  %v1557 = vadd.f32 0.0, %v1556
  %v1558 = vpop.f32.mrb[0].mxu0
  %1559 = vdwg.mxu0
  %v1560 = vadd.f32 %v1452, %v1542
  %v1561 = vadd.f32 %v1453, %v1547
  %v1562 = vadd.f32 %v1454, %v1552
  %v1563 = vadd.f32 %v1455, %v1557
  %v1564 = vld [vmem:[#allocation2 + $0xe8] sm:$0xff]
  %v1565 = vld [vmem:[#allocation2 + $0xf8] sm:$0xff]
  %s1566 = scalar_lea.vmem %s3, 1152
  %v1567 = vld [vmem:[%s1566] sm:$0xff]
  %v1568 = vld [vmem:[%s1566 + $0x8] sm:$0xff]
  %v1569 = vld [vmem:[%s1566 + $0x10] sm:$0xff]
  %v1570 = vld [vmem:[%s1566 + $0x18] sm:$0xff]
  %v1571 = vld [vmem:[%s1566 + $0x20] sm:$0xff]
  %v1572 = vld [vmem:[%s1566 + $0x28] sm:$0xff]
  %v1573 = vld [vmem:[%s1566 + $0x30] sm:$0xff]
  %v1574 = vld [vmem:[%s1566 + $0x38] sm:$0xff]
  %v1575 = vld [vmem:[%s1566 + $0x40] sm:$0xff]
  %v1576 = vld [vmem:[%s1566 + $0x48] sm:$0xff]
  %v1577 = vld [vmem:[%s1566 + $0x50] sm:$0xff]
  %v1578 = vld [vmem:[%s1566 + $0x58] sm:$0xff]
  %v1579 = vld [vmem:[%s1566 + $0x60] sm:$0xff]
  %v1580 = vld [vmem:[%s1566 + $0x68] sm:$0xff]
  %v1581 = vld [vmem:[%s1566 + $0x70] sm:$0xff]
  %v1582 = vld [vmem:[%s1566 + $0x78] sm:$0xff]
  %1583 = vmatprep.subr.mxu0 0.0
  %1584 = vmatpush1.msra.mxu0 %v1567
  %1585 = vmatprep.subr.mxu0 0.0
  %1586 = vmatpush1.msra.mxu0 %v1568
  %1587 = vmatprep.subr.mxu0 0.0
  %1588 = vmatpush1.msra.mxu0 %v1569
  %1589 = vmatprep.subr.mxu0 0.0
  %1590 = vmatpush1.msra.mxu0 %v1570
  %1591 = vmatprep.subr.mxu0 0.0
  %1592 = vmatpush1.msra.mxu0 %v1571
  %1593 = vmatprep.subr.mxu0 0.0
  %1594 = vmatpush1.msra.mxu0 %v1572
  %1595 = vmatprep.subr.mxu0 0.0
  %1596 = vmatpush1.msra.mxu0 %v1573
  %1597 = vmatprep.subr.mxu0 0.0
  %1598 = vmatpush1.msra.mxu0 %v1574
  %1599 = vmatprep.subr.mxu0 0.0
  %1600 = vmatpush1.msra.mxu0 %v1575
  %1601 = vmatprep.subr.mxu0 0.0
  %1602 = vmatpush1.msra.mxu0 %v1576
  %1603 = vmatprep.subr.mxu0 0.0
  %1604 = vmatpush1.msra.mxu0 %v1577
  %1605 = vmatprep.subr.mxu0 0.0
  %1606 = vmatpush1.msra.mxu0 %v1578
  %1607 = vmatprep.subr.mxu0 0.0
  %1608 = vmatpush1.msra.mxu0 %v1579
  %1609 = vmatprep.subr.mxu0 0.0
  %1610 = vmatpush1.msra.mxu0 %v1580
  %1611 = vmatprep.subr.mxu0 0.0
  %1612 = vmatpush1.msra.mxu0 %v1581
  %1613 = vmatprep.subr.mxu0 0.0
  %1614 = vmatpush1.msra.mxu0 %v1582
  %1615 = vmatprep.subr.mxu0 0.0
  %1616 = vmatpush1.msra.mxu0 0.0
  %1617 = vmatprep.subr.mxu0 0.0
  %1618 = vmatpush1.msra.mxu0 0.0
  %1619 = vmatprep.subr.mxu0 0.0
  %1620 = vmatpush1.msra.mxu0 0.0
  %1621 = vmatprep.subr.mxu0 0.0
  %1622 = vmatpush1.msra.mxu0 0.0
  %1623 = vmatprep.subr.mxu0 0.0
  %1624 = vmatpush1.msra.mxu0 0.0
  %1625 = vmatprep.subr.mxu0 0.0
  %1626 = vmatpush1.msra.mxu0 0.0
  %1627 = vmatprep.subr.mxu0 0.0
  %1628 = vmatpush1.msra.mxu0 0.0
  %1629 = vmatprep.subr.mxu0 0.0
  %1630 = vmatpush1.msra.mxu0 0.0
  %1631 = vmatprep.subr.mxu0 0.0
  %1632 = vmatpush1.msra.mxu0 0.0
  %1633 = vmatprep.subr.mxu0 0.0
  %1634 = vmatpush1.msra.mxu0 0.0
  %1635 = vmatprep.subr.mxu0 0.0
  %1636 = vmatpush1.msra.mxu0 0.0
  %1637 = vmatprep.subr.mxu0 0.0
  %1638 = vmatpush1.msra.mxu0 0.0
  %1639 = vmatprep.subr.mxu0 0.0
  %1640 = vmatpush1.msra.mxu0 0.0
  %1641 = vmatprep.subr.mxu0 0.0
  %1642 = vmatpush1.msra.mxu0 0.0
  %1643 = vmatprep.subr.mxu0 0.0
  %1644 = vmatpush1.msra.mxu0 0.0
  %1645 = vmatprep.subr.mxu0 0.0
  %1646 = vmatpush1.msra.mxu0 0.0
  %1647 = vmatprep.mubr.f32.mxu0 0.0
  %1648 = vmatmul.mubr.f32.gmra.mrb[0].mxu0 %v696
  %v1649 = vpop.f32.mrb[0].mxu0
  %v1650 = vadd.f32 0.0, %v1649
  %v1651 = vpop.f32.mrb[0].mxu0
  %1652 = vmatprep.mubr.f32.mxu0 0.0
  %1653 = vmatmul.mubr.f32.gmra.mrb[0].mxu0 %v697
  %v1654 = vpop.f32.mrb[0].mxu0
  %v1655 = vadd.f32 0.0, %v1654
  %v1656 = vpop.f32.mrb[0].mxu0
  %1657 = vmatprep.mubr.f32.mxu0 0.0
  %1658 = vmatmul.mubr.f32.gmra.mrb[0].mxu0 %v1564
  %v1659 = vpop.f32.mrb[0].mxu0
  %v1660 = vadd.f32 0.0, %v1659
  %v1661 = vpop.f32.mrb[0].mxu0
  %1662 = vmatprep.mubr.f32.mxu0 0.0
  %1663 = vmatmul.mubr.f32.gmra.mrb[0].mxu0 %v1565
  %v1664 = vpop.f32.mrb[0].mxu0
  %v1665 = vadd.f32 0.0, %v1664
  %v1666 = vpop.f32.mrb[0].mxu0
  %1667 = vdwg.mxu0
  %v1668 = vadd.f32 %v1560, %v1650
  %v1669 = vadd.f32 %v1561, %v1655
  %v1670 = vadd.f32 %v1562, %v1660
  %v1671 = vadd.f32 %v1563, %v1665
  %v1672 = vld [vmem:[#allocation2 + $0x100] sm:$0xff]
  %s1673 = scalar_lea.vmem %s3, 1280
  %v1674 = vld [vmem:[%s1673] sm:$0xff]
  %v1675 = vld [vmem:[%s1673 + $0x8] sm:$0xff]
  %v1676 = vld [vmem:[%s1673 + $0x10] sm:$0xff]
  %v1677 = vld [vmem:[%s1673 + $0x18] sm:$0xff]
  %v1678 = vld [vmem:[%s1673 + $0x20] sm:$0xff]
  %v1679 = vld [vmem:[%s1673 + $0x28] sm:$0xff]
  %v1680 = vld [vmem:[%s1673 + $0x30] sm:$0xff]
  %v1681 = vld [vmem:[%s1673 + $0x38] sm:$0xff]
  %v1682 = vld [vmem:[%s1673 + $0x40] sm:$0xff]
  %v1683 = vld [vmem:[%s1673 + $0x48] sm:$0xff]
  %v1684 = vld [vmem:[%s1673 + $0x50] sm:$0xff]
  %v1685 = vld [vmem:[%s1673 + $0x58] sm:$0xff]
  %v1686 = vld [vmem:[%s1673 + $0x60] sm:$0xff]
  %v1687 = vld [vmem:[%s1673 + $0x68] sm:$0xff]
  %v1688 = vld [vmem:[%s1673 + $0x70] sm:$0xff]
  %v1689 = vld [vmem:[%s1673 + $0x78] sm:$0xff]
  %1690 = vmatprep.subr.mxu0 0.0
  %1691 = vmatpush1.msra.mxu0 %v1674
  %1692 = vmatprep.subr.mxu0 0.0
  %1693 = vmatpush1.msra.mxu0 %v1675
  %1694 = vmatprep.subr.mxu0 0.0
  %1695 = vmatpush1.msra.mxu0 %v1676
  %1696 = vmatprep.subr.mxu0 0.0
  %1697 = vmatpush1.msra.mxu0 %v1677
  %1698 = vmatprep.subr.mxu0 0.0
  %1699 = vmatpush1.msra.mxu0 %v1678
  %1700 = vmatprep.subr.mxu0 0.0
  %1701 = vmatpush1.msra.mxu0 %v1679
  %1702 = vmatprep.subr.mxu0 0.0
  %1703 = vmatpush1.msra.mxu0 %v1680
  %1704 = vmatprep.subr.mxu0 0.0
  %1705 = vmatpush1.msra.mxu0 %v1681
  %1706 = vmatprep.subr.mxu0 0.0
  %1707 = vmatpush1.msra.mxu0 %v1682
  %1708 = vmatprep.subr.mxu0 0.0
  %1709 = vmatpush1.msra.mxu0 %v1683
  %1710 = vmatprep.subr.mxu0 0.0
  %1711 = vmatpush1.msra.mxu0 %v1684
  %1712 = vmatprep.subr.mxu0 0.0
  %1713 = vmatpush1.msra.mxu0 %v1685
  %1714 = vmatprep.subr.mxu0 0.0
  %1715 = vmatpush1.msra.mxu0 %v1686
  %1716 = vmatprep.subr.mxu0 0.0
  %1717 = vmatpush1.msra.mxu0 %v1687
  %1718 = vmatprep.subr.mxu0 0.0
  %1719 = vmatpush1.msra.mxu0 %v1688
  %1720 = vmatprep.subr.mxu0 0.0
  %1721 = vmatpush1.msra.mxu0 %v1689
  %1722 = vmatprep.subr.mxu0 0.0
  %1723 = vmatpush1.msra.mxu0 0.0
  %1724 = vmatprep.subr.mxu0 0.0
  %1725 = vmatpush1.msra.mxu0 0.0
  %1726 = vmatprep.subr.mxu0 0.0
  %1727 = vmatpush1.msra.mxu0 0.0
  %1728 = vmatprep.subr.mxu0 0.0
  %1729 = vmatpush1.msra.mxu0 0.0
  %1730 = vmatprep.subr.mxu0 0.0
  %1731 = vmatpush1.msra.mxu0 0.0
  %1732 = vmatprep.subr.mxu0 0.0
  %1733 = vmatpush1.msra.mxu0 0.0
  %1734 = vmatprep.subr.mxu0 0.0
  %1735 = vmatpush1.msra.mxu0 0.0
  %1736 = vmatprep.subr.mxu0 0.0
  %1737 = vmatpush1.msra.mxu0 0.0
  %1738 = vmatprep.subr.mxu0 0.0
  %1739 = vmatpush1.msra.mxu0 0.0
  %1740 = vmatprep.subr.mxu0 0.0
  %1741 = vmatpush1.msra.mxu0 0.0
  %1742 = vmatprep.subr.mxu0 0.0
  %1743 = vmatpush1.msra.mxu0 0.0
  %1744 = vmatprep.subr.mxu0 0.0
  %1745 = vmatpush1.msra.mxu0 0.0
  %1746 = vmatprep.subr.mxu0 0.0
  %1747 = vmatpush1.msra.mxu0 0.0
  %1748 = vmatprep.subr.mxu0 0.0
  %1749 = vmatpush1.msra.mxu0 0.0
  %1750 = vmatprep.subr.mxu0 0.0
  %1751 = vmatpush1.msra.mxu0 0.0
  %1752 = vmatprep.subr.mxu0 0.0
  %1753 = vmatpush1.msra.mxu0 0.0
  %1754 = vmatprep.mubr.f32.mxu0 0.0
  %1755 = vmatmul.mubr.f32.gmra.mrb[0].mxu0 %v588
  %v1756 = vpop.f32.mrb[0].mxu0
  %v1757 = vadd.f32 0.0, %v1756
  %v1758 = vpop.f32.mrb[0].mxu0
  %1759 = vmatprep.mubr.f32.mxu0 0.0
  %1760 = vmatmul.mubr.f32.gmra.mrb[0].mxu0 %v805
  %v1761 = vpop.f32.mrb[0].mxu0
  %v1762 = vadd.f32 0.0, %v1761
  %v1763 = vpop.f32.mrb[0].mxu0
  %1764 = vmatprep.mubr.f32.mxu0 0.0
  %1765 = vmatmul.mubr.f32.gmra.mrb[0].mxu0 %v1457
  %v1766 = vpop.f32.mrb[0].mxu0
  %v1767 = vadd.f32 0.0, %v1766
  %v1768 = vpop.f32.mrb[0].mxu0
  %1769 = vmatprep.mubr.f32.mxu0 0.0
  %1770 = vmatmul.mubr.f32.gmra.mrb[0].mxu0 %v1672
  %v1771 = vpop.f32.mrb[0].mxu0
  %v1772 = vadd.f32 0.0, %v1771
  %v1773 = vpop.f32.mrb[0].mxu0
  %1774 = vdwg.mxu0
  %v1775 = vadd.f32 %v1668, %v1757
  %v1776 = vadd.f32 %v1669, %v1762
  %v1777 = vadd.f32 %v1670, %v1767
  %v1778 = vadd.f32 %v1671, %v1772
  %v1779 = vld [vmem:[#allocation2 + $0x108] sm:$0xff]
  %s1780 = scalar_lea.vmem %s3, 1408
  %v1781 = vld [vmem:[%s1780] sm:$0xff]
  %v1782 = vld [vmem:[%s1780 + $0x8] sm:$0xff]
  %v1783 = vld [vmem:[%s1780 + $0x10] sm:$0xff]
  %v1784 = vld [vmem:[%s1780 + $0x18] sm:$0xff]
  %v1785 = vld [vmem:[%s1780 + $0x20] sm:$0xff]
  %v1786 = vld [vmem:[%s1780 + $0x28] sm:$0xff]
  %v1787 = vld [vmem:[%s1780 + $0x30] sm:$0xff]
  %v1788 = vld [vmem:[%s1780 + $0x38] sm:$0xff]
  %v1789 = vld [vmem:[%s1780 + $0x40] sm:$0xff]
  %v1790 = vld [vmem:[%s1780 + $0x48] sm:$0xff]
  %v1791 = vld [vmem:[%s1780 + $0x50] sm:$0xff]
  %v1792 = vld [vmem:[%s1780 + $0x58] sm:$0xff]
  %v1793 = vld [vmem:[%s1780 + $0x60] sm:$0xff]
  %v1794 = vld [vmem:[%s1780 + $0x68] sm:$0xff]
  %v1795 = vld [vmem:[%s1780 + $0x70] sm:$0xff]
  %v1796 = vld [vmem:[%s1780 + $0x78] sm:$0xff]
  %1797 = vmatprep.subr.mxu0 0.0
  %1798 = vmatpush1.msra.mxu0 %v1781
  %1799 = vmatprep.subr.mxu0 0.0
  %1800 = vmatpush1.msra.mxu0 %v1782
  %1801 = vmatprep.subr.mxu0 0.0
  %1802 = vmatpush1.msra.mxu0 %v1783
  %1803 = vmatprep.subr.mxu0 0.0
  %1804 = vmatpush1.msra.mxu0 %v1784
  %1805 = vmatprep.subr.mxu0 0.0
  %1806 = vmatpush1.msra.mxu0 %v1785
  %1807 = vmatprep.subr.mxu0 0.0
  %1808 = vmatpush1.msra.mxu0 %v1786
  %1809 = vmatprep.subr.mxu0 0.0
  %1810 = vmatpush1.msra.mxu0 %v1787
  %1811 = vmatprep.subr.mxu0 0.0
  %1812 = vmatpush1.msra.mxu0 %v1788
  %1813 = vmatprep.subr.mxu0 0.0
  %1814 = vmatpush1.msra.mxu0 %v1789
  %1815 = vmatprep.subr.mxu0 0.0
  %1816 = vmatpush1.msra.mxu0 %v1790
  %1817 = vmatprep.subr.mxu0 0.0
  %1818 = vmatpush1.msra.mxu0 %v1791
  %1819 = vmatprep.subr.mxu0 0.0
  %1820 = vmatpush1.msra.mxu0 %v1792
  %1821 = vmatprep.subr.mxu0 0.0
  %1822 = vmatpush1.msra.mxu0 %v1793
  %1823 = vmatprep.subr.mxu0 0.0
  %1824 = vmatpush1.msra.mxu0 %v1794
  %1825 = vmatprep.subr.mxu0 0.0
  %1826 = vmatpush1.msra.mxu0 %v1795
  %1827 = vmatprep.subr.mxu0 0.0
  %1828 = vmatpush1.msra.mxu0 %v1796
  %1829 = vmatprep.subr.mxu0 0.0
  %1830 = vmatpush1.msra.mxu0 0.0
  %1831 = vmatprep.subr.mxu0 0.0
  %1832 = vmatpush1.msra.mxu0 0.0
  %1833 = vmatprep.subr.mxu0 0.0
  %1834 = vmatpush1.msra.mxu0 0.0
  %1835 = vmatprep.subr.mxu0 0.0
  %1836 = vmatpush1.msra.mxu0 0.0
  %1837 = vmatprep.subr.mxu0 0.0
  %1838 = vmatpush1.msra.mxu0 0.0
  %1839 = vmatprep.subr.mxu0 0.0
  %1840 = vmatpush1.msra.mxu0 0.0
  %1841 = vmatprep.subr.mxu0 0.0
  %1842 = vmatpush1.msra.mxu0 0.0
  %1843 = vmatprep.subr.mxu0 0.0
  %1844 = vmatpush1.msra.mxu0 0.0
  %1845 = vmatprep.subr.mxu0 0.0
  %1846 = vmatpush1.msra.mxu0 0.0
  %1847 = vmatprep.subr.mxu0 0.0
  %1848 = vmatpush1.msra.mxu0 0.0
  %1849 = vmatprep.subr.mxu0 0.0
  %1850 = vmatpush1.msra.mxu0 0.0
  %1851 = vmatprep.subr.mxu0 0.0
  %1852 = vmatpush1.msra.mxu0 0.0
  %1853 = vmatprep.subr.mxu0 0.0
  %1854 = vmatpush1.msra.mxu0 0.0
  %1855 = vmatprep.subr.mxu0 0.0
  %1856 = vmatpush1.msra.mxu0 0.0
  %1857 = vmatprep.subr.mxu0 0.0
  %1858 = vmatpush1.msra.mxu0 0.0
  %1859 = vmatprep.subr.mxu0 0.0
  %1860 = vmatpush1.msra.mxu0 0.0
  %1861 = vmatprep.mubr.f32.mxu0 0.0
  %1862 = vmatmul.mubr.f32.gmra.mrb[0].mxu0 %v697
  %v1863 = vpop.f32.mrb[0].mxu0
  %v1864 = vadd.f32 0.0, %v1863
  %v1865 = vpop.f32.mrb[0].mxu0
  %1866 = vmatprep.mubr.f32.mxu0 0.0
  %1867 = vmatmul.mubr.f32.gmra.mrb[0].mxu0 %v913
  %v1868 = vpop.f32.mrb[0].mxu0
  %v1869 = vadd.f32 0.0, %v1868
  %v1870 = vpop.f32.mrb[0].mxu0
  %1871 = vmatprep.mubr.f32.mxu0 0.0
  %1872 = vmatmul.mubr.f32.gmra.mrb[0].mxu0 %v1565
  %v1873 = vpop.f32.mrb[0].mxu0
  %v1874 = vadd.f32 0.0, %v1873
  %v1875 = vpop.f32.mrb[0].mxu0
  %1876 = vmatprep.mubr.f32.mxu0 0.0
  %1877 = vmatmul.mubr.f32.gmra.mrb[0].mxu0 %v1779
  %v1878 = vpop.f32.mrb[0].mxu0
  %v1879 = vadd.f32 0.0, %v1878
  %v1880 = vpop.f32.mrb[0].mxu0
  %1881 = vdwg.mxu0
  %v1882 = vadd.f32 %v1775, %v1864
  %v1883 = vadd.f32 %v1776, %v1869
  %v1884 = vadd.f32 %v1777, %v1874
  %v1885 = vadd.f32 %v1778, %v1879
  %v1886 = vld [vmem:[#allocation2 + $0x118] sm:$0xff]
  %v1887 = vld [vmem:[#allocation2 + $0x128] sm:$0xff]
  %s1888 = scalar_lea.vmem %s3, 1536
  %v1889 = vld [vmem:[%s1888] sm:$0xff]
  %v1890 = vld [vmem:[%s1888 + $0x8] sm:$0xff]
  %v1891 = vld [vmem:[%s1888 + $0x10] sm:$0xff]
  %v1892 = vld [vmem:[%s1888 + $0x18] sm:$0xff]
  %v1893 = vld [vmem:[%s1888 + $0x20] sm:$0xff]
  %v1894 = vld [vmem:[%s1888 + $0x28] sm:$0xff]
  %v1895 = vld [vmem:[%s1888 + $0x30] sm:$0xff]
  %v1896 = vld [vmem:[%s1888 + $0x38] sm:$0xff]
  %v1897 = vld [vmem:[%s1888 + $0x40] sm:$0xff]
  %v1898 = vld [vmem:[%s1888 + $0x48] sm:$0xff]
  %v1899 = vld [vmem:[%s1888 + $0x50] sm:$0xff]
  %v1900 = vld [vmem:[%s1888 + $0x58] sm:$0xff]
  %v1901 = vld [vmem:[%s1888 + $0x60] sm:$0xff]
  %v1902 = vld [vmem:[%s1888 + $0x68] sm:$0xff]
  %v1903 = vld [vmem:[%s1888 + $0x70] sm:$0xff]
  %v1904 = vld [vmem:[%s1888 + $0x78] sm:$0xff]
  %1905 = vmatprep.subr.mxu0 0.0
  %1906 = vmatpush1.msra.mxu0 %v1889
  %1907 = vmatprep.subr.mxu0 0.0
  %1908 = vmatpush1.msra.mxu0 %v1890
  %1909 = vmatprep.subr.mxu0 0.0
  %1910 = vmatpush1.msra.mxu0 %v1891
  %1911 = vmatprep.subr.mxu0 0.0
  %1912 = vmatpush1.msra.mxu0 %v1892
  %1913 = vmatprep.subr.mxu0 0.0
  %1914 = vmatpush1.msra.mxu0 %v1893
  %1915 = vmatprep.subr.mxu0 0.0
  %1916 = vmatpush1.msra.mxu0 %v1894
  %1917 = vmatprep.subr.mxu0 0.0
  %1918 = vmatpush1.msra.mxu0 %v1895
  %1919 = vmatprep.subr.mxu0 0.0
  %1920 = vmatpush1.msra.mxu0 %v1896
  %1921 = vmatprep.subr.mxu0 0.0
  %1922 = vmatpush1.msra.mxu0 %v1897
  %1923 = vmatprep.subr.mxu0 0.0
  %1924 = vmatpush1.msra.mxu0 %v1898
  %1925 = vmatprep.subr.mxu0 0.0
  %1926 = vmatpush1.msra.mxu0 %v1899
  %1927 = vmatprep.subr.mxu0 0.0
  %1928 = vmatpush1.msra.mxu0 %v1900
  %1929 = vmatprep.subr.mxu0 0.0
  %1930 = vmatpush1.msra.mxu0 %v1901
  %1931 = vmatprep.subr.mxu0 0.0
  %1932 = vmatpush1.msra.mxu0 %v1902
  %1933 = vmatprep.subr.mxu0 0.0
  %1934 = vmatpush1.msra.mxu0 %v1903
  %1935 = vmatprep.subr.mxu0 0.0
  %1936 = vmatpush1.msra.mxu0 %v1904
  %1937 = vmatprep.subr.mxu0 0.0
  %1938 = vmatpush1.msra.mxu0 0.0
  %1939 = vmatprep.subr.mxu0 0.0
  %1940 = vmatpush1.msra.mxu0 0.0
  %1941 = vmatprep.subr.mxu0 0.0
  %1942 = vmatpush1.msra.mxu0 0.0
  %1943 = vmatprep.subr.mxu0 0.0
  %1944 = vmatpush1.msra.mxu0 0.0
  %1945 = vmatprep.subr.mxu0 0.0
  %1946 = vmatpush1.msra.mxu0 0.0
  %1947 = vmatprep.subr.mxu0 0.0
  %1948 = vmatpush1.msra.mxu0 0.0
  %1949 = vmatprep.subr.mxu0 0.0
  %1950 = vmatpush1.msra.mxu0 0.0
  %1951 = vmatprep.subr.mxu0 0.0
  %1952 = vmatpush1.msra.mxu0 0.0
  %1953 = vmatprep.subr.mxu0 0.0
  %1954 = vmatpush1.msra.mxu0 0.0
  %1955 = vmatprep.subr.mxu0 0.0
  %1956 = vmatpush1.msra.mxu0 0.0
  %1957 = vmatprep.subr.mxu0 0.0
  %1958 = vmatpush1.msra.mxu0 0.0
  %1959 = vmatprep.subr.mxu0 0.0
  %1960 = vmatpush1.msra.mxu0 0.0
  %1961 = vmatprep.subr.mxu0 0.0
  %1962 = vmatpush1.msra.mxu0 0.0
  %1963 = vmatprep.subr.mxu0 0.0
  %1964 = vmatpush1.msra.mxu0 0.0
  %1965 = vmatprep.subr.mxu0 0.0
  %1966 = vmatpush1.msra.mxu0 0.0
  %1967 = vmatprep.subr.mxu0 0.0
  %1968 = vmatpush1.msra.mxu0 0.0
  %1969 = vmatprep.mubr.f32.mxu0 0.0
  %1970 = vmatmul.mubr.f32.gmra.mrb[0].mxu0 %v1022
  %v1971 = vpop.f32.mrb[0].mxu0
  %v1972 = vadd.f32 0.0, %v1971
  %v1973 = vpop.f32.mrb[0].mxu0
  %1974 = vmatprep.mubr.f32.mxu0 0.0
  %1975 = vmatmul.mubr.f32.gmra.mrb[0].mxu0 %v1023
  %v1976 = vpop.f32.mrb[0].mxu0
  %v1977 = vadd.f32 0.0, %v1976
  %v1978 = vpop.f32.mrb[0].mxu0
  %1979 = vmatprep.mubr.f32.mxu0 0.0
  %1980 = vmatmul.mubr.f32.gmra.mrb[0].mxu0 %v1886
  %v1981 = vpop.f32.mrb[0].mxu0
  %v1982 = vadd.f32 0.0, %v1981
  %v1983 = vpop.f32.mrb[0].mxu0
  %1984 = vmatprep.mubr.f32.mxu0 0.0
  %1985 = vmatmul.mubr.f32.gmra.mrb[0].mxu0 %v1887
  %v1986 = vpop.f32.mrb[0].mxu0
  %v1987 = vadd.f32 0.0, %v1986
  %v1988 = vpop.f32.mrb[0].mxu0
  %1989 = vdwg.mxu0
  %v1990 = vadd.f32 %v1882, %v1972
  %v1991 = vadd.f32 %v1883, %v1977
  %v1992 = vadd.f32 %v1884, %v1982
  %v1993 = vadd.f32 %v1885, %v1987
  %v1994 = vld [vmem:[#allocation2 + $0x120] sm:$0xff]
  %v1995 = vld [vmem:[#allocation2 + $0x130] sm:$0xff]
  %s1996 = scalar_lea.vmem %s3, 1664
  %v1997 = vld [vmem:[%s1996] sm:$0xff]
  %v1998 = vld [vmem:[%s1996 + $0x8] sm:$0xff]
  %v1999 = vld [vmem:[%s1996 + $0x10] sm:$0xff]
  %v2000 = vld [vmem:[%s1996 + $0x18] sm:$0xff]
  %v2001 = vld [vmem:[%s1996 + $0x20] sm:$0xff]
  %v2002 = vld [vmem:[%s1996 + $0x28] sm:$0xff]
  %v2003 = vld [vmem:[%s1996 + $0x30] sm:$0xff]
  %v2004 = vld [vmem:[%s1996 + $0x38] sm:$0xff]
  %v2005 = vld [vmem:[%s1996 + $0x40] sm:$0xff]
  %v2006 = vld [vmem:[%s1996 + $0x48] sm:$0xff]
  %v2007 = vld [vmem:[%s1996 + $0x50] sm:$0xff]
  %v2008 = vld [vmem:[%s1996 + $0x58] sm:$0xff]
  %v2009 = vld [vmem:[%s1996 + $0x60] sm:$0xff]
  %v2010 = vld [vmem:[%s1996 + $0x68] sm:$0xff]
  %v2011 = vld [vmem:[%s1996 + $0x70] sm:$0xff]
  %v2012 = vld [vmem:[%s1996 + $0x78] sm:$0xff]
  %2013 = vmatprep.subr.mxu0 0.0
  %2014 = vmatpush1.msra.mxu0 %v1997
  %2015 = vmatprep.subr.mxu0 0.0
  %2016 = vmatpush1.msra.mxu0 %v1998
  %2017 = vmatprep.subr.mxu0 0.0
  %2018 = vmatpush1.msra.mxu0 %v1999
  %2019 = vmatprep.subr.mxu0 0.0
  %2020 = vmatpush1.msra.mxu0 %v2000
  %2021 = vmatprep.subr.mxu0 0.0
  %2022 = vmatpush1.msra.mxu0 %v2001
  %2023 = vmatprep.subr.mxu0 0.0
  %2024 = vmatpush1.msra.mxu0 %v2002
  %2025 = vmatprep.subr.mxu0 0.0
  %2026 = vmatpush1.msra.mxu0 %v2003
  %2027 = vmatprep.subr.mxu0 0.0
  %2028 = vmatpush1.msra.mxu0 %v2004
  %2029 = vmatprep.subr.mxu0 0.0
  %2030 = vmatpush1.msra.mxu0 %v2005
  %2031 = vmatprep.subr.mxu0 0.0
  %2032 = vmatpush1.msra.mxu0 %v2006
  %2033 = vmatprep.subr.mxu0 0.0
  %2034 = vmatpush1.msra.mxu0 %v2007
  %2035 = vmatprep.subr.mxu0 0.0
  %2036 = vmatpush1.msra.mxu0 %v2008
  %2037 = vmatprep.subr.mxu0 0.0
  %2038 = vmatpush1.msra.mxu0 %v2009
  %2039 = vmatprep.subr.mxu0 0.0
  %2040 = vmatpush1.msra.mxu0 %v2010
  %2041 = vmatprep.subr.mxu0 0.0
  %2042 = vmatpush1.msra.mxu0 %v2011
  %2043 = vmatprep.subr.mxu0 0.0
  %2044 = vmatpush1.msra.mxu0 %v2012
  %2045 = vmatprep.subr.mxu0 0.0
  %2046 = vmatpush1.msra.mxu0 0.0
  %2047 = vmatprep.subr.mxu0 0.0
  %2048 = vmatpush1.msra.mxu0 0.0
  %2049 = vmatprep.subr.mxu0 0.0
  %2050 = vmatpush1.msra.mxu0 0.0
  %2051 = vmatprep.subr.mxu0 0.0
  %2052 = vmatpush1.msra.mxu0 0.0
  %2053 = vmatprep.subr.mxu0 0.0
  %2054 = vmatpush1.msra.mxu0 0.0
  %2055 = vmatprep.subr.mxu0 0.0
  %2056 = vmatpush1.msra.mxu0 0.0
  %2057 = vmatprep.subr.mxu0 0.0
  %2058 = vmatpush1.msra.mxu0 0.0
  %2059 = vmatprep.subr.mxu0 0.0
  %2060 = vmatpush1.msra.mxu0 0.0
  %2061 = vmatprep.subr.mxu0 0.0
  %2062 = vmatpush1.msra.mxu0 0.0
  %2063 = vmatprep.subr.mxu0 0.0
  %2064 = vmatpush1.msra.mxu0 0.0
  %2065 = vmatprep.subr.mxu0 0.0
  %2066 = vmatpush1.msra.mxu0 0.0
  %2067 = vmatprep.subr.mxu0 0.0
  %2068 = vmatpush1.msra.mxu0 0.0
  %2069 = vmatprep.subr.mxu0 0.0
  %2070 = vmatpush1.msra.mxu0 0.0
  %2071 = vmatprep.subr.mxu0 0.0
  %2072 = vmatpush1.msra.mxu0 0.0
  %2073 = vmatprep.subr.mxu0 0.0
  %2074 = vmatpush1.msra.mxu0 0.0
  %2075 = vmatprep.subr.mxu0 0.0
  %2076 = vmatpush1.msra.mxu0 0.0
  %2077 = vmatprep.mubr.f32.mxu0 0.0
  %2078 = vmatmul.mubr.f32.gmra.mrb[0].mxu0 %v1132
  %v2079 = vpop.f32.mrb[0].mxu0
  %v2080 = vadd.f32 0.0, %v2079
  %v2081 = vpop.f32.mrb[0].mxu0
  %2082 = vmatprep.mubr.f32.mxu0 0.0
  %2083 = vmatmul.mubr.f32.gmra.mrb[0].mxu0 %v1133
  %v2084 = vpop.f32.mrb[0].mxu0
  %v2085 = vadd.f32 0.0, %v2084
  %v2086 = vpop.f32.mrb[0].mxu0
  %2087 = vmatprep.mubr.f32.mxu0 0.0
  %2088 = vmatmul.mubr.f32.gmra.mrb[0].mxu0 %v1994
  %v2089 = vpop.f32.mrb[0].mxu0
  %v2090 = vadd.f32 0.0, %v2089
  %v2091 = vpop.f32.mrb[0].mxu0
  %2092 = vmatprep.mubr.f32.mxu0 0.0
  %2093 = vmatmul.mubr.f32.gmra.mrb[0].mxu0 %v1995
  %v2094 = vpop.f32.mrb[0].mxu0
  %v2095 = vadd.f32 0.0, %v2094
  %v2096 = vpop.f32.mrb[0].mxu0
  %2097 = vdwg.mxu0
  %v2098 = vadd.f32 %v1990, %v2080
  %v2099 = vadd.f32 %v1991, %v2085
  %v2100 = vadd.f32 %v1992, %v2090
  %v2101 = vadd.f32 %v1993, %v2095
  %v2102 = vld [vmem:[#allocation2 + $0x138] sm:$0xff]
  %s2103 = scalar_lea.vmem %s3, 1792
  %v2104 = vld [vmem:[%s2103] sm:$0xff]
  %v2105 = vld [vmem:[%s2103 + $0x8] sm:$0xff]
  %v2106 = vld [vmem:[%s2103 + $0x10] sm:$0xff]
  %v2107 = vld [vmem:[%s2103 + $0x18] sm:$0xff]
  %v2108 = vld [vmem:[%s2103 + $0x20] sm:$0xff]
  %v2109 = vld [vmem:[%s2103 + $0x28] sm:$0xff]
  %v2110 = vld [vmem:[%s2103 + $0x30] sm:$0xff]
  %v2111 = vld [vmem:[%s2103 + $0x38] sm:$0xff]
  %v2112 = vld [vmem:[%s2103 + $0x40] sm:$0xff]
  %v2113 = vld [vmem:[%s2103 + $0x48] sm:$0xff]
  %v2114 = vld [vmem:[%s2103 + $0x50] sm:$0xff]
  %v2115 = vld [vmem:[%s2103 + $0x58] sm:$0xff]
  %v2116 = vld [vmem:[%s2103 + $0x60] sm:$0xff]
  %v2117 = vld [vmem:[%s2103 + $0x68] sm:$0xff]
  %v2118 = vld [vmem:[%s2103 + $0x70] sm:$0xff]
  %v2119 = vld [vmem:[%s2103 + $0x78] sm:$0xff]
  %2120 = vmatprep.subr.mxu0 0.0
  %2121 = vmatpush1.msra.mxu0 %v2104
  %2122 = vmatprep.subr.mxu0 0.0
  %2123 = vmatpush1.msra.mxu0 %v2105
  %2124 = vmatprep.subr.mxu0 0.0
  %2125 = vmatpush1.msra.mxu0 %v2106
  %2126 = vmatprep.subr.mxu0 0.0
  %2127 = vmatpush1.msra.mxu0 %v2107
  %2128 = vmatprep.subr.mxu0 0.0
  %2129 = vmatpush1.msra.mxu0 %v2108
  %2130 = vmatprep.subr.mxu0 0.0
  %2131 = vmatpush1.msra.mxu0 %v2109
  %2132 = vmatprep.subr.mxu0 0.0
  %2133 = vmatpush1.msra.mxu0 %v2110
  %2134 = vmatprep.subr.mxu0 0.0
  %2135 = vmatpush1.msra.mxu0 %v2111
  %2136 = vmatprep.subr.mxu0 0.0
  %2137 = vmatpush1.msra.mxu0 %v2112
  %2138 = vmatprep.subr.mxu0 0.0
  %2139 = vmatpush1.msra.mxu0 %v2113
  %2140 = vmatprep.subr.mxu0 0.0
  %2141 = vmatpush1.msra.mxu0 %v2114
  %2142 = vmatprep.subr.mxu0 0.0
  %2143 = vmatpush1.msra.mxu0 %v2115
  %2144 = vmatprep.subr.mxu0 0.0
  %2145 = vmatpush1.msra.mxu0 %v2116
  %2146 = vmatprep.subr.mxu0 0.0
  %2147 = vmatpush1.msra.mxu0 %v2117
  %2148 = vmatprep.subr.mxu0 0.0
  %2149 = vmatpush1.msra.mxu0 %v2118
  %2150 = vmatprep.subr.mxu0 0.0
  %2151 = vmatpush1.msra.mxu0 %v2119
  %2152 = vmatprep.subr.mxu0 0.0
  %2153 = vmatpush1.msra.mxu0 0.0
  %2154 = vmatprep.subr.mxu0 0.0
  %2155 = vmatpush1.msra.mxu0 0.0
  %2156 = vmatprep.subr.mxu0 0.0
  %2157 = vmatpush1.msra.mxu0 0.0
  %2158 = vmatprep.subr.mxu0 0.0
  %2159 = vmatpush1.msra.mxu0 0.0
  %2160 = vmatprep.subr.mxu0 0.0
  %2161 = vmatpush1.msra.mxu0 0.0
  %2162 = vmatprep.subr.mxu0 0.0
  %2163 = vmatpush1.msra.mxu0 0.0
  %2164 = vmatprep.subr.mxu0 0.0
  %2165 = vmatpush1.msra.mxu0 0.0
  %2166 = vmatprep.subr.mxu0 0.0
  %2167 = vmatpush1.msra.mxu0 0.0
  %2168 = vmatprep.subr.mxu0 0.0
  %2169 = vmatpush1.msra.mxu0 0.0
  %2170 = vmatprep.subr.mxu0 0.0
  %2171 = vmatpush1.msra.mxu0 0.0
  %2172 = vmatprep.subr.mxu0 0.0
  %2173 = vmatpush1.msra.mxu0 0.0
  %2174 = vmatprep.subr.mxu0 0.0
  %2175 = vmatpush1.msra.mxu0 0.0
  %2176 = vmatprep.subr.mxu0 0.0
  %2177 = vmatpush1.msra.mxu0 0.0
  %2178 = vmatprep.subr.mxu0 0.0
  %2179 = vmatpush1.msra.mxu0 0.0
  %2180 = vmatprep.subr.mxu0 0.0
  %2181 = vmatpush1.msra.mxu0 0.0
  %2182 = vmatprep.subr.mxu0 0.0
  %2183 = vmatpush1.msra.mxu0 0.0
  %2184 = vmatprep.mubr.f32.mxu0 0.0
  %2185 = vmatmul.mubr.f32.gmra.mrb[0].mxu0 %v1023
  %v2186 = vpop.f32.mrb[0].mxu0
  %v2187 = vadd.f32 0.0, %v2186
  %v2188 = vpop.f32.mrb[0].mxu0
  %2189 = vmatprep.mubr.f32.mxu0 0.0
  %2190 = vmatmul.mubr.f32.gmra.mrb[0].mxu0 %v1241
  %v2191 = vpop.f32.mrb[0].mxu0
  %v2192 = vadd.f32 0.0, %v2191
  %v2193 = vpop.f32.mrb[0].mxu0
  %2194 = vmatprep.mubr.f32.mxu0 0.0
  %2195 = vmatmul.mubr.f32.gmra.mrb[0].mxu0 %v1887
  %v2196 = vpop.f32.mrb[0].mxu0
  %v2197 = vadd.f32 0.0, %v2196
  %v2198 = vpop.f32.mrb[0].mxu0
  %2199 = vmatprep.mubr.f32.mxu0 0.0
  %2200 = vmatmul.mubr.f32.gmra.mrb[0].mxu0 %v2102
  %v2201 = vpop.f32.mrb[0].mxu0
  %v2202 = vadd.f32 0.0, %v2201
  %v2203 = vpop.f32.mrb[0].mxu0
  %2204 = vdwg.mxu0
  %v2205 = vadd.f32 %v2098, %v2187
  %v2206 = vadd.f32 %v2099, %v2192
  %v2207 = vadd.f32 %v2100, %v2197
  %v2208 = vadd.f32 %v2101, %v2202
  %v2209 = vld [vmem:[#allocation2 + $0x140] sm:$0xff]
  %s2210 = scalar_lea.vmem %s3, 1920
  %v2211 = vld [vmem:[%s2210] sm:$0xff]
  %v2212 = vld [vmem:[%s2210 + $0x8] sm:$0xff]
  %v2213 = vld [vmem:[%s2210 + $0x10] sm:$0xff]
  %v2214 = vld [vmem:[%s2210 + $0x18] sm:$0xff]
  %v2215 = vld [vmem:[%s2210 + $0x20] sm:$0xff]
  %v2216 = vld [vmem:[%s2210 + $0x28] sm:$0xff]
  %v2217 = vld [vmem:[%s2210 + $0x30] sm:$0xff]
  %v2218 = vld [vmem:[%s2210 + $0x38] sm:$0xff]
  %v2219 = vld [vmem:[%s2210 + $0x40] sm:$0xff]
  %v2220 = vld [vmem:[%s2210 + $0x48] sm:$0xff]
  %v2221 = vld [vmem:[%s2210 + $0x50] sm:$0xff]
  %v2222 = vld [vmem:[%s2210 + $0x58] sm:$0xff]
  %v2223 = vld [vmem:[%s2210 + $0x60] sm:$0xff]
  %v2224 = vld [vmem:[%s2210 + $0x68] sm:$0xff]
  %v2225 = vld [vmem:[%s2210 + $0x70] sm:$0xff]
  %v2226 = vld [vmem:[%s2210 + $0x78] sm:$0xff]
  %2227 = vmatprep.subr.mxu0 0.0
  %2228 = vmatpush1.msra.mxu0 %v2211
  %2229 = vmatprep.subr.mxu0 0.0
  %2230 = vmatpush1.msra.mxu0 %v2212
  %2231 = vmatprep.subr.mxu0 0.0
  %2232 = vmatpush1.msra.mxu0 %v2213
  %2233 = vmatprep.subr.mxu0 0.0
  %2234 = vmatpush1.msra.mxu0 %v2214
  %2235 = vmatprep.subr.mxu0 0.0
  %2236 = vmatpush1.msra.mxu0 %v2215
  %2237 = vmatprep.subr.mxu0 0.0
  %2238 = vmatpush1.msra.mxu0 %v2216
  %2239 = vmatprep.subr.mxu0 0.0
  %2240 = vmatpush1.msra.mxu0 %v2217
  %2241 = vmatprep.subr.mxu0 0.0
  %2242 = vmatpush1.msra.mxu0 %v2218
  %2243 = vmatprep.subr.mxu0 0.0
  %2244 = vmatpush1.msra.mxu0 %v2219
  %2245 = vmatprep.subr.mxu0 0.0
  %2246 = vmatpush1.msra.mxu0 %v2220
  %2247 = vmatprep.subr.mxu0 0.0
  %2248 = vmatpush1.msra.mxu0 %v2221
  %2249 = vmatprep.subr.mxu0 0.0
  %2250 = vmatpush1.msra.mxu0 %v2222
  %2251 = vmatprep.subr.mxu0 0.0
  %2252 = vmatpush1.msra.mxu0 %v2223
  %2253 = vmatprep.subr.mxu0 0.0
  %2254 = vmatpush1.msra.mxu0 %v2224
  %2255 = vmatprep.subr.mxu0 0.0
  %2256 = vmatpush1.msra.mxu0 %v2225
  %2257 = vmatprep.subr.mxu0 0.0
  %2258 = vmatpush1.msra.mxu0 %v2226
  %2259 = vmatprep.subr.mxu0 0.0
  %2260 = vmatpush1.msra.mxu0 0.0
  %2261 = vmatprep.subr.mxu0 0.0
  %2262 = vmatpush1.msra.mxu0 0.0
  %2263 = vmatprep.subr.mxu0 0.0
  %2264 = vmatpush1.msra.mxu0 0.0
  %2265 = vmatprep.subr.mxu0 0.0
  %2266 = vmatpush1.msra.mxu0 0.0
  %2267 = vmatprep.subr.mxu0 0.0
  %2268 = vmatpush1.msra.mxu0 0.0
  %2269 = vmatprep.subr.mxu0 0.0
  %2270 = vmatpush1.msra.mxu0 0.0
  %2271 = vmatprep.subr.mxu0 0.0
  %2272 = vmatpush1.msra.mxu0 0.0
  %2273 = vmatprep.subr.mxu0 0.0
  %2274 = vmatpush1.msra.mxu0 0.0
  %2275 = vmatprep.subr.mxu0 0.0
  %2276 = vmatpush1.msra.mxu0 0.0
  %2277 = vmatprep.subr.mxu0 0.0
  %2278 = vmatpush1.msra.mxu0 0.0
  %2279 = vmatprep.subr.mxu0 0.0
  %2280 = vmatpush1.msra.mxu0 0.0
  %2281 = vmatprep.subr.mxu0 0.0
  %2282 = vmatpush1.msra.mxu0 0.0
  %2283 = vmatprep.subr.mxu0 0.0
  %2284 = vmatpush1.msra.mxu0 0.0
  %2285 = vmatprep.subr.mxu0 0.0
  %2286 = vmatpush1.msra.mxu0 0.0
  %2287 = vmatprep.subr.mxu0 0.0
  %2288 = vmatpush1.msra.mxu0 0.0
  %2289 = vmatprep.subr.mxu0 0.0
  %2290 = vmatpush1.msra.mxu0 0.0
  %2291 = vmatprep.mubr.f32.mxu0 0.0
  %2292 = vmatmul.mubr.f32.gmra.mrb[0].mxu0 %v1133
  %v2293 = vpop.f32.mrb[0].mxu0
  %v2294 = vadd.f32 0.0, %v2293
  %v2295 = vpop.f32.mrb[0].mxu0
  %2296 = vmatprep.mubr.f32.mxu0 0.0
  %2297 = vmatmul.mubr.f32.gmra.mrb[0].mxu0 %v1349
  %v2298 = vpop.f32.mrb[0].mxu0
  %v2299 = vadd.f32 0.0, %v2298
  %v2300 = vpop.f32.mrb[0].mxu0
  %2301 = vmatprep.mubr.f32.mxu0 0.0
  %2302 = vmatmul.mubr.f32.gmra.mrb[0].mxu0 %v1995
  %v2303 = vpop.f32.mrb[0].mxu0
  %v2304 = vadd.f32 0.0, %v2303
  %v2305 = vpop.f32.mrb[0].mxu0
  %2306 = vmatprep.mubr.f32.mxu0 0.0
  %2307 = vmatmul.mubr.f32.gmra.mrb[0].mxu0 %v2209
  %v2308 = vpop.f32.mrb[0].mxu0
  %v2309 = vadd.f32 0.0, %v2308
  %v2310 = vpop.f32.mrb[0].mxu0
  %2311 = vdwg.mxu0
  %v2312 = vadd.f32 %v2205, %v2294
  %v2313 = vadd.f32 %v2206, %v2299
  %v2314 = vadd.f32 %v2207, %v2304
  %v2315 = vadd.f32 %v2208, %v2309
  %v2316 = vmax.f32 %v2312, 0.0
  %v2317 = vmax.f32 %v2313, 0.0
  %v2318 = vmax.f32 %v2314, 0.0
  %v2319 = vmax.f32 %v2315, 0.0
  %v2320 = vld [vmem:[%s6] sm:$0x1]
  %v2322 = vlaneseq
  %v2323 = vshrl.u32 %v2322, 7
  %v2324 = vsub.s32 0, %v2323
  %v2325 = vrot.slane %v2320, %v2324
  %v2327 = vadd.f32 %v2325, 0.0
  %v2328 = vld [vmem:[%s5] sm:$0xff]
  %v2329 = vld [vmem:[%s5 + $0x8] sm:$0xff]
  %v2330 = vld [vmem:[%s5 + $0x10] sm:$0xff]
  %v2331 = vld [vmem:[%s5 + $0x18] sm:$0xff]
  %v2332 = vld [vmem:[%s5 + $0x20] sm:$0xff]
  %v2333 = vld [vmem:[%s5 + $0x28] sm:$0xff]
  %v2334 = vld [vmem:[%s5 + $0x30] sm:$0xff]
  %v2335 = vld [vmem:[%s5 + $0x38] sm:$0xff]
  %v2336 = vld [vmem:[%s5 + $0x40] sm:$0xff]
  %v2337 = vld [vmem:[%s5 + $0x48] sm:$0xff]
  %v2338 = vld [vmem:[%s5 + $0x50] sm:$0xff]
  %v2339 = vld [vmem:[%s5 + $0x58] sm:$0xff]
  %v2340 = vld [vmem:[%s5 + $0x60] sm:$0xff]
  %v2341 = vld [vmem:[%s5 + $0x68] sm:$0xff]
  %v2342 = vld [vmem:[%s5 + $0x70] sm:$0xff]
  %v2343 = vld [vmem:[%s5 + $0x78] sm:$0xff]
  %2344 = vmatprep.subr.mxu0 0.0
  %2345 = vmatpush1.msra.mxu0 %v2328
  %2346 = vmatprep.subr.mxu0 0.0
  %2347 = vmatpush1.msra.mxu0 %v2329
  %2348 = vmatprep.subr.mxu0 0.0
  %2349 = vmatpush1.msra.mxu0 %v2330
  %2350 = vmatprep.subr.mxu0 0.0
  %2351 = vmatpush1.msra.mxu0 %v2331
  %2352 = vmatprep.subr.mxu0 0.0
  %2353 = vmatpush1.msra.mxu0 %v2332
  %2354 = vmatprep.subr.mxu0 0.0
  %2355 = vmatpush1.msra.mxu0 %v2333
  %2356 = vmatprep.subr.mxu0 0.0
  %2357 = vmatpush1.msra.mxu0 %v2334
  %2358 = vmatprep.subr.mxu0 0.0
  %2359 = vmatpush1.msra.mxu0 %v2335
  %2360 = vmatprep.subr.mxu0 0.0
  %2361 = vmatpush1.msra.mxu0 %v2336
  %2362 = vmatprep.subr.mxu0 0.0
  %2363 = vmatpush1.msra.mxu0 %v2337
  %2364 = vmatprep.subr.mxu0 0.0
  %2365 = vmatpush1.msra.mxu0 %v2338
  %2366 = vmatprep.subr.mxu0 0.0
  %2367 = vmatpush1.msra.mxu0 %v2339
  %2368 = vmatprep.subr.mxu0 0.0
  %2369 = vmatpush1.msra.mxu0 %v2340
  %2370 = vmatprep.subr.mxu0 0.0
  %2371 = vmatpush1.msra.mxu0 %v2341
  %2372 = vmatprep.subr.mxu0 0.0
  %2373 = vmatpush1.msra.mxu0 %v2342
  %2374 = vmatprep.subr.mxu0 0.0
  %2375 = vmatpush1.msra.mxu0 %v2343
  %2376 = vmatprep.subr.mxu0 0.0
  %2377 = vmatpush1.msra.mxu0 0.0
  %2378 = vmatprep.subr.mxu0 0.0
  %2379 = vmatpush1.msra.mxu0 0.0
  %2380 = vmatprep.subr.mxu0 0.0
  %2381 = vmatpush1.msra.mxu0 0.0
  %2382 = vmatprep.subr.mxu0 0.0
  %2383 = vmatpush1.msra.mxu0 0.0
  %2384 = vmatprep.subr.mxu0 0.0
  %2385 = vmatpush1.msra.mxu0 0.0
  %2386 = vmatprep.subr.mxu0 0.0
  %2387 = vmatpush1.msra.mxu0 0.0
  %2388 = vmatprep.subr.mxu0 0.0
  %2389 = vmatpush1.msra.mxu0 0.0
  %2390 = vmatprep.subr.mxu0 0.0
  %2391 = vmatpush1.msra.mxu0 0.0
  %2392 = vmatprep.subr.mxu0 0.0
  %2393 = vmatpush1.msra.mxu0 0.0
  %2394 = vmatprep.subr.mxu0 0.0
  %2395 = vmatpush1.msra.mxu0 0.0
  %2396 = vmatprep.subr.mxu0 0.0
  %2397 = vmatpush1.msra.mxu0 0.0
  %2398 = vmatprep.subr.mxu0 0.0
  %2399 = vmatpush1.msra.mxu0 0.0
  %2400 = vmatprep.subr.mxu0 0.0
  %2401 = vmatpush1.msra.mxu0 0.0
  %2402 = vmatprep.subr.mxu0 0.0
  %2403 = vmatpush1.msra.mxu0 0.0
  %2404 = vmatprep.subr.mxu0 0.0
  %2405 = vmatpush1.msra.mxu0 0.0
  %2406 = vmatprep.subr.mxu0 0.0
  %2407 = vmatpush1.msra.mxu0 0.0
  %2408 = vmatprep.mubr.f32.mxu0 0.0
  %2409 = vmatmul.mubr.f32.gmra.mrb[0].mxu0 %v2316
  %v2410 = vpop.f32.mrb[0].mxu0
  %v2411 = vadd.f32 0.0, %v2410
  %v2412 = vpop.f32.mrb[0].mxu0
  %2413 = vdwg.mxu0
  %v2414 = vadd.f32 %v2327, %v2411
  %s2415 = scalar_lea.vmem %s5, 128
  %v2416 = vld [vmem:[%s2415] sm:$0xff]
  %v2417 = vld [vmem:[%s2415 + $0x8] sm:$0xff]
  %v2418 = vld [vmem:[%s2415 + $0x10] sm:$0xff]
  %v2419 = vld [vmem:[%s2415 + $0x18] sm:$0xff]
  %v2420 = vld [vmem:[%s2415 + $0x20] sm:$0xff]
  %v2421 = vld [vmem:[%s2415 + $0x28] sm:$0xff]
  %v2422 = vld [vmem:[%s2415 + $0x30] sm:$0xff]
  %v2423 = vld [vmem:[%s2415 + $0x38] sm:$0xff]
  %v2424 = vld [vmem:[%s2415 + $0x40] sm:$0xff]
  %v2425 = vld [vmem:[%s2415 + $0x48] sm:$0xff]
  %v2426 = vld [vmem:[%s2415 + $0x50] sm:$0xff]
  %v2427 = vld [vmem:[%s2415 + $0x58] sm:$0xff]
  %v2428 = vld [vmem:[%s2415 + $0x60] sm:$0xff]
  %v2429 = vld [vmem:[%s2415 + $0x68] sm:$0xff]
  %v2430 = vld [vmem:[%s2415 + $0x70] sm:$0xff]
  %v2431 = vld [vmem:[%s2415 + $0x78] sm:$0xff]
  %2432 = vmatprep.subr.mxu0 0.0
  %2433 = vmatpush1.msra.mxu0 %v2416
  %2434 = vmatprep.subr.mxu0 0.0
  %2435 = vmatpush1.msra.mxu0 %v2417
  %2436 = vmatprep.subr.mxu0 0.0
  %2437 = vmatpush1.msra.mxu0 %v2418
  %2438 = vmatprep.subr.mxu0 0.0
  %2439 = vmatpush1.msra.mxu0 %v2419
  %2440 = vmatprep.subr.mxu0 0.0
  %2441 = vmatpush1.msra.mxu0 %v2420
  %2442 = vmatprep.subr.mxu0 0.0
  %2443 = vmatpush1.msra.mxu0 %v2421
  %2444 = vmatprep.subr.mxu0 0.0
  %2445 = vmatpush1.msra.mxu0 %v2422
  %2446 = vmatprep.subr.mxu0 0.0
  %2447 = vmatpush1.msra.mxu0 %v2423
  %2448 = vmatprep.subr.mxu0 0.0
  %2449 = vmatpush1.msra.mxu0 %v2424
  %2450 = vmatprep.subr.mxu0 0.0
  %2451 = vmatpush1.msra.mxu0 %v2425
  %2452 = vmatprep.subr.mxu0 0.0
  %2453 = vmatpush1.msra.mxu0 %v2426
  %2454 = vmatprep.subr.mxu0 0.0
  %2455 = vmatpush1.msra.mxu0 %v2427
  %2456 = vmatprep.subr.mxu0 0.0
  %2457 = vmatpush1.msra.mxu0 %v2428
  %2458 = vmatprep.subr.mxu0 0.0
  %2459 = vmatpush1.msra.mxu0 %v2429
  %2460 = vmatprep.subr.mxu0 0.0
  %2461 = vmatpush1.msra.mxu0 %v2430
  %2462 = vmatprep.subr.mxu0 0.0
  %2463 = vmatpush1.msra.mxu0 %v2431
  %2464 = vmatprep.subr.mxu0 0.0
  %2465 = vmatpush1.msra.mxu0 0.0
  %2466 = vmatprep.subr.mxu0 0.0
  %2467 = vmatpush1.msra.mxu0 0.0
  %2468 = vmatprep.subr.mxu0 0.0
  %2469 = vmatpush1.msra.mxu0 0.0
  %2470 = vmatprep.subr.mxu0 0.0
  %2471 = vmatpush1.msra.mxu0 0.0
  %2472 = vmatprep.subr.mxu0 0.0
  %2473 = vmatpush1.msra.mxu0 0.0
  %2474 = vmatprep.subr.mxu0 0.0
  %2475 = vmatpush1.msra.mxu0 0.0
  %2476 = vmatprep.subr.mxu0 0.0
  %2477 = vmatpush1.msra.mxu0 0.0
  %2478 = vmatprep.subr.mxu0 0.0
  %2479 = vmatpush1.msra.mxu0 0.0
  %2480 = vmatprep.subr.mxu0 0.0
  %2481 = vmatpush1.msra.mxu0 0.0
  %2482 = vmatprep.subr.mxu0 0.0
  %2483 = vmatpush1.msra.mxu0 0.0
  %2484 = vmatprep.subr.mxu0 0.0
  %2485 = vmatpush1.msra.mxu0 0.0
  %2486 = vmatprep.subr.mxu0 0.0
  %2487 = vmatpush1.msra.mxu0 0.0
  %2488 = vmatprep.subr.mxu0 0.0
  %2489 = vmatpush1.msra.mxu0 0.0
  %2490 = vmatprep.subr.mxu0 0.0
  %2491 = vmatpush1.msra.mxu0 0.0
  %2492 = vmatprep.subr.mxu0 0.0
  %2493 = vmatpush1.msra.mxu0 0.0
  %2494 = vmatprep.subr.mxu0 0.0
  %2495 = vmatpush1.msra.mxu0 0.0
  %2496 = vmatprep.mubr.f32.mxu0 0.0
  %2497 = vmatmul.mubr.f32.gmra.mrb[0].mxu0 %v2317
  %v2498 = vpop.f32.mrb[0].mxu0
  %v2499 = vadd.f32 0.0, %v2498
  %v2500 = vpop.f32.mrb[0].mxu0
  %2501 = vdwg.mxu0
  %v2502 = vadd.f32 %v2414, %v2499
  %s2503 = scalar_lea.vmem %s5, 256
  %v2504 = vld [vmem:[%s2503] sm:$0xff]
  %v2505 = vld [vmem:[%s2503 + $0x8] sm:$0xff]
  %v2506 = vld [vmem:[%s2503 + $0x10] sm:$0xff]
  %v2507 = vld [vmem:[%s2503 + $0x18] sm:$0xff]
  %v2508 = vld [vmem:[%s2503 + $0x20] sm:$0xff]
  %v2509 = vld [vmem:[%s2503 + $0x28] sm:$0xff]
  %v2510 = vld [vmem:[%s2503 + $0x30] sm:$0xff]
  %v2511 = vld [vmem:[%s2503 + $0x38] sm:$0xff]
  %v2512 = vld [vmem:[%s2503 + $0x40] sm:$0xff]
  %v2513 = vld [vmem:[%s2503 + $0x48] sm:$0xff]
  %v2514 = vld [vmem:[%s2503 + $0x50] sm:$0xff]
  %v2515 = vld [vmem:[%s2503 + $0x58] sm:$0xff]
  %v2516 = vld [vmem:[%s2503 + $0x60] sm:$0xff]
  %v2517 = vld [vmem:[%s2503 + $0x68] sm:$0xff]
  %v2518 = vld [vmem:[%s2503 + $0x70] sm:$0xff]
  %v2519 = vld [vmem:[%s2503 + $0x78] sm:$0xff]
  %2520 = vmatprep.subr.mxu0 0.0
  %2521 = vmatpush1.msra.mxu0 %v2504
  %2522 = vmatprep.subr.mxu0 0.0
  %2523 = vmatpush1.msra.mxu0 %v2505
  %2524 = vmatprep.subr.mxu0 0.0
  %2525 = vmatpush1.msra.mxu0 %v2506
  %2526 = vmatprep.subr.mxu0 0.0
  %2527 = vmatpush1.msra.mxu0 %v2507
  %2528 = vmatprep.subr.mxu0 0.0
  %2529 = vmatpush1.msra.mxu0 %v2508
  %2530 = vmatprep.subr.mxu0 0.0
  %2531 = vmatpush1.msra.mxu0 %v2509
  %2532 = vmatprep.subr.mxu0 0.0
  %2533 = vmatpush1.msra.mxu0 %v2510
  %2534 = vmatprep.subr.mxu0 0.0
  %2535 = vmatpush1.msra.mxu0 %v2511
  %2536 = vmatprep.subr.mxu0 0.0
  %2537 = vmatpush1.msra.mxu0 %v2512
  %2538 = vmatprep.subr.mxu0 0.0
  %2539 = vmatpush1.msra.mxu0 %v2513
  %2540 = vmatprep.subr.mxu0 0.0
  %2541 = vmatpush1.msra.mxu0 %v2514
  %2542 = vmatprep.subr.mxu0 0.0
  %2543 = vmatpush1.msra.mxu0 %v2515
  %2544 = vmatprep.subr.mxu0 0.0
  %2545 = vmatpush1.msra.mxu0 %v2516
  %2546 = vmatprep.subr.mxu0 0.0
  %2547 = vmatpush1.msra.mxu0 %v2517
  %2548 = vmatprep.subr.mxu0 0.0
  %2549 = vmatpush1.msra.mxu0 %v2518
  %2550 = vmatprep.subr.mxu0 0.0
  %2551 = vmatpush1.msra.mxu0 %v2519
  %2552 = vmatprep.subr.mxu0 0.0
  %2553 = vmatpush1.msra.mxu0 0.0
  %2554 = vmatprep.subr.mxu0 0.0
  %2555 = vmatpush1.msra.mxu0 0.0
  %2556 = vmatprep.subr.mxu0 0.0
  %2557 = vmatpush1.msra.mxu0 0.0
  %2558 = vmatprep.subr.mxu0 0.0
  %2559 = vmatpush1.msra.mxu0 0.0
  %2560 = vmatprep.subr.mxu0 0.0
  %2561 = vmatpush1.msra.mxu0 0.0
  %2562 = vmatprep.subr.mxu0 0.0
  %2563 = vmatpush1.msra.mxu0 0.0
  %2564 = vmatprep.subr.mxu0 0.0
  %2565 = vmatpush1.msra.mxu0 0.0
  %2566 = vmatprep.subr.mxu0 0.0
  %2567 = vmatpush1.msra.mxu0 0.0
  %2568 = vmatprep.subr.mxu0 0.0
  %2569 = vmatpush1.msra.mxu0 0.0
  %2570 = vmatprep.subr.mxu0 0.0
  %2571 = vmatpush1.msra.mxu0 0.0
  %2572 = vmatprep.subr.mxu0 0.0
  %2573 = vmatpush1.msra.mxu0 0.0
  %2574 = vmatprep.subr.mxu0 0.0
  %2575 = vmatpush1.msra.mxu0 0.0
  %2576 = vmatprep.subr.mxu0 0.0
  %2577 = vmatpush1.msra.mxu0 0.0
  %2578 = vmatprep.subr.mxu0 0.0
  %2579 = vmatpush1.msra.mxu0 0.0
  %2580 = vmatprep.subr.mxu0 0.0
  %2581 = vmatpush1.msra.mxu0 0.0
  %2582 = vmatprep.subr.mxu0 0.0
  %2583 = vmatpush1.msra.mxu0 0.0
  %2584 = vmatprep.mubr.f32.mxu0 0.0
  %2585 = vmatmul.mubr.f32.gmra.mrb[0].mxu0 %v2318
  %v2586 = vpop.f32.mrb[0].mxu0
  %v2587 = vadd.f32 0.0, %v2586
  %v2588 = vpop.f32.mrb[0].mxu0
  %2589 = vdwg.mxu0
  %v2590 = vadd.f32 %v2502, %v2587
  %s2591 = scalar_lea.vmem %s5, 384
  %v2592 = vld [vmem:[%s2591] sm:$0xff]
  %v2593 = vld [vmem:[%s2591 + $0x8] sm:$0xff]
  %v2594 = vld [vmem:[%s2591 + $0x10] sm:$0xff]
  %v2595 = vld [vmem:[%s2591 + $0x18] sm:$0xff]
  %v2596 = vld [vmem:[%s2591 + $0x20] sm:$0xff]
  %v2597 = vld [vmem:[%s2591 + $0x28] sm:$0xff]
  %v2598 = vld [vmem:[%s2591 + $0x30] sm:$0xff]
  %v2599 = vld [vmem:[%s2591 + $0x38] sm:$0xff]
  %v2600 = vld [vmem:[%s2591 + $0x40] sm:$0xff]
  %v2601 = vld [vmem:[%s2591 + $0x48] sm:$0xff]
  %v2602 = vld [vmem:[%s2591 + $0x50] sm:$0xff]
  %v2603 = vld [vmem:[%s2591 + $0x58] sm:$0xff]
  %v2604 = vld [vmem:[%s2591 + $0x60] sm:$0xff]
  %v2605 = vld [vmem:[%s2591 + $0x68] sm:$0xff]
  %v2606 = vld [vmem:[%s2591 + $0x70] sm:$0xff]
  %v2607 = vld [vmem:[%s2591 + $0x78] sm:$0xff]
  %2608 = vmatprep.subr.mxu0 0.0
  %2609 = vmatpush1.msra.mxu0 %v2592
  %2610 = vmatprep.subr.mxu0 0.0
  %2611 = vmatpush1.msra.mxu0 %v2593
  %2612 = vmatprep.subr.mxu0 0.0
  %2613 = vmatpush1.msra.mxu0 %v2594
  %2614 = vmatprep.subr.mxu0 0.0
  %2615 = vmatpush1.msra.mxu0 %v2595
  %2616 = vmatprep.subr.mxu0 0.0
  %2617 = vmatpush1.msra.mxu0 %v2596
  %2618 = vmatprep.subr.mxu0 0.0
  %2619 = vmatpush1.msra.mxu0 %v2597
  %2620 = vmatprep.subr.mxu0 0.0
  %2621 = vmatpush1.msra.mxu0 %v2598
  %2622 = vmatprep.subr.mxu0 0.0
  %2623 = vmatpush1.msra.mxu0 %v2599
  %2624 = vmatprep.subr.mxu0 0.0
  %2625 = vmatpush1.msra.mxu0 %v2600
  %2626 = vmatprep.subr.mxu0 0.0
  %2627 = vmatpush1.msra.mxu0 %v2601
  %2628 = vmatprep.subr.mxu0 0.0
  %2629 = vmatpush1.msra.mxu0 %v2602
  %2630 = vmatprep.subr.mxu0 0.0
  %2631 = vmatpush1.msra.mxu0 %v2603
  %2632 = vmatprep.subr.mxu0 0.0
  %2633 = vmatpush1.msra.mxu0 %v2604
  %2634 = vmatprep.subr.mxu0 0.0
  %2635 = vmatpush1.msra.mxu0 %v2605
  %2636 = vmatprep.subr.mxu0 0.0
  %2637 = vmatpush1.msra.mxu0 %v2606
  %2638 = vmatprep.subr.mxu0 0.0
  %2639 = vmatpush1.msra.mxu0 %v2607
  %2640 = vmatprep.subr.mxu0 0.0
  %2641 = vmatpush1.msra.mxu0 0.0
  %2642 = vmatprep.subr.mxu0 0.0
  %2643 = vmatpush1.msra.mxu0 0.0
  %2644 = vmatprep.subr.mxu0 0.0
  %2645 = vmatpush1.msra.mxu0 0.0
  %2646 = vmatprep.subr.mxu0 0.0
  %2647 = vmatpush1.msra.mxu0 0.0
  %2648 = vmatprep.subr.mxu0 0.0
  %2649 = vmatpush1.msra.mxu0 0.0
  %2650 = vmatprep.subr.mxu0 0.0
  %2651 = vmatpush1.msra.mxu0 0.0
  %2652 = vmatprep.subr.mxu0 0.0
  %2653 = vmatpush1.msra.mxu0 0.0
  %2654 = vmatprep.subr.mxu0 0.0
  %2655 = vmatpush1.msra.mxu0 0.0
  %2656 = vmatprep.subr.mxu0 0.0
  %2657 = vmatpush1.msra.mxu0 0.0
  %2658 = vmatprep.subr.mxu0 0.0
  %2659 = vmatpush1.msra.mxu0 0.0
  %2660 = vmatprep.subr.mxu0 0.0
  %2661 = vmatpush1.msra.mxu0 0.0
  %2662 = vmatprep.subr.mxu0 0.0
  %2663 = vmatpush1.msra.mxu0 0.0
  %2664 = vmatprep.subr.mxu0 0.0
  %2665 = vmatpush1.msra.mxu0 0.0
  %2666 = vmatprep.subr.mxu0 0.0
  %2667 = vmatpush1.msra.mxu0 0.0
  %2668 = vmatprep.subr.mxu0 0.0
  %2669 = vmatpush1.msra.mxu0 0.0
  %2670 = vmatprep.subr.mxu0 0.0
  %2671 = vmatpush1.msra.mxu0 0.0
  %2672 = vmatprep.mubr.f32.mxu0 0.0
  %2673 = vmatmul.mubr.f32.gmra.mrb[0].mxu0 %v2319
  %v2674 = vpop.f32.mrb[0].mxu0
  %v2675 = vadd.f32 0.0, %v2674
  %v2676 = vpop.f32.mrb[0].mxu0
  %2677 = vdwg.mxu0
  %v2678 = vadd.f32 %v2590, %v2675
  %v2679 = vmax.f32 %v2678, 0.0
  %v2680 = vld [vmem:[%s7] sm:$0xff]
  %v2681 = vld [vmem:[%s7 + $0x8] sm:$0xff]
  %v2682 = vld [vmem:[%s7 + $0x10] sm:$0xff]
  %v2683 = vld [vmem:[%s7 + $0x18] sm:$0xff]
  %v2684 = vld [vmem:[%s7 + $0x20] sm:$0xff]
  %v2685 = vld [vmem:[%s7 + $0x28] sm:$0xff]
  %v2686 = vld [vmem:[%s7 + $0x30] sm:$0xff]
  %v2687 = vld [vmem:[%s7 + $0x38] sm:$0xff]
  %v2688 = vld [vmem:[%s7 + $0x40] sm:$0xff]
  %v2689 = vld [vmem:[%s7 + $0x48] sm:$0xff]
  %v2690 = vld [vmem:[%s7 + $0x50] sm:$0xff]
  %v2691 = vld [vmem:[%s7 + $0x58] sm:$0xff]
  %v2692 = vld [vmem:[%s7 + $0x60] sm:$0xff]
  %v2693 = vld [vmem:[%s7 + $0x68] sm:$0xff]
  %v2694 = vld [vmem:[%s7 + $0x70] sm:$0xff]
  %v2695 = vld [vmem:[%s7 + $0x78] sm:$0xff]
  %v2696 = vld [vmem:[%s8] sm:$0x1]
  %v2698 = vlaneseq
  %v2699 = vshrl.u32 %v2698, 7
  %v2700 = vsub.s32 0, %v2699
  %v2701 = vrot.slane %v2696, %v2700
  %2703 = vmatprep.subr.mxu0 0.0
  %2704 = vmatpush1.msra.mxu0 %v2680
  %2705 = vmatprep.subr.mxu0 0.0
  %2706 = vmatpush1.msra.mxu0 %v2681
  %2707 = vmatprep.subr.mxu0 0.0
  %2708 = vmatpush1.msra.mxu0 %v2682
  %2709 = vmatprep.subr.mxu0 0.0
  %2710 = vmatpush1.msra.mxu0 %v2683
  %2711 = vmatprep.subr.mxu0 0.0
  %2712 = vmatpush1.msra.mxu0 %v2684
  %2713 = vmatprep.subr.mxu0 0.0
  %2714 = vmatpush1.msra.mxu0 %v2685
  %2715 = vmatprep.subr.mxu0 0.0
  %2716 = vmatpush1.msra.mxu0 %v2686
  %2717 = vmatprep.subr.mxu0 0.0
  %2718 = vmatpush1.msra.mxu0 %v2687
  %2719 = vmatprep.subr.mxu0 0.0
  %2720 = vmatpush1.msra.mxu0 %v2688
  %2721 = vmatprep.subr.mxu0 0.0
  %2722 = vmatpush1.msra.mxu0 %v2689
  %2723 = vmatprep.subr.mxu0 0.0
  %2724 = vmatpush1.msra.mxu0 %v2690
  %2725 = vmatprep.subr.mxu0 0.0
  %2726 = vmatpush1.msra.mxu0 %v2691
  %2727 = vmatprep.subr.mxu0 0.0
  %2728 = vmatpush1.msra.mxu0 %v2692
  %2729 = vmatprep.subr.mxu0 0.0
  %2730 = vmatpush1.msra.mxu0 %v2693
  %2731 = vmatprep.subr.mxu0 0.0
  %2732 = vmatpush1.msra.mxu0 %v2694
  %2733 = vmatprep.subr.mxu0 0.0
  %2734 = vmatpush1.msra.mxu0 %v2695
  %2735 = vmatprep.subr.mxu0 0.0
  %2736 = vmatpush1.msra.mxu0 0.0
  %2737 = vmatprep.subr.mxu0 0.0
  %2738 = vmatpush1.msra.mxu0 0.0
  %2739 = vmatprep.subr.mxu0 0.0
  %2740 = vmatpush1.msra.mxu0 0.0
  %2741 = vmatprep.subr.mxu0 0.0
  %2742 = vmatpush1.msra.mxu0 0.0
  %2743 = vmatprep.subr.mxu0 0.0
  %2744 = vmatpush1.msra.mxu0 0.0
  %2745 = vmatprep.subr.mxu0 0.0
  %2746 = vmatpush1.msra.mxu0 0.0
  %2747 = vmatprep.subr.mxu0 0.0
  %2748 = vmatpush1.msra.mxu0 0.0
  %2749 = vmatprep.subr.mxu0 0.0
  %2750 = vmatpush1.msra.mxu0 0.0
  %2751 = vmatprep.subr.mxu0 0.0
  %2752 = vmatpush1.msra.mxu0 0.0
  %2753 = vmatprep.subr.mxu0 0.0
  %2754 = vmatpush1.msra.mxu0 0.0
  %2755 = vmatprep.subr.mxu0 0.0
  %2756 = vmatpush1.msra.mxu0 0.0
  %2757 = vmatprep.subr.mxu0 0.0
  %2758 = vmatpush1.msra.mxu0 0.0
  %2759 = vmatprep.subr.mxu0 0.0
  %2760 = vmatpush1.msra.mxu0 0.0
  %2761 = vmatprep.subr.mxu0 0.0
  %2762 = vmatpush1.msra.mxu0 0.0
  %2763 = vmatprep.subr.mxu0 0.0
  %2764 = vmatpush1.msra.mxu0 0.0
  %2765 = vmatprep.subr.mxu0 0.0
  %2766 = vmatpush1.msra.mxu0 0.0
  %2767 = vmatprep.mubr.f32.mxu0 0.0
  %2768 = vmatmul.mubr.f32.gmra.mrb[0].mxu0 %v2679
  %v2769 = vpop.f32.mrb[0].mxu0
  %v2770 = vadd.f32 %v2701, %v2769
  %v2771 = vpop.f32.mrb[0].mxu0
  %2772 = vdwg.mxu0
  %v2773 = vtanh.pop %v2770
  %2774 = vst [vmem:[%s9] sm:$0xff] %v2773
  // Predicated region
  $region38: #{nature_cnn_forward.1} parent=0 // pred_check
    _
  $region39: #{nature_cnn_forward.1} parent=0 // pred_check_branch
    %2776 = sbr.rel (0) target = $region41
  $region40: #{nature_cnn_forward.1} parent=0 // pred_region
    _
  $region41: #{nature_cnn_forward.1} parent=0 // pred_fallthru
    _
  // Predicated region
  $region42: #{nature_cnn_forward.1} parent=0 // pred_check
    _
  $region43: #{nature_cnn_forward.1} parent=0 // pred_check_branch
    %2778 = sbr.rel (0) target = $region45
  $region44: #{nature_cnn_forward.1} parent=0 // pred_region
    _
  $region45: #{nature_cnn_forward.1} parent=0 // pred_fallthru
    _

</llo_original>
